<compile_context>
chip_gen: v7x
topology: tpu7x:2x2x1
jax: 0.10.0
libtpu: 0.0.40
codegen_flags: <defaults>
</compile_context>

<pallas_src>
import math
import jax
import jax.numpy as jnp
from jax import lax
from jax.experimental import pallas as pl
from jax.experimental.pallas import tpu as pltpu

S = 8          # x_frames (sequence length)
B = 4          # batch_size
D = 32         # feature_size (d_model)
H = 4          # nhead
DH = D // H    # head dim
F = 2048       # dim_feedforward (nn.TransformerEncoderLayer default)
M = S * B      # flattened rows, seq-major (matches torch row-major order of (S, B, D))
EPS = 1e-5     # LayerNorm eps (PyTorch default)
NEG = -1e30    # finite "minus infinity" for the additive mask (avoids -inf NaN pitfalls)


def _layernorm(x, w, b):
    mu = jnp.mean(x, axis=-1, keepdims=True)
    var = jnp.mean((x - mu) ** 2, axis=-1, keepdims=True)
    return (x - mu) / jnp.sqrt(var + EPS) * w + b


def transformer_kernel(x_ref, pe_ref, mask_ref,
                       wqkv_ref, bqkv_ref,      # (D,3D), (1,3D)  in_proj (transposed)
                       wo_ref,                  # (D,D)           out_proj (transposed)
                       vecs_ref,                # (6,D): out_proj_b, ln1_w, ln1_b, lin2_b, ln2_w, ln2_b
                       w1_ref, b1_ref,          # (D,F), (1,F)    linear1 (transposed, lane-dense)
                       w2_ref,                  # (D,F)           linear2 (natural layout, trans_b)
                       wdec_ref,                # (D,1)           decoder Linear(D,1) weight.T
                       wbig_ref,                # (B,M)           output_linear folded with torch .view
                       cbias_ref,               # (1,1)           dec_b*sum(outlin_w) + outlin_b
                       o_ref):                  # (B,1)
    f32 = jnp.float32
    x = x_ref[...] + pe_ref[...]                                        # (M, D) positional encoding

    vecs = vecs_ref[...]
    bo, ln1w, ln1b = vecs[0:1, :], vecs[1:2, :], vecs[2:3, :]
    b2, ln2w, ln2b = vecs[3:4, :], vecs[4:5, :], vecs[5:6, :]

    # --- multi-head self attention (post-norm layer, dropout = identity) ---
    qkv = jnp.dot(x, wqkv_ref[...], preferred_element_type=f32) + bqkv_ref[...]   # (M, 3D)
    scale = 1.0 / math.sqrt(DH)
    mask = mask_ref[...]                                                # (M, M) block-causal
    heads = []
    for h in range(H):
        q = qkv[:, h * DH:(h + 1) * DH] * scale
        k = qkv[:, D + h * DH:D + (h + 1) * DH]
        v = qkv[:, 2 * D + h * DH:2 * D + (h + 1) * DH]
        s = lax.dot_general(q, k, (((1,), (1,)), ((), ())),
                            preferred_element_type=f32)                 # (M, M)
        s = s + mask
        m = jnp.max(s, axis=-1, keepdims=True)
        e = jnp.exp(s - m)
        p = e * pl.reciprocal(jnp.sum(e, axis=-1, keepdims=True), approx=True)
        heads.append(jnp.dot(p, v, preferred_element_type=f32))         # (M, DH)
    ctx = jnp.concatenate(heads, axis=-1)                               # (M, D)
    attn = jnp.dot(ctx, wo_ref[...], preferred_element_type=f32) + bo   # single out_proj matmul

    y = _layernorm(x + attn, ln1w, ln1b)                                # norm1(residual)

    # --- feed-forward ---
    h1 = jnp.maximum(jnp.dot(y, w1_ref[...], preferred_element_type=f32) + b1_ref[...], 0.0)   # (M, F)
    h2 = lax.dot_general(h1, w2_ref[...], (((1,), (1,)), ((), ())),
                         preferred_element_type=f32) + b2               # (M, D), lane-dense weight
    z = _layernorm(y + h2, ln2w, ln2b)                                  # norm2(residual)

    # --- decoder Linear(D,1) + torch .view(B,-1) + output_linear(S,1) + sigmoid, fused ---
    # logits[i] = sum_f wbig[i,f] * (z[f] . wdec) + cbias  ==  ((wbig @ z) @ wdec) + cbias
    zb = jnp.dot(wbig_ref[...], z, preferred_element_type=f32)          # (B, D)
    logits = jnp.dot(zb, wdec_ref[...], preferred_element_type=f32) + cbias_ref[...]   # (B, 1)
    o_ref[...] = 1.0 / (1.0 + jnp.exp(-logits))


def make_positional_encoding(seq_len, d_model):
    position = jnp.arange(seq_len, dtype=jnp.float32)[:, None]
    div_term = jnp.exp(jnp.arange(0, d_model, 2, dtype=jnp.float32) * (-math.log(10000.0) / d_model))
    pe = jnp.zeros((seq_len, d_model), jnp.float32)
    pe = pe.at[:, 0::2].set(jnp.sin(position * div_term))
    pe = pe.at[:, 1::2].set(jnp.cos(position * div_term))
    return pe


def transformer_forward(src, p):
    """src: (S, B, D) float32 (PyTorch seq-first). Returns (B,) sigmoid outputs."""
    # Rows in seq-major order: r = s*B + b == torch's row-major flattening of (S, B, D).
    x2 = src.reshape(M, D)
    pe_rows = jnp.repeat(make_positional_encoding(S, D), B, axis=0)         # (M, D), row r -> pe[s]

    # Block-causal additive mask: row r attends to r' iff same batch element and s' <= s.
    s_idx = jnp.arange(M) // B
    b_idx = jnp.arange(M) % B
    allowed = (b_idx[None, :] == b_idx[:, None]) & (s_idx[None, :] <= s_idx[:, None])
    mask = jnp.where(allowed, 0.0, NEG).astype(jnp.float32)                 # (M, M)

    # Kernel-friendly weight layouts.
    wqkv_t = p["in_proj_w"].T                                               # (D, 3D)
    bqkv = p["in_proj_b"][None, :]                                          # (1, 3D)
    wo_t = p["out_proj_w"].T                                                # (D, D)
    vecs = jnp.stack([p["out_proj_b"], p["ln1_w"], p["ln1_b"],
                      p["lin2_b"], p["ln2_w"], p["ln2_b"]], axis=0)         # (6, D)
    w1_t = p["lin1_w"].T                                                    # (D, F) lane-dense
    b1 = p["lin1_b"][None, :]                                               # (1, F)
    w2 = p["lin2_w"]                                                        # (D, F) lane-dense (trans_b in kernel)
    wdec_t = p["dec_w"].T                                                   # (D, 1)

    # Fold torch's `.view(B, -1)` row-major reinterpret + output_linear into one (B, M) matrix:
    #   view[i, j] = dec_flat[i*S + j]   =>   logits = wbig @ dec_flat + cbias
    wout = p["outlin_w"][0]                                                 # (S,)
    flat = jnp.arange(M)
    wbig = jnp.where((flat // S)[None, :] == jnp.arange(B)[:, None],
                     wout[flat % S][None, :], 0.0).astype(jnp.float32)      # (B, M)
    cbias = (p["dec_b"][0] * jnp.sum(wout) + p["outlin_b"][0]).reshape(1, 1)

    vmem = pl.BlockSpec(memory_space=pltpu.MemorySpace.VMEM)
    out = pl.pallas_call(
        transformer_kernel,
        out_shape=jax.ShapeDtypeStruct((B, 1), jnp.float32),
        in_specs=[vmem] * 13,
        out_specs=vmem,
    )(x2, pe_rows, mask, wqkv_t, bqkv, wo_t, vecs, w1_t, b1, w2, wdec_t, wbig, cbias)
    return out[:, 0]


# ---------------- pure-JAX reference (mirrors PyTorch forward, eval mode) ----------------
def reference_forward(src, p):
    pe = make_positional_encoding(S, D)
    tri = jnp.tril(jnp.ones((S, S), dtype=bool))
    mask = jnp.where(tri, 0.0, -jnp.inf).astype(jnp.float32)
    x = src + pe[:, None, :]
    x2 = x.reshape(S * B, D)
    qkv = x2 @ p["in_proj_w"].T + p["in_proj_b"]
    q, k, v = jnp.split(qkv, 3, axis=-1)
    heads = lambda t: t.reshape(S, B * H, DH).transpose(1, 0, 2)
    qh, kh, vh = heads(q) / math.sqrt(DH), heads(k), heads(v)
    scores = jnp.einsum("nsd,ntd->nst", qh, kh) + mask[None]
    probs = jax.nn.softmax(scores, axis=-1)
    ctx = jnp.einsum("nst,ntd->nsd", probs, vh).transpose(1, 0, 2).reshape(S * B, D)
    attn = ctx @ p["out_proj_w"].T + p["out_proj_b"]

    def ln(t, w, b):
        mu = t.mean(-1, keepdims=True)
        var = ((t - mu) ** 2).mean(-1, keepdims=True)
        return (t - mu) / jnp.sqrt(var + EPS) * w + b

    y = ln(x2 + attn, p["ln1_w"], p["ln1_b"])
    h1 = jax.nn.relu(y @ p["lin1_w"].T + p["lin1_b"])
    z = ln(y + h1 @ p["lin2_w"].T + p["lin2_b"], p["ln2_w"], p["ln2_b"])
    out2 = z.reshape(S, B, D) @ p["dec_w"].T + p["dec_b"]       # (S, B, 1)
    out3 = out2.reshape(B, -1) @ p["outlin_w"].T + p["outlin_b"]
    return jax.nn.sigmoid(out3[:, 0])


def init_params(key):
    ks = jax.random.split(key, 10)
    n = lambda k, shape, s: (jax.random.normal(k, shape, jnp.float32) * s)
    return {
        "in_proj_w": n(ks[0], (3 * D, D), 1.0 / math.sqrt(D)),
        "in_proj_b": n(ks[1], (3 * D,), 0.02),
        "out_proj_w": n(ks[2], (D, D), 1.0 / math.sqrt(D)),
        "out_proj_b": n(ks[3], (D,), 0.02),
        "lin1_w": n(ks[4], (F, D), 1.0 / math.sqrt(D)),
        "lin1_b": n(ks[5], (F,), 0.02),
        "lin2_w": n(ks[6], (D, F), 1.0 / math.sqrt(F)),
        "lin2_b": n(ks[7], (D,), 0.02),
        "ln1_w": jnp.ones((D,), jnp.float32),
        "ln1_b": jnp.zeros((D,), jnp.float32),
        "ln2_w": jnp.ones((D,), jnp.float32),
        "ln2_b": jnp.zeros((D,), jnp.float32),
        # decoder: init_weights() => uniform(-0.1, 0.1) weight, zero bias
        "dec_w": jax.random.uniform(ks[8], (1, D), jnp.float32, -0.1, 0.1),
        "dec_b": jnp.zeros((1,), jnp.float32),
        "outlin_w": n(ks[9], (1, S), 1.0 / math.sqrt(S)),
        "outlin_b": jnp.zeros((1,), jnp.float32),
    }


if __name__ == "__main__":
    key = jax.random.PRNGKey(0)
    k_params, k_src = jax.random.split(key)
    params = init_params(k_params)
    src = jax.random.normal(k_src, (S, B, D), jnp.float32)      # (x_frames, batch, feature_size)

    fwd = jax.jit(transformer_forward)
    out = jax.block_until_ready(fwd(src, params))
    ref = reference_forward(src, params)

    assert out.shape == (B,)
    assert bool(jnp.all(jnp.isfinite(out)))
    if not jnp.allclose(out, ref, atol=5e-3, rtol=5e-3):
        raise AssertionError(f"mismatch: pallas={out} ref={ref}")
    print("KERNEL_OK")
</pallas_src>

<mosaic_0001>
module attributes {stable_mosaic.version = 11 : i64} {
  func.func @transformer_kernel(%arg0: memref<32x32xf32, #tpu.memory_space<vmem>>, %arg1: memref<32x32xf32, #tpu.memory_space<vmem>>, %arg2: memref<32x32xf32, #tpu.memory_space<vmem>>, %arg3: memref<32x96xf32, #tpu.memory_space<vmem>>, %arg4: memref<1x96xf32, #tpu.memory_space<vmem>>, %arg5: memref<32x32xf32, #tpu.memory_space<vmem>>, %arg6: memref<6x32xf32, #tpu.memory_space<vmem>>, %arg7: memref<32x2048xf32, #tpu.memory_space<vmem>>, %arg8: memref<1x2048xf32, #tpu.memory_space<vmem>>, %arg9: memref<32x2048xf32, #tpu.memory_space<vmem>>, %arg10: memref<32x1xf32, #tpu.memory_space<vmem>>, %arg11: memref<4x32xf32, #tpu.memory_space<vmem>>, %arg12: memref<1x1xf32, #tpu.memory_space<vmem>>, %arg13: memref<4x1xf32, #tpu.memory_space<vmem>>) attributes {dimension_semantics = [], scalar_prefetch = 0 : i64, scratch_operands = 0 : i64, tpu.core_type = #tpu.core_type<tc>} {
    %c0 = arith.constant 0 : index
    %c0_0 = arith.constant 0 : index
    %0 = vector.load %arg0[%c0, %c0_0] : memref<32x32xf32, #tpu.memory_space<vmem>>, vector<32x32xf32>
    %c0_1 = arith.constant 0 : index
    %c0_2 = arith.constant 0 : index
    %1 = vector.load %arg1[%c0_1, %c0_2] : memref<32x32xf32, #tpu.memory_space<vmem>>, vector<32x32xf32>
    %2 = arith.addf %0, %1 : vector<32x32xf32>
    %c0_3 = arith.constant 0 : index
    %c0_4 = arith.constant 0 : index
    %3 = vector.load %arg6[%c0_3, %c0_4] : memref<6x32xf32, #tpu.memory_space<vmem>>, vector<6x32xf32>
    %4 = vector.extract_strided_slice %3 {offsets = [0, 0], sizes = [1, 32], strides = [1, 1]} : vector<6x32xf32> to vector<1x32xf32>
    %5 = vector.extract_strided_slice %3 {offsets = [1, 0], sizes = [1, 32], strides = [1, 1]} : vector<6x32xf32> to vector<1x32xf32>
    %6 = vector.extract_strided_slice %3 {offsets = [2, 0], sizes = [1, 32], strides = [1, 1]} : vector<6x32xf32> to vector<1x32xf32>
    %7 = vector.extract_strided_slice %3 {offsets = [3, 0], sizes = [1, 32], strides = [1, 1]} : vector<6x32xf32> to vector<1x32xf32>
    %8 = vector.extract_strided_slice %3 {offsets = [4, 0], sizes = [1, 32], strides = [1, 1]} : vector<6x32xf32> to vector<1x32xf32>
    %9 = vector.extract_strided_slice %3 {offsets = [5, 0], sizes = [1, 32], strides = [1, 1]} : vector<6x32xf32> to vector<1x32xf32>
    %c0_5 = arith.constant 0 : index
    %c0_6 = arith.constant 0 : index
    %10 = vector.load %arg3[%c0_5, %c0_6] : memref<32x96xf32, #tpu.memory_space<vmem>>, vector<32x96xf32>
    %cst = arith.constant dense<0.000000e+00> : vector<32x96xf32>
    %11 = tpu.matmul %2, %10, %cst {dimension_numbers = #tpu.dot_dimension_numbers<[1], [0], [0], [1], [0, 0, 1, 1], [], []>} : vector<32x32xf32>, vector<32x96xf32>, vector<32x96xf32> -> vector<32x96xf32>
    %c0_7 = arith.constant 0 : index
    %c0_8 = arith.constant 0 : index
    %12 = vector.load %arg4[%c0_7, %c0_8] : memref<1x96xf32, #tpu.memory_space<vmem>>, vector<1x96xf32>
    %13 = vector.broadcast %12 : vector<1x96xf32> to vector<32x96xf32>
    %14 = arith.addf %11, %13 : vector<32x96xf32>
    %c0_9 = arith.constant 0 : index
    %c0_10 = arith.constant 0 : index
    %15 = vector.load %arg2[%c0_9, %c0_10] : memref<32x32xf32, #tpu.memory_space<vmem>>, vector<32x32xf32>
    %16 = vector.extract_strided_slice %14 {offsets = [0, 0], sizes = [32, 8], strides = [1, 1]} : vector<32x96xf32> to vector<32x8xf32>
    %cst_11 = arith.constant 0.353553385 : f32
    %17 = vector.broadcast %cst_11 : f32 to vector<32x8xf32>
    %18 = arith.mulf %16, %17 : vector<32x8xf32>
    %19 = vector.extract_strided_slice %14 {offsets = [0, 32], sizes = [32, 8], strides = [1, 1]} : vector<32x96xf32> to vector<32x8xf32>
    %20 = vector.extract_strided_slice %14 {offsets = [0, 64], sizes = [32, 8], strides = [1, 1]} : vector<32x96xf32> to vector<32x8xf32>
    %cst_12 = arith.constant dense<0.000000e+00> : vector<32x32xf32>
    %21 = tpu.matmul %18, %19, %cst_12 {dimension_numbers = #tpu.dot_dimension_numbers<[1], [1], [0], [0], [0, 0, 1, 0], [], []>} : vector<32x8xf32>, vector<32x8xf32>, vector<32x32xf32> -> vector<32x32xf32>
    %22 = arith.addf %21, %15 : vector<32x32xf32>
    %cst_13 = arith.constant dense<0xFF800000> : vector<32xf32>
    %23 = vector.multi_reduction <maximumf>, %22, %cst_13 [1] : vector<32x32xf32> to vector<32xf32>
    %24 = vector.shape_cast %23 : vector<32xf32> to vector<32x1xf32>
    %25 = vector.broadcast %24 : vector<32x1xf32> to vector<32x32xf32>
    %26 = arith.subf %22, %25 : vector<32x32xf32>
    %27 = math.exp %26 : vector<32x32xf32>
    %cst_14 = arith.constant dense<0.000000e+00> : vector<32xf32>
    %28 = vector.multi_reduction <add>, %27, %cst_14 [1] : vector<32x32xf32> to vector<32xf32>
    %29 = vector.shape_cast %28 : vector<32xf32> to vector<32x1xf32>
    %30 = tpu.reciprocal %29 {approx = true} : vector<32x1xf32> -> vector<32x1xf32>
    %31 = vector.broadcast %30 : vector<32x1xf32> to vector<32x32xf32>
    %32 = arith.mulf %27, %31 : vector<32x32xf32>
    %cst_15 = arith.constant dense<0.000000e+00> : vector<32x8xf32>
    %33 = tpu.matmul %32, %20, %cst_15 {dimension_numbers = #tpu.dot_dimension_numbers<[1], [0], [0], [1], [0, 0, 1, 1], [], []>} : vector<32x32xf32>, vector<32x8xf32>, vector<32x8xf32> -> vector<32x8xf32>
    %34 = vector.extract_strided_slice %14 {offsets = [0, 8], sizes = [32, 8], strides = [1, 1]} : vector<32x96xf32> to vector<32x8xf32>
    %cst_16 = arith.constant 0.353553385 : f32
    %35 = vector.broadcast %cst_16 : f32 to vector<32x8xf32>
    %36 = arith.mulf %34, %35 : vector<32x8xf32>
    %37 = vector.extract_strided_slice %14 {offsets = [0, 40], sizes = [32, 8], strides = [1, 1]} : vector<32x96xf32> to vector<32x8xf32>
    %38 = vector.extract_strided_slice %14 {offsets = [0, 72], sizes = [32, 8], strides = [1, 1]} : vector<32x96xf32> to vector<32x8xf32>
    %cst_17 = arith.constant dense<0.000000e+00> : vector<32x32xf32>
    %39 = tpu.matmul %36, %37, %cst_17 {dimension_numbers = #tpu.dot_dimension_numbers<[1], [1], [0], [0], [0, 0, 1, 0], [], []>} : vector<32x8xf32>, vector<32x8xf32>, vector<32x32xf32> -> vector<32x32xf32>
    %40 = arith.addf %39, %15 : vector<32x32xf32>
    %cst_18 = arith.constant dense<0xFF800000> : vector<32xf32>
    %41 = vector.multi_reduction <maximumf>, %40, %cst_18 [1] : vector<32x32xf32> to vector<32xf32>
    %42 = vector.shape_cast %41 : vector<32xf32> to vector<32x1xf32>
    %43 = vector.broadcast %42 : vector<32x1xf32> to vector<32x32xf32>
    %44 = arith.subf %40, %43 : vector<32x32xf32>
    %45 = math.exp %44 : vector<32x32xf32>
    %cst_19 = arith.constant dense<0.000000e+00> : vector<32xf32>
    %46 = vector.multi_reduction <add>, %45, %cst_19 [1] : vector<32x32xf32> to vector<32xf32>
    %47 = vector.shape_cast %46 : vector<32xf32> to vector<32x1xf32>
    %48 = tpu.reciprocal %47 {approx = true} : vector<32x1xf32> -> vector<32x1xf32>
    %49 = vector.broadcast %48 : vector<32x1xf32> to vector<32x32xf32>
    %50 = arith.mulf %45, %49 : vector<32x32xf32>
    %cst_20 = arith.constant dense<0.000000e+00> : vector<32x8xf32>
    %51 = tpu.matmul %50, %38, %cst_20 {dimension_numbers = #tpu.dot_dimension_numbers<[1], [0], [0], [1], [0, 0, 1, 1], [], []>} : vector<32x32xf32>, vector<32x8xf32>, vector<32x8xf32> -> vector<32x8xf32>
    %52 = vector.extract_strided_slice %14 {offsets = [0, 16], sizes = [32, 8], strides = [1, 1]} : vector<32x96xf32> to vector<32x8xf32>
    %cst_21 = arith.constant 0.353553385 : f32
    %53 = vector.broadcast %cst_21 : f32 to vector<32x8xf32>
    %54 = arith.mulf %52, %53 : vector<32x8xf32>
    %55 = vector.extract_strided_slice %14 {offsets = [0, 48], sizes = [32, 8], strides = [1, 1]} : vector<32x96xf32> to vector<32x8xf32>
    %56 = vector.extract_strided_slice %14 {offsets = [0, 80], sizes = [32, 8], strides = [1, 1]} : vector<32x96xf32> to vector<32x8xf32>
    %cst_22 = arith.constant dense<0.000000e+00> : vector<32x32xf32>
    %57 = tpu.matmul %54, %55, %cst_22 {dimension_numbers = #tpu.dot_dimension_numbers<[1], [1], [0], [0], [0, 0, 1, 0], [], []>} : vector<32x8xf32>, vector<32x8xf32>, vector<32x32xf32> -> vector<32x32xf32>
    %58 = arith.addf %57, %15 : vector<32x32xf32>
    %cst_23 = arith.constant dense<0xFF800000> : vector<32xf32>
    %59 = vector.multi_reduction <maximumf>, %58, %cst_23 [1] : vector<32x32xf32> to vector<32xf32>
    %60 = vector.shape_cast %59 : vector<32xf32> to vector<32x1xf32>
    %61 = vector.broadcast %60 : vector<32x1xf32> to vector<32x32xf32>
    %62 = arith.subf %58, %61 : vector<32x32xf32>
    %63 = math.exp %62 : vector<32x32xf32>
    %cst_24 = arith.constant dense<0.000000e+00> : vector<32xf32>
    %64 = vector.multi_reduction <add>, %63, %cst_24 [1] : vector<32x32xf32> to vector<32xf32>
    %65 = vector.shape_cast %64 : vector<32xf32> to vector<32x1xf32>
    %66 = tpu.reciprocal %65 {approx = true} : vector<32x1xf32> -> vector<32x1xf32>
    %67 = vector.broadcast %66 : vector<32x1xf32> to vector<32x32xf32>
    %68 = arith.mulf %63, %67 : vector<32x32xf32>
    %cst_25 = arith.constant dense<0.000000e+00> : vector<32x8xf32>
    %69 = tpu.matmul %68, %56, %cst_25 {dimension_numbers = #tpu.dot_dimension_numbers<[1], [0], [0], [1], [0, 0, 1, 1], [], []>} : vector<32x32xf32>, vector<32x8xf32>, vector<32x8xf32> -> vector<32x8xf32>
    %70 = vector.extract_strided_slice %14 {offsets = [0, 24], sizes = [32, 8], strides = [1, 1]} : vector<32x96xf32> to vector<32x8xf32>
    %cst_26 = arith.constant 0.353553385 : f32
    %71 = vector.broadcast %cst_26 : f32 to vector<32x8xf32>
    %72 = arith.mulf %70, %71 : vector<32x8xf32>
    %73 = vector.extract_strided_slice %14 {offsets = [0, 56], sizes = [32, 8], strides = [1, 1]} : vector<32x96xf32> to vector<32x8xf32>
    %74 = vector.extract_strided_slice %14 {offsets = [0, 88], sizes = [32, 8], strides = [1, 1]} : vector<32x96xf32> to vector<32x8xf32>
    %cst_27 = arith.constant dense<0.000000e+00> : vector<32x32xf32>
    %75 = tpu.matmul %72, %73, %cst_27 {dimension_numbers = #tpu.dot_dimension_numbers<[1], [1], [0], [0], [0, 0, 1, 0], [], []>} : vector<32x8xf32>, vector<32x8xf32>, vector<32x32xf32> -> vector<32x32xf32>
    %76 = arith.addf %75, %15 : vector<32x32xf32>
    %cst_28 = arith.constant dense<0xFF800000> : vector<32xf32>
    %77 = vector.multi_reduction <maximumf>, %76, %cst_28 [1] : vector<32x32xf32> to vector<32xf32>
    %78 = vector.shape_cast %77 : vector<32xf32> to vector<32x1xf32>
    %79 = vector.broadcast %78 : vector<32x1xf32> to vector<32x32xf32>
    %80 = arith.subf %76, %79 : vector<32x32xf32>
    %81 = math.exp %80 : vector<32x32xf32>
    %cst_29 = arith.constant dense<0.000000e+00> : vector<32xf32>
    %82 = vector.multi_reduction <add>, %81, %cst_29 [1] : vector<32x32xf32> to vector<32xf32>
    %83 = vector.shape_cast %82 : vector<32xf32> to vector<32x1xf32>
    %84 = tpu.reciprocal %83 {approx = true} : vector<32x1xf32> -> vector<32x1xf32>
    %85 = vector.broadcast %84 : vector<32x1xf32> to vector<32x32xf32>
    %86 = arith.mulf %81, %85 : vector<32x32xf32>
    %cst_30 = arith.constant dense<0.000000e+00> : vector<32x8xf32>
    %87 = tpu.matmul %86, %74, %cst_30 {dimension_numbers = #tpu.dot_dimension_numbers<[1], [0], [0], [1], [0, 0, 1, 1], [], []>} : vector<32x32xf32>, vector<32x8xf32>, vector<32x8xf32> -> vector<32x8xf32>
    %88 = tpu.concatenate %33, %51, %69, %87 in 1 : vector<32x8xf32>, vector<32x8xf32>, vector<32x8xf32>, vector<32x8xf32> -> vector<32x32xf32>
    %c0_31 = arith.constant 0 : index
    %c0_32 = arith.constant 0 : index
    %89 = vector.load %arg5[%c0_31, %c0_32] : memref<32x32xf32, #tpu.memory_space<vmem>>, vector<32x32xf32>
    %cst_33 = arith.constant dense<0.000000e+00> : vector<32x32xf32>
    %90 = tpu.matmul %88, %89, %cst_33 {dimension_numbers = #tpu.dot_dimension_numbers<[1], [0], [0], [1], [0, 0, 1, 1], [], []>} : vector<32x32xf32>, vector<32x32xf32>, vector<32x32xf32> -> vector<32x32xf32>
    %91 = vector.broadcast %4 : vector<1x32xf32> to vector<32x32xf32>
    %92 = arith.addf %90, %91 : vector<32x32xf32>
    %93 = arith.addf %2, %92 : vector<32x32xf32>
    %cst_34 = arith.constant dense<0.000000e+00> : vector<32xf32>
    %94 = vector.multi_reduction <add>, %93, %cst_34 [1] : vector<32x32xf32> to vector<32xf32>
    %95 = vector.shape_cast %94 : vector<32xf32> to vector<32x1xf32>
    %cst_35 = arith.constant 3.200000e+01 : f32
    %96 = vector.broadcast %cst_35 : f32 to vector<32x1xf32>
    %97 = arith.divf %95, %96 : vector<32x1xf32>
    %98 = vector.broadcast %97 : vector<32x1xf32> to vector<32x32xf32>
    %99 = arith.subf %93, %98 : vector<32x32xf32>
    %100 = arith.mulf %99, %99 : vector<32x32xf32>
    %cst_36 = arith.constant dense<0.000000e+00> : vector<32xf32>
    %101 = vector.multi_reduction <add>, %100, %cst_36 [1] : vector<32x32xf32> to vector<32xf32>
    %102 = vector.shape_cast %101 : vector<32xf32> to vector<32x1xf32>
    %cst_37 = arith.constant 3.200000e+01 : f32
    %103 = vector.broadcast %cst_37 : f32 to vector<32x1xf32>
    %104 = arith.divf %102, %103 : vector<32x1xf32>
    %105 = vector.broadcast %97 : vector<32x1xf32> to vector<32x32xf32>
    %106 = arith.subf %93, %105 : vector<32x32xf32>
    %cst_38 = arith.constant 9.99999974E-6 : f32
    %107 = vector.broadcast %cst_38 : f32 to vector<32x1xf32>
    %108 = arith.addf %104, %107 : vector<32x1xf32>
    %109 = math.sqrt %108 : vector<32x1xf32>
    %110 = vector.broadcast %109 : vector<32x1xf32> to vector<32x32xf32>
    %111 = arith.divf %106, %110 : vector<32x32xf32>
    %112 = vector.broadcast %5 : vector<1x32xf32> to vector<32x32xf32>
    %113 = arith.mulf %111, %112 : vector<32x32xf32>
    %114 = vector.broadcast %6 : vector<1x32xf32> to vector<32x32xf32>
    %115 = arith.addf %113, %114 : vector<32x32xf32>
    %c0_39 = arith.constant 0 : index
    %c0_40 = arith.constant 0 : index
    %116 = vector.load %arg7[%c0_39, %c0_40] : memref<32x2048xf32, #tpu.memory_space<vmem>>, vector<32x2048xf32>
    %cst_41 = arith.constant dense<0.000000e+00> : vector<32x2048xf32>
    %117 = tpu.matmul %115, %116, %cst_41 {dimension_numbers = #tpu.dot_dimension_numbers<[1], [0], [0], [1], [0, 0, 1, 1], [], []>} : vector<32x32xf32>, vector<32x2048xf32>, vector<32x2048xf32> -> vector<32x2048xf32>
    %c0_42 = arith.constant 0 : index
    %c0_43 = arith.constant 0 : index
    %118 = vector.load %arg8[%c0_42, %c0_43] : memref<1x2048xf32, #tpu.memory_space<vmem>>, vector<1x2048xf32>
    %119 = vector.broadcast %118 : vector<1x2048xf32> to vector<32x2048xf32>
    %120 = arith.addf %117, %119 : vector<32x2048xf32>
    %cst_44 = arith.constant 0.000000e+00 : f32
    %121 = vector.broadcast %cst_44 : f32 to vector<32x2048xf32>
    %122 = arith.maximumf %120, %121 : vector<32x2048xf32>
    %c0_45 = arith.constant 0 : index
    %c0_46 = arith.constant 0 : index
    %123 = vector.load %arg9[%c0_45, %c0_46] : memref<32x2048xf32, #tpu.memory_space<vmem>>, vector<32x2048xf32>
    %cst_47 = arith.constant dense<0.000000e+00> : vector<32x32xf32>
    %124 = tpu.matmul %122, %123, %cst_47 {dimension_numbers = #tpu.dot_dimension_numbers<[1], [1], [0], [0], [0, 0, 1, 0], [], []>} : vector<32x2048xf32>, vector<32x2048xf32>, vector<32x32xf32> -> vector<32x32xf32>
    %125 = vector.broadcast %7 : vector<1x32xf32> to vector<32x32xf32>
    %126 = arith.addf %124, %125 : vector<32x32xf32>
    %127 = arith.addf %115, %126 : vector<32x32xf32>
    %cst_48 = arith.constant dense<0.000000e+00> : vector<32xf32>
    %128 = vector.multi_reduction <add>, %127, %cst_48 [1] : vector<32x32xf32> to vector<32xf32>
    %129 = vector.shape_cast %128 : vector<32xf32> to vector<32x1xf32>
    %cst_49 = arith.constant 3.200000e+01 : f32
    %130 = vector.broadcast %cst_49 : f32 to vector<32x1xf32>
    %131 = arith.divf %129, %130 : vector<32x1xf32>
    %132 = vector.broadcast %131 : vector<32x1xf32> to vector<32x32xf32>
    %133 = arith.subf %127, %132 : vector<32x32xf32>
    %134 = arith.mulf %133, %133 : vector<32x32xf32>
    %cst_50 = arith.constant dense<0.000000e+00> : vector<32xf32>
    %135 = vector.multi_reduction <add>, %134, %cst_50 [1] : vector<32x32xf32> to vector<32xf32>
    %136 = vector.shape_cast %135 : vector<32xf32> to vector<32x1xf32>
    %cst_51 = arith.constant 3.200000e+01 : f32
    %137 = vector.broadcast %cst_51 : f32 to vector<32x1xf32>
    %138 = arith.divf %136, %137 : vector<32x1xf32>
    %139 = vector.broadcast %131 : vector<32x1xf32> to vector<32x32xf32>
    %140 = arith.subf %127, %139 : vector<32x32xf32>
    %cst_52 = arith.constant 9.99999974E-6 : f32
    %141 = vector.broadcast %cst_52 : f32 to vector<32x1xf32>
    %142 = arith.addf %138, %141 : vector<32x1xf32>
    %143 = math.sqrt %142 : vector<32x1xf32>
    %144 = vector.broadcast %143 : vector<32x1xf32> to vector<32x32xf32>
    %145 = arith.divf %140, %144 : vector<32x32xf32>
    %146 = vector.broadcast %8 : vector<1x32xf32> to vector<32x32xf32>
    %147 = arith.mulf %145, %146 : vector<32x32xf32>
    %148 = vector.broadcast %9 : vector<1x32xf32> to vector<32x32xf32>
    %149 = arith.addf %147, %148 : vector<32x32xf32>
    %c0_53 = arith.constant 0 : index
    %c0_54 = arith.constant 0 : index
    %150 = vector.load %arg11[%c0_53, %c0_54] : memref<4x32xf32, #tpu.memory_space<vmem>>, vector<4x32xf32>
    %cst_55 = arith.constant dense<0.000000e+00> : vector<4x32xf32>
    %151 = tpu.matmul %150, %149, %cst_55 {dimension_numbers = #tpu.dot_dimension_numbers<[1], [0], [0], [1], [0, 0, 1, 1], [], []>} : vector<4x32xf32>, vector<32x32xf32>, vector<4x32xf32> -> vector<4x32xf32>
    %c0_56 = arith.constant 0 : index
    %c0_57 = arith.constant 0 : index
    %152 = vector.load %arg10[%c0_56, %c0_57] : memref<32x1xf32, #tpu.memory_space<vmem>>, vector<32x1xf32>
    %cst_58 = arith.constant dense<0.000000e+00> : vector<4x1xf32>
    %153 = tpu.matmul %151, %152, %cst_58 {dimension_numbers = #tpu.dot_dimension_numbers<[1], [0], [0], [1], [0, 0, 1, 1], [], []>} : vector<4x32xf32>, vector<32x1xf32>, vector<4x1xf32> -> vector<4x1xf32>
    %c0_59 = arith.constant 0 : index
    %c0_60 = arith.constant 0 : index
    %154 = vector.load %arg12[%c0_59, %c0_60] : memref<1x1xf32, #tpu.memory_space<vmem>>, vector<1x1xf32>
    %155 = vector.broadcast %154 : vector<1x1xf32> to vector<4x1xf32>
    %156 = arith.addf %153, %155 : vector<4x1xf32>
    %cst_61 = arith.constant 0.000000e+00 : f32
    %157 = vector.broadcast %cst_61 : f32 to vector<4x1xf32>
    %158 = arith.subf %157, %156 : vector<4x1xf32>
    %159 = math.exp %158 : vector<4x1xf32>
    %cst_62 = arith.constant 1.000000e+00 : f32
    %160 = vector.broadcast %cst_62 : f32 to vector<4x1xf32>
    %161 = arith.addf %160, %159 : vector<4x1xf32>
    %cst_63 = arith.constant 1.000000e+00 : f32
    %162 = vector.broadcast %cst_63 : f32 to vector<4x1xf32>
    %163 = arith.divf %162, %161 : vector<4x1xf32>
    %c0_64 = arith.constant 0 : index
    %c0_65 = arith.constant 0 : index
    %164 = vector.load %arg13[%c0_64, %c0_65] : memref<4x1xf32, #tpu.memory_space<vmem>>, vector<4x1xf32>
    tpu.vector_store %arg13[%c0_64, %c0_65], %163 {strides = array<i32>} : memref<4x1xf32, #tpu.memory_space<vmem>>, vector<4x1xf32>,
    return
  }
}

</mosaic_0001>

<llo_original>
// kernel: transformer_forward.1
$region0: #{transformer_forward.1}
  #allocation0 [shape = 'u32[]', space=smem, size = 0x4, offset = 0x4, fixed_abs, tag = 'smem constant byte address 0x4 - core index']
  #allocation1 [shape = 'u32[144,128]{1,0:T(1,128)}', space=vmem, size = 0x12000, scoped, tag = 'internal scratch']
  #allocation2 [shape = 'f32[1,1]{1,0:T(1,128)S(1)}', space=vmem, size = 0x200, scoped, tag = 'scoped memory for transformer_forward.1']
  %s0 = inlined_call_operand.vmem [shape: f32[32,32], index: 0, kind: input, shape index: {}]
  %s1 = inlined_call_operand.vmem [shape: f32[32,32], index: 1, kind: input, shape index: {}]
  %s2 = inlined_call_operand.vmem [shape: f32[32,32], index: 2, kind: input, shape index: {}]
  %s3 = inlined_call_operand.vmem [shape: f32[32,96], index: 3, kind: input, shape index: {}]
  %s4 = inlined_call_operand.vmem [shape: f32[1,96], index: 4, kind: input, shape index: {}]
  %s5 = inlined_call_operand.vmem [shape: f32[32,32], index: 5, kind: input, shape index: {}]
  %s6 = inlined_call_operand.vmem [shape: f32[6,32], index: 6, kind: input, shape index: {}]
  %s7 = inlined_call_operand.vmem [shape: f32[32,2048], index: 7, kind: input, shape index: {}]
  %s8 = inlined_call_operand.vmem [shape: f32[1,2048], index: 8, kind: input, shape index: {}]
  %s9 = inlined_call_operand.vmem [shape: f32[32,2048], index: 9, kind: input, shape index: {}]
  %s10 = inlined_call_operand.vmem [shape: f32[32,1], index: 10, kind: input, shape index: {}]
  %s11 = inlined_call_operand.vmem [shape: f32[4,32], index: 11, kind: input, shape index: {}]
  %s12 = inlined_call_operand.<no memory space> [shape: f32[1,1], index: 12, kind: input, shape index: {}]
  %s13 = inlined_call_operand.vmem [shape: f32[4,1], index: 13, kind: output, shape index: {}]
  %s14 = sld [smem:[#allocation0]]
  $region62: #{transformer_forward.1} parent=0
    _
  %s16 = ssub.s32 1, %s14
  %s17 = scalar_select 0, %s16, %s14
  %v18 = vstv %s12
  %19 = vst [vmem:[#allocation2] sm:$0x1] %v18
  // Predicated region
  $region2: #{transformer_forward.1} parent=0 // pred_check
    _
  $region3: #{transformer_forward.1} parent=0 // pred_check_branch
    %21 = sbr.rel (0) target = $region5
  $region4: #{transformer_forward.1} parent=0 // pred_region
    _
  $region5: #{transformer_forward.1} parent=0 // pred_fallthru
    _
  // Predicated region
  $region6: #{transformer_forward.1} parent=0 // pred_check
    _
  $region7: #{transformer_forward.1} parent=0 // pred_check_branch
    %23 = sbr.rel (0) target = $region9
  $region8: #{transformer_forward.1} parent=0 // pred_region
    _
  $region9: #{transformer_forward.1} parent=0 // pred_fallthru
    _
  // Predicated region
  $region10: #{transformer_forward.1} parent=0 // pred_check
    _
  $region11: #{transformer_forward.1} parent=0 // pred_check_branch
    %25 = sbr.rel (0) target = $region13
  $region12: #{transformer_forward.1} parent=0 // pred_region
    _
  $region13: #{transformer_forward.1} parent=0 // pred_fallthru
    _
  // Predicated region
  $region14: #{transformer_forward.1} parent=0 // pred_check
    _
  $region15: #{transformer_forward.1} parent=0 // pred_check_branch
    %27 = sbr.rel (0) target = $region17
  $region16: #{transformer_forward.1} parent=0 // pred_region
    _
  $region17: #{transformer_forward.1} parent=0 // pred_fallthru
    _
  // Predicated region
  $region18: #{transformer_forward.1} parent=0 // pred_check
    _
  $region19: #{transformer_forward.1} parent=0 // pred_check_branch
    %29 = sbr.rel (0) target = $region21
  $region20: #{transformer_forward.1} parent=0 // pred_region
    _
  $region21: #{transformer_forward.1} parent=0 // pred_fallthru
    _
  // Predicated region
  $region22: #{transformer_forward.1} parent=0 // pred_check
    _
  $region23: #{transformer_forward.1} parent=0 // pred_check_branch
    %31 = sbr.rel (0) target = $region25
  $region24: #{transformer_forward.1} parent=0 // pred_region
    _
  $region25: #{transformer_forward.1} parent=0 // pred_fallthru
    _
  // Predicated region
  $region26: #{transformer_forward.1} parent=0 // pred_check
    _
  $region27: #{transformer_forward.1} parent=0 // pred_check_branch
    %33 = sbr.rel (0) target = $region29
  $region28: #{transformer_forward.1} parent=0 // pred_region
    _
  $region29: #{transformer_forward.1} parent=0 // pred_fallthru
    _
  // Predicated region
  $region30: #{transformer_forward.1} parent=0 // pred_check
    _
  $region31: #{transformer_forward.1} parent=0 // pred_check_branch
    %35 = sbr.rel (0) target = $region33
  $region32: #{transformer_forward.1} parent=0 // pred_region
    _
  $region33: #{transformer_forward.1} parent=0 // pred_fallthru
    _
  // Predicated region
  $region34: #{transformer_forward.1} parent=0 // pred_check
    _
  $region35: #{transformer_forward.1} parent=0 // pred_check_branch
    %37 = sbr.rel (0) target = $region37
  $region36: #{transformer_forward.1} parent=0 // pred_region
    _
  $region37: #{transformer_forward.1} parent=0 // pred_fallthru
    _
  // Predicated region
  $region38: #{transformer_forward.1} parent=0 // pred_check
    _
  $region39: #{transformer_forward.1} parent=0 // pred_check_branch
    %39 = sbr.rel (0) target = $region41
  $region40: #{transformer_forward.1} parent=0 // pred_region
    _
  $region41: #{transformer_forward.1} parent=0 // pred_fallthru
    _
  // Predicated region
  $region42: #{transformer_forward.1} parent=0 // pred_check
    _
  $region43: #{transformer_forward.1} parent=0 // pred_check_branch
    %41 = sbr.rel (0) target = $region45
  $region44: #{transformer_forward.1} parent=0 // pred_region
    _
  $region45: #{transformer_forward.1} parent=0 // pred_fallthru
    _
  // Predicated region
  $region46: #{transformer_forward.1} parent=0 // pred_check
    _
  $region47: #{transformer_forward.1} parent=0 // pred_check_branch
    %43 = sbr.rel (0) target = $region49
  $region48: #{transformer_forward.1} parent=0 // pred_region
    _
  $region49: #{transformer_forward.1} parent=0 // pred_fallthru
    _
  // Predicated region
  $region50: #{transformer_forward.1} parent=0 // pred_check
    _
  $region51: #{transformer_forward.1} parent=0 // pred_check_branch
    %45 = sbr.rel (0) target = $region53
  $region52: #{transformer_forward.1} parent=0 // pred_region
    _
  $region53: #{transformer_forward.1} parent=0 // pred_fallthru
    _
  %v46 = vld [vmem:[%s0] sm:$0xff]
  %v47 = vld [vmem:[%s0 + $0x8] sm:$0xff]
  %v48 = vld [vmem:[%s0 + $0x10] sm:$0xff]
  %v49 = vld [vmem:[%s0 + $0x18] sm:$0xff]
  %v50 = vld [vmem:[%s1] sm:$0xff]
  %v51 = vld [vmem:[%s1 + $0x8] sm:$0xff]
  %v52 = vld [vmem:[%s1 + $0x10] sm:$0xff]
  %v53 = vld [vmem:[%s1 + $0x18] sm:$0xff]
  %v54 = vadd.f32 %v46, %v50
  %v55 = vadd.f32 %v47, %v51
  %v56 = vadd.f32 %v48, %v52
  %v57 = vadd.f32 %v49, %v53
  %v58 = vld [vmem:[%s6] sm:$0x3f]
  %v59 = vld [vmem:[%s3] sm:$0xff]
  %v60 = vld [vmem:[%s3 + $0x8] sm:$0xff]
  %v61 = vld [vmem:[%s3 + $0x10] sm:$0xff]
  %v62 = vld [vmem:[%s3 + $0x18] sm:$0xff]
  %v63 = vld [vmem:[%s4] sm:$0x1]
  %v65 = vlaneseq
  %v66 = vshrl.u32 %v65, 7
  %v67 = vsub.s32 0, %v66
  %v68 = vrot.slane %v63, %v67
  %vm70 = vcmask 261120
  %v72 = vsel %vm70, %v54, 0
  %v75 = vsel %vm70, %v55, 0
  %v78 = vsel %vm70, %v56, 0
  %v81 = vsel %vm70, %v57, 0
  %83 = vmatprep.subr.mxu0 0.0
  %84 = vmatpush1.msra.mxu0 %v59
  %85 = vmatprep.subr.mxu0 0.0
  %86 = vmatpush1.msra.mxu0 %v60
  %87 = vmatprep.subr.mxu0 0.0
  %88 = vmatpush1.msra.mxu0 %v61
  %89 = vmatprep.subr.mxu0 0.0
  %90 = vmatpush1.msra.mxu0 %v62
  %91 = vmatprep.subr.mxu0 0.0
  %92 = vmatpush1.msra.mxu0 0.0
  %93 = vmatprep.subr.mxu0 0.0
  %94 = vmatpush1.msra.mxu0 0.0
  %95 = vmatprep.subr.mxu0 0.0
  %96 = vmatpush1.msra.mxu0 0.0
  %97 = vmatprep.subr.mxu0 0.0
  %98 = vmatpush1.msra.mxu0 0.0
  %99 = vmatprep.subr.mxu0 0.0
  %100 = vmatpush1.msra.mxu0 0.0
  %101 = vmatprep.subr.mxu0 0.0
  %102 = vmatpush1.msra.mxu0 0.0
  %103 = vmatprep.subr.mxu0 0.0
  %104 = vmatpush1.msra.mxu0 0.0
  %105 = vmatprep.subr.mxu0 0.0
  %106 = vmatpush1.msra.mxu0 0.0
  %107 = vmatprep.subr.mxu0 0.0
  %108 = vmatpush1.msra.mxu0 0.0
  %109 = vmatprep.subr.mxu0 0.0
  %110 = vmatpush1.msra.mxu0 0.0
  %111 = vmatprep.subr.mxu0 0.0
  %112 = vmatpush1.msra.mxu0 0.0
  %113 = vmatprep.subr.mxu0 0.0
  %114 = vmatpush1.msra.mxu0 0.0
  %115 = vmatprep.subr.mxu0 0.0
  %116 = vmatpush1.msra.mxu0 0.0
  %117 = vmatprep.subr.mxu0 0.0
  %118 = vmatpush1.msra.mxu0 0.0
  %119 = vmatprep.subr.mxu0 0.0
  %120 = vmatpush1.msra.mxu0 0.0
  %121 = vmatprep.subr.mxu0 0.0
  %122 = vmatpush1.msra.mxu0 0.0
  %123 = vmatprep.subr.mxu0 0.0
  %124 = vmatpush1.msra.mxu0 0.0
  %125 = vmatprep.subr.mxu0 0.0
  %126 = vmatpush1.msra.mxu0 0.0
  %127 = vmatprep.subr.mxu0 0.0
  %128 = vmatpush1.msra.mxu0 0.0
  %129 = vmatprep.subr.mxu0 0.0
  %130 = vmatpush1.msra.mxu0 0.0
  %131 = vmatprep.subr.mxu0 0.0
  %132 = vmatpush1.msra.mxu0 0.0
  %133 = vmatprep.subr.mxu0 0.0
  %134 = vmatpush1.msra.mxu0 0.0
  %135 = vmatprep.subr.mxu0 0.0
  %136 = vmatpush1.msra.mxu0 0.0
  %137 = vmatprep.subr.mxu0 0.0
  %138 = vmatpush1.msra.mxu0 0.0
  %139 = vmatprep.subr.mxu0 0.0
  %140 = vmatpush1.msra.mxu0 0.0
  %141 = vmatprep.subr.mxu0 0.0
  %142 = vmatpush1.msra.mxu0 0.0
  %143 = vmatprep.subr.mxu0 0.0
  %144 = vmatpush1.msra.mxu0 0.0
  %145 = vmatprep.subr.mxu0 0.0
  %146 = vmatpush1.msra.mxu0 0.0
  %147 = vmatprep.mubr.f32.mxu0 0.0
  %148 = vmatmul.mubr.f32.gmra.mrb[0].mxu0 %v72
  %v149 = vpop.f32.mrb[0].mxu0
  %v150 = vadd.f32 %v68, %v149
  %v151 = vpop.f32.mrb[0].mxu0
  %152 = vmatprep.mubr.f32.mxu0 0.0
  %153 = vmatmul.mubr.f32.gmra.mrb[0].mxu0 %v75
  %v154 = vpop.f32.mrb[0].mxu0
  %v155 = vadd.f32 %v68, %v154
  %v156 = vpop.f32.mrb[0].mxu0
  %157 = vmatprep.mubr.f32.mxu0 0.0
  %158 = vmatmul.mubr.f32.gmra.mrb[0].mxu0 %v78
  %v159 = vpop.f32.mrb[0].mxu0
  %v160 = vadd.f32 %v68, %v159
  %v161 = vpop.f32.mrb[0].mxu0
  %162 = vmatprep.mubr.f32.mxu0 0.0
  %163 = vmatmul.mubr.f32.gmra.mrb[0].mxu0 %v81
  %v164 = vpop.f32.mrb[0].mxu0
  %v165 = vadd.f32 %v68, %v164
  %v166 = vpop.f32.mrb[0].mxu0
  %167 = vdwg.mxu0
  %v168 = vld [vmem:[%s2] sm:$0xff]
  %v169 = vld [vmem:[%s2 + $0x8] sm:$0xff]
  %v170 = vld [vmem:[%s2 + $0x10] sm:$0xff]
  %v171 = vld [vmem:[%s2 + $0x18] sm:$0xff]
  %v172 = vmul.f32 %v150, 0.35355338
  %v173 = vmul.f32 %v155, 0.35355338
  %v174 = vmul.f32 %v160, 0.35355338
  %v175 = vmul.f32 %v165, 0.35355338
  %180 = vrot.lane.b32.xlu0 %v150, 96
  %v181 = vpop.permute.xlu0 %180
  %182 = vrot.lane.b32.xlu0 %v155, 96
  %v183 = vpop.permute.xlu0 %182
  %184 = vrot.lane.b32.xlu0 %v160, 96
  %v185 = vpop.permute.xlu0 %184
  %186 = vrot.lane.b32.xlu0 %v165, 96
  %v187 = vpop.permute.xlu0 %186
  %vm188 = vcmask 64512
  %v190 = vsel %vm188, %v172, 0
  %v193 = vsel %vm188, %v173, 0
  %v196 = vsel %vm188, %v174, 0
  %v199 = vsel %vm188, %v175, 0
  %v201 = vsel %vm188, %v181, 0
  %v203 = vsel %vm188, %v183, 0
  %v205 = vsel %vm188, %v185, 0
  %v207 = vsel %vm188, %v187, 0
  %209 = vmatprep.subr.mxu0 0.0
  %210 = vmatpush1.xpose.msra.mxu0 %v201
  %211 = vmatprep.subr.mxu0 0.0
  %212 = vmatpush1.xpose.msra.mxu0 %v203
  %213 = vmatprep.subr.mxu0 0.0
  %214 = vmatpush1.xpose.msra.mxu0 %v205
  %215 = vmatprep.subr.mxu0 0.0
  %216 = vmatpush1.xpose.msra.mxu0 %v207
  %217 = vmatprep.subr.mxu0 0.0
  %218 = vmatpush1.xpose.msra.mxu0 0.0
  %219 = vmatprep.subr.mxu0 0.0
  %220 = vmatpush1.xpose.msra.mxu0 0.0
  %221 = vmatprep.subr.mxu0 0.0
  %222 = vmatpush1.xpose.msra.mxu0 0.0
  %223 = vmatprep.subr.mxu0 0.0
  %224 = vmatpush1.xpose.msra.mxu0 0.0
  %225 = vmatprep.subr.mxu0 0.0
  %226 = vmatpush1.xpose.msra.mxu0 0.0
  %227 = vmatprep.subr.mxu0 0.0
  %228 = vmatpush1.xpose.msra.mxu0 0.0
  %229 = vmatprep.subr.mxu0 0.0
  %230 = vmatpush1.xpose.msra.mxu0 0.0
  %231 = vmatprep.subr.mxu0 0.0
  %232 = vmatpush1.xpose.msra.mxu0 0.0
  %233 = vmatprep.subr.mxu0 0.0
  %234 = vmatpush1.xpose.msra.mxu0 0.0
  %235 = vmatprep.subr.mxu0 0.0
  %236 = vmatpush1.xpose.msra.mxu0 0.0
  %237 = vmatprep.subr.mxu0 0.0
  %238 = vmatpush1.xpose.msra.mxu0 0.0
  %239 = vmatprep.subr.mxu0 0.0
  %240 = vmatpush1.xpose.msra.mxu0 0.0
  %241 = vmatprep.subr.mxu0 0.0
  %242 = vmatpush1.xpose.msra.mxu0 0.0
  %243 = vmatprep.subr.mxu0 0.0
  %244 = vmatpush1.xpose.msra.mxu0 0.0
  %245 = vmatprep.subr.mxu0 0.0
  %246 = vmatpush1.xpose.msra.mxu0 0.0
  %247 = vmatprep.subr.mxu0 0.0
  %248 = vmatpush1.xpose.msra.mxu0 0.0
  %249 = vmatprep.subr.mxu0 0.0
  %250 = vmatpush1.xpose.msra.mxu0 0.0
  %251 = vmatprep.subr.mxu0 0.0
  %252 = vmatpush1.xpose.msra.mxu0 0.0
  %253 = vmatprep.subr.mxu0 0.0
  %254 = vmatpush1.xpose.msra.mxu0 0.0
  %255 = vmatprep.subr.mxu0 0.0
  %256 = vmatpush1.xpose.msra.mxu0 0.0
  %257 = vmatprep.subr.mxu0 0.0
  %258 = vmatpush1.xpose.msra.mxu0 0.0
  %259 = vmatprep.subr.mxu0 0.0
  %260 = vmatpush1.xpose.msra.mxu0 0.0
  %261 = vmatprep.subr.mxu0 0.0
  %262 = vmatpush1.xpose.msra.mxu0 0.0
  %263 = vmatprep.subr.mxu0 0.0
  %264 = vmatpush1.xpose.msra.mxu0 0.0
  %265 = vmatprep.subr.mxu0 0.0
  %266 = vmatpush1.xpose.msra.mxu0 0.0
  %267 = vmatprep.subr.mxu0 0.0
  %268 = vmatpush1.xpose.msra.mxu0 0.0
  %269 = vmatprep.subr.mxu0 0.0
  %270 = vmatpush1.xpose.msra.mxu0 0.0
  %271 = vmatprep.subr.mxu0 0.0
  %272 = vmatpush1.xpose.msra.mxu0 0.0
  %273 = vmatprep.mubr.f32.mxu0 0.0
  %274 = vmatmul.mubr.f32.gmra.mrb[0].mxu0 %v190
  %v275 = vpop.f32.mrb[0].mxu0
  %v276 = vadd.f32 %v168, %v275
  %v277 = vpop.f32.mrb[0].mxu0
  %278 = vmatprep.mubr.f32.mxu0 0.0
  %279 = vmatmul.mubr.f32.gmra.mrb[0].mxu0 %v193
  %v280 = vpop.f32.mrb[0].mxu0
  %v281 = vadd.f32 %v169, %v280
  %v282 = vpop.f32.mrb[0].mxu0
  %283 = vmatprep.mubr.f32.mxu0 0.0
  %284 = vmatmul.mubr.f32.gmra.mrb[0].mxu0 %v196
  %v285 = vpop.f32.mrb[0].mxu0
  %v286 = vadd.f32 %v170, %v285
  %v287 = vpop.f32.mrb[0].mxu0
  %288 = vmatprep.mubr.f32.mxu0 0.0
  %289 = vmatmul.mubr.f32.gmra.mrb[0].mxu0 %v199
  %v290 = vpop.f32.mrb[0].mxu0
  %v291 = vadd.f32 %v171, %v290
  %v292 = vpop.f32.mrb[0].mxu0
  %293 = vdwg.mxu0
  %v294 = vsel %vm70, %v276, -inf
  %295 = vmax.xlane.f32.xlu0 %v294
  %v296 = vpop.xlane.xlu0 %295
  %v297 = vsel %vm70, %v281, -inf
  %298 = vmax.xlane.f32.xlu0 %v297
  %v299 = vpop.xlane.xlu0 %298
  %v300 = vsel %vm70, %v286, -inf
  %301 = vmax.xlane.f32.xlu0 %v300
  %v302 = vpop.xlane.xlu0 %301
  %v303 = vsel %vm70, %v291, -inf
  %304 = vmax.xlane.f32.xlu0 %v303
  %v305 = vpop.xlane.xlu0 %304
  %v306 = vsub.f32 %v276, %v296
  %v307 = vsub.f32 %v281, %v299
  %v308 = vsub.f32 %v286, %v302
  %v309 = vsub.f32 %v291, %v305
  %v310 = vmul.f32 %v306, 1.442695
  %v311 = vpow.pop %v310
  %v312 = vmul.f32 %v307, 1.442695
  %v313 = vpow.pop %v312
  %v314 = vmul.f32 %v308, 1.442695
  %v315 = vpow.pop %v314
  %v316 = vmul.f32 %v309, 1.442695
  %v317 = vpow.pop %v316
  %v318 = vsel %vm70, %v311, 0.0
  %319 = vadd.xlane.f32.xlu0 %v318
  %v320 = vpop.xlane.xlu0 %319
  %v321 = vsel %vm70, %v313, 0.0
  %322 = vadd.xlane.f32.xlu0 %v321
  %v323 = vpop.xlane.xlu0 %322
  %v324 = vsel %vm70, %v315, 0.0
  %325 = vadd.xlane.f32.xlu0 %v324
  %v326 = vpop.xlane.xlu0 %325
  %v327 = vsel %vm70, %v317, 0.0
  %328 = vadd.xlane.f32.xlu0 %v327
  %v329 = vpop.xlane.xlu0 %328
  %v330 = vrcp.pop %v320
  %v331 = vrcp.pop %v323
  %v332 = vrcp.pop %v326
  %v333 = vrcp.pop %v329
  %v334 = vmul.f32 %v311, %v330
  %v335 = vmul.f32 %v313, %v331
  %v336 = vmul.f32 %v315, %v332
  %v337 = vmul.f32 %v317, %v333
  %338 = vrot.lane.b32.xlu0 %v150, 64
  %v339 = vpop.permute.xlu0 %338
  %340 = vrot.lane.b32.xlu0 %v155, 64
  %v341 = vpop.permute.xlu0 %340
  %342 = vrot.lane.b32.xlu0 %v160, 64
  %v343 = vpop.permute.xlu0 %342
  %344 = vrot.lane.b32.xlu0 %v165, 64
  %v345 = vpop.permute.xlu0 %344
  %v351 = vsel %vm70, %v334, 0
  %v354 = vsel %vm70, %v335, 0
  %v357 = vsel %vm70, %v336, 0
  %v360 = vsel %vm70, %v337, 0
  %362 = vmatprep.subr.mxu0 0.0
  %363 = vmatpush1.msra.mxu0 %v339
  %364 = vmatprep.subr.mxu0 0.0
  %365 = vmatpush1.msra.mxu0 %v341
  %366 = vmatprep.subr.mxu0 0.0
  %367 = vmatpush1.msra.mxu0 %v343
  %368 = vmatprep.subr.mxu0 0.0
  %369 = vmatpush1.msra.mxu0 %v345
  %370 = vmatprep.subr.mxu0 0.0
  %371 = vmatpush1.msra.mxu0 0.0
  %372 = vmatprep.subr.mxu0 0.0
  %373 = vmatpush1.msra.mxu0 0.0
  %374 = vmatprep.subr.mxu0 0.0
  %375 = vmatpush1.msra.mxu0 0.0
  %376 = vmatprep.subr.mxu0 0.0
  %377 = vmatpush1.msra.mxu0 0.0
  %378 = vmatprep.subr.mxu0 0.0
  %379 = vmatpush1.msra.mxu0 0.0
  %380 = vmatprep.subr.mxu0 0.0
  %381 = vmatpush1.msra.mxu0 0.0
  %382 = vmatprep.subr.mxu0 0.0
  %383 = vmatpush1.msra.mxu0 0.0
  %384 = vmatprep.subr.mxu0 0.0
  %385 = vmatpush1.msra.mxu0 0.0
  %386 = vmatprep.subr.mxu0 0.0
  %387 = vmatpush1.msra.mxu0 0.0
  %388 = vmatprep.subr.mxu0 0.0
  %389 = vmatpush1.msra.mxu0 0.0
  %390 = vmatprep.subr.mxu0 0.0
  %391 = vmatpush1.msra.mxu0 0.0
  %392 = vmatprep.subr.mxu0 0.0
  %393 = vmatpush1.msra.mxu0 0.0
  %394 = vmatprep.subr.mxu0 0.0
  %395 = vmatpush1.msra.mxu0 0.0
  %396 = vmatprep.subr.mxu0 0.0
  %397 = vmatpush1.msra.mxu0 0.0
  %398 = vmatprep.subr.mxu0 0.0
  %399 = vmatpush1.msra.mxu0 0.0
  %400 = vmatprep.subr.mxu0 0.0
  %401 = vmatpush1.msra.mxu0 0.0
  %402 = vmatprep.subr.mxu0 0.0
  %403 = vmatpush1.msra.mxu0 0.0
  %404 = vmatprep.subr.mxu0 0.0
  %405 = vmatpush1.msra.mxu0 0.0
  %406 = vmatprep.subr.mxu0 0.0
  %407 = vmatpush1.msra.mxu0 0.0
  %408 = vmatprep.subr.mxu0 0.0
  %409 = vmatpush1.msra.mxu0 0.0
  %410 = vmatprep.subr.mxu0 0.0
  %411 = vmatpush1.msra.mxu0 0.0
  %412 = vmatprep.subr.mxu0 0.0
  %413 = vmatpush1.msra.mxu0 0.0
  %414 = vmatprep.subr.mxu0 0.0
  %415 = vmatpush1.msra.mxu0 0.0
  %416 = vmatprep.subr.mxu0 0.0
  %417 = vmatpush1.msra.mxu0 0.0
  %418 = vmatprep.subr.mxu0 0.0
  %419 = vmatpush1.msra.mxu0 0.0
  %420 = vmatprep.subr.mxu0 0.0
  %421 = vmatpush1.msra.mxu0 0.0
  %422 = vmatprep.subr.mxu0 0.0
  %423 = vmatpush1.msra.mxu0 0.0
  %424 = vmatprep.subr.mxu0 0.0
  %425 = vmatpush1.msra.mxu0 0.0
  %426 = vmatprep.mubr.f32.mxu0 0.0
  %427 = vmatmul.mubr.f32.gmra.mrb[0].mxu0 %v351
  %v428 = vpop.f32.mrb[0].mxu0
  %v429 = vadd.f32 0.0, %v428
  %v430 = vpop.f32.mrb[0].mxu0
  %431 = vmatprep.mubr.f32.mxu0 0.0
  %432 = vmatmul.mubr.f32.gmra.mrb[0].mxu0 %v354
  %v433 = vpop.f32.mrb[0].mxu0
  %v434 = vadd.f32 0.0, %v433
  %v435 = vpop.f32.mrb[0].mxu0
  %436 = vmatprep.mubr.f32.mxu0 0.0
  %437 = vmatmul.mubr.f32.gmra.mrb[0].mxu0 %v357
  %v438 = vpop.f32.mrb[0].mxu0
  %v439 = vadd.f32 0.0, %v438
  %v440 = vpop.f32.mrb[0].mxu0
  %441 = vmatprep.mubr.f32.mxu0 0.0
  %442 = vmatmul.mubr.f32.gmra.mrb[0].mxu0 %v360
  %v443 = vpop.f32.mrb[0].mxu0
  %v444 = vadd.f32 0.0, %v443
  %v445 = vpop.f32.mrb[0].mxu0
  %446 = vdwg.mxu0
  %447 = vrot.lane.b32.xlu0 %v172, 120
  %v448 = vpop.permute.xlu0 %447
  %449 = vrot.lane.b32.xlu0 %v173, 120
  %v450 = vpop.permute.xlu0 %449
  %451 = vrot.lane.b32.xlu0 %v174, 120
  %v452 = vpop.permute.xlu0 %451
  %453 = vrot.lane.b32.xlu0 %v175, 120
  %v454 = vpop.permute.xlu0 %453
  %455 = vrot.lane.b32.xlu0 %v150, 88
  %v456 = vpop.permute.xlu0 %455
  %457 = vrot.lane.b32.xlu0 %v155, 88
  %v458 = vpop.permute.xlu0 %457
  %459 = vrot.lane.b32.xlu0 %v160, 88
  %v460 = vpop.permute.xlu0 %459
  %461 = vrot.lane.b32.xlu0 %v165, 88
  %v462 = vpop.permute.xlu0 %461
  %v463 = vsel %vm188, %v448, 0
  %v465 = vsel %vm188, %v450, 0
  %v467 = vsel %vm188, %v452, 0
  %v469 = vsel %vm188, %v454, 0
  %v471 = vsel %vm188, %v456, 0
  %v473 = vsel %vm188, %v458, 0
  %v475 = vsel %vm188, %v460, 0
  %v477 = vsel %vm188, %v462, 0
  %479 = vmatprep.subr.mxu0 0.0
  %480 = vmatpush1.xpose.msra.mxu0 %v471
  %481 = vmatprep.subr.mxu0 0.0
  %482 = vmatpush1.xpose.msra.mxu0 %v473
  %483 = vmatprep.subr.mxu0 0.0
  %484 = vmatpush1.xpose.msra.mxu0 %v475
  %485 = vmatprep.subr.mxu0 0.0
  %486 = vmatpush1.xpose.msra.mxu0 %v477
  %487 = vmatprep.subr.mxu0 0.0
  %488 = vmatpush1.xpose.msra.mxu0 0.0
  %489 = vmatprep.subr.mxu0 0.0
  %490 = vmatpush1.xpose.msra.mxu0 0.0
  %491 = vmatprep.subr.mxu0 0.0
  %492 = vmatpush1.xpose.msra.mxu0 0.0
  %493 = vmatprep.subr.mxu0 0.0
  %494 = vmatpush1.xpose.msra.mxu0 0.0
  %495 = vmatprep.subr.mxu0 0.0
  %496 = vmatpush1.xpose.msra.mxu0 0.0
  %497 = vmatprep.subr.mxu0 0.0
  %498 = vmatpush1.xpose.msra.mxu0 0.0
  %499 = vmatprep.subr.mxu0 0.0
  %500 = vmatpush1.xpose.msra.mxu0 0.0
  %501 = vmatprep.subr.mxu0 0.0
  %502 = vmatpush1.xpose.msra.mxu0 0.0
  %503 = vmatprep.subr.mxu0 0.0
  %504 = vmatpush1.xpose.msra.mxu0 0.0
  %505 = vmatprep.subr.mxu0 0.0
  %506 = vmatpush1.xpose.msra.mxu0 0.0
  %507 = vmatprep.subr.mxu0 0.0
  %508 = vmatpush1.xpose.msra.mxu0 0.0
  %509 = vmatprep.subr.mxu0 0.0
  %510 = vmatpush1.xpose.msra.mxu0 0.0
  %511 = vmatprep.subr.mxu0 0.0
  %512 = vmatpush1.xpose.msra.mxu0 0.0
  %513 = vmatprep.subr.mxu0 0.0
  %514 = vmatpush1.xpose.msra.mxu0 0.0
  %515 = vmatprep.subr.mxu0 0.0
  %516 = vmatpush1.xpose.msra.mxu0 0.0
  %517 = vmatprep.subr.mxu0 0.0
  %518 = vmatpush1.xpose.msra.mxu0 0.0
  %519 = vmatprep.subr.mxu0 0.0
  %520 = vmatpush1.xpose.msra.mxu0 0.0
  %521 = vmatprep.subr.mxu0 0.0
  %522 = vmatpush1.xpose.msra.mxu0 0.0
  %523 = vmatprep.subr.mxu0 0.0
  %524 = vmatpush1.xpose.msra.mxu0 0.0
  %525 = vmatprep.subr.mxu0 0.0
  %526 = vmatpush1.xpose.msra.mxu0 0.0
  %527 = vmatprep.subr.mxu0 0.0
  %528 = vmatpush1.xpose.msra.mxu0 0.0
  %529 = vmatprep.subr.mxu0 0.0
  %530 = vmatpush1.xpose.msra.mxu0 0.0
  %531 = vmatprep.subr.mxu0 0.0
  %532 = vmatpush1.xpose.msra.mxu0 0.0
  %533 = vmatprep.subr.mxu0 0.0
  %534 = vmatpush1.xpose.msra.mxu0 0.0
  %535 = vmatprep.subr.mxu0 0.0
  %536 = vmatpush1.xpose.msra.mxu0 0.0
  %537 = vmatprep.subr.mxu0 0.0
  %538 = vmatpush1.xpose.msra.mxu0 0.0
  %539 = vmatprep.subr.mxu0 0.0
  %540 = vmatpush1.xpose.msra.mxu0 0.0
  %541 = vmatprep.subr.mxu0 0.0
  %542 = vmatpush1.xpose.msra.mxu0 0.0
  %543 = vmatprep.mubr.f32.mxu0 0.0
  %544 = vmatmul.mubr.f32.gmra.mrb[0].mxu0 %v463
  %v545 = vpop.f32.mrb[0].mxu0
  %v546 = vadd.f32 %v168, %v545
  %v547 = vpop.f32.mrb[0].mxu0
  %548 = vmatprep.mubr.f32.mxu0 0.0
  %549 = vmatmul.mubr.f32.gmra.mrb[0].mxu0 %v465
  %v550 = vpop.f32.mrb[0].mxu0
  %v551 = vadd.f32 %v169, %v550
  %v552 = vpop.f32.mrb[0].mxu0
  %553 = vmatprep.mubr.f32.mxu0 0.0
  %554 = vmatmul.mubr.f32.gmra.mrb[0].mxu0 %v467
  %v555 = vpop.f32.mrb[0].mxu0
  %v556 = vadd.f32 %v170, %v555
  %v557 = vpop.f32.mrb[0].mxu0
  %558 = vmatprep.mubr.f32.mxu0 0.0
  %559 = vmatmul.mubr.f32.gmra.mrb[0].mxu0 %v469
  %v560 = vpop.f32.mrb[0].mxu0
  %v561 = vadd.f32 %v171, %v560
  %v562 = vpop.f32.mrb[0].mxu0
  %563 = vdwg.mxu0
  %v564 = vsel %vm70, %v546, -inf
  %565 = vmax.xlane.f32.xlu0 %v564
  %v566 = vpop.xlane.xlu0 %565
  %v567 = vsel %vm70, %v551, -inf
  %568 = vmax.xlane.f32.xlu0 %v567
  %v569 = vpop.xlane.xlu0 %568
  %v570 = vsel %vm70, %v556, -inf
  %571 = vmax.xlane.f32.xlu0 %v570
  %v572 = vpop.xlane.xlu0 %571
  %v573 = vsel %vm70, %v561, -inf
  %574 = vmax.xlane.f32.xlu0 %v573
  %v575 = vpop.xlane.xlu0 %574
  %v576 = vsub.f32 %v546, %v566
  %v577 = vsub.f32 %v551, %v569
  %v578 = vsub.f32 %v556, %v572
  %v579 = vsub.f32 %v561, %v575
  %v580 = vmul.f32 %v576, 1.442695
  %v581 = vpow.pop %v580
  %v582 = vmul.f32 %v577, 1.442695
  %v583 = vpow.pop %v582
  %v584 = vmul.f32 %v578, 1.442695
  %v585 = vpow.pop %v584
  %v586 = vmul.f32 %v579, 1.442695
  %v587 = vpow.pop %v586
  %v588 = vsel %vm70, %v581, 0.0
  %589 = vadd.xlane.f32.xlu0 %v588
  %v590 = vpop.xlane.xlu0 %589
  %v591 = vsel %vm70, %v583, 0.0
  %592 = vadd.xlane.f32.xlu0 %v591
  %v593 = vpop.xlane.xlu0 %592
  %v594 = vsel %vm70, %v585, 0.0
  %595 = vadd.xlane.f32.xlu0 %v594
  %v596 = vpop.xlane.xlu0 %595
  %v597 = vsel %vm70, %v587, 0.0
  %598 = vadd.xlane.f32.xlu0 %v597
  %v599 = vpop.xlane.xlu0 %598
  %v600 = vrcp.pop %v590
  %v601 = vrcp.pop %v593
  %v602 = vrcp.pop %v596
  %v603 = vrcp.pop %v599
  %v604 = vmul.f32 %v581, %v600
  %v605 = vmul.f32 %v583, %v601
  %v606 = vmul.f32 %v585, %v602
  %v607 = vmul.f32 %v587, %v603
  %608 = vrot.lane.b32.xlu0 %v150, 56
  %v609 = vpop.permute.xlu0 %608
  %610 = vrot.lane.b32.xlu0 %v155, 56
  %v611 = vpop.permute.xlu0 %610
  %612 = vrot.lane.b32.xlu0 %v160, 56
  %v613 = vpop.permute.xlu0 %612
  %614 = vrot.lane.b32.xlu0 %v165, 56
  %v615 = vpop.permute.xlu0 %614
  %v621 = vsel %vm70, %v604, 0
  %v624 = vsel %vm70, %v605, 0
  %v627 = vsel %vm70, %v606, 0
  %v630 = vsel %vm70, %v607, 0
  %632 = vmatprep.subr.mxu0 0.0
  %633 = vmatpush1.msra.mxu0 %v609
  %634 = vmatprep.subr.mxu0 0.0
  %635 = vmatpush1.msra.mxu0 %v611
  %636 = vmatprep.subr.mxu0 0.0
  %637 = vmatpush1.msra.mxu0 %v613
  %638 = vmatprep.subr.mxu0 0.0
  %639 = vmatpush1.msra.mxu0 %v615
  %640 = vmatprep.subr.mxu0 0.0
  %641 = vmatpush1.msra.mxu0 0.0
  %642 = vmatprep.subr.mxu0 0.0
  %643 = vmatpush1.msra.mxu0 0.0
  %644 = vmatprep.subr.mxu0 0.0
  %645 = vmatpush1.msra.mxu0 0.0
  %646 = vmatprep.subr.mxu0 0.0
  %647 = vmatpush1.msra.mxu0 0.0
  %648 = vmatprep.subr.mxu0 0.0
  %649 = vmatpush1.msra.mxu0 0.0
  %650 = vmatprep.subr.mxu0 0.0
  %651 = vmatpush1.msra.mxu0 0.0
  %652 = vmatprep.subr.mxu0 0.0
  %653 = vmatpush1.msra.mxu0 0.0
  %654 = vmatprep.subr.mxu0 0.0
  %655 = vmatpush1.msra.mxu0 0.0
  %656 = vmatprep.subr.mxu0 0.0
  %657 = vmatpush1.msra.mxu0 0.0
  %658 = vmatprep.subr.mxu0 0.0
  %659 = vmatpush1.msra.mxu0 0.0
  %660 = vmatprep.subr.mxu0 0.0
  %661 = vmatpush1.msra.mxu0 0.0
  %662 = vmatprep.subr.mxu0 0.0
  %663 = vmatpush1.msra.mxu0 0.0
  %664 = vmatprep.subr.mxu0 0.0
  %665 = vmatpush1.msra.mxu0 0.0
  %666 = vmatprep.subr.mxu0 0.0
  %667 = vmatpush1.msra.mxu0 0.0
  %668 = vmatprep.subr.mxu0 0.0
  %669 = vmatpush1.msra.mxu0 0.0
  %670 = vmatprep.subr.mxu0 0.0
  %671 = vmatpush1.msra.mxu0 0.0
  %672 = vmatprep.subr.mxu0 0.0
  %673 = vmatpush1.msra.mxu0 0.0
  %674 = vmatprep.subr.mxu0 0.0
  %675 = vmatpush1.msra.mxu0 0.0
  %676 = vmatprep.subr.mxu0 0.0
  %677 = vmatpush1.msra.mxu0 0.0
  %678 = vmatprep.subr.mxu0 0.0
  %679 = vmatpush1.msra.mxu0 0.0
  %680 = vmatprep.subr.mxu0 0.0
  %681 = vmatpush1.msra.mxu0 0.0
  %682 = vmatprep.subr.mxu0 0.0
  %683 = vmatpush1.msra.mxu0 0.0
  %684 = vmatprep.subr.mxu0 0.0
  %685 = vmatpush1.msra.mxu0 0.0
  %686 = vmatprep.subr.mxu0 0.0
  %687 = vmatpush1.msra.mxu0 0.0
  %688 = vmatprep.subr.mxu0 0.0
  %689 = vmatpush1.msra.mxu0 0.0
  %690 = vmatprep.subr.mxu0 0.0
  %691 = vmatpush1.msra.mxu0 0.0
  %692 = vmatprep.subr.mxu0 0.0
  %693 = vmatpush1.msra.mxu0 0.0
  %694 = vmatprep.subr.mxu0 0.0
  %695 = vmatpush1.msra.mxu0 0.0
  %696 = vmatprep.mubr.f32.mxu0 0.0
  %697 = vmatmul.mubr.f32.gmra.mrb[0].mxu0 %v621
  %v698 = vpop.f32.mrb[0].mxu0
  %v699 = vadd.f32 0.0, %v698
  %v700 = vpop.f32.mrb[0].mxu0
  %701 = vmatprep.mubr.f32.mxu0 0.0
  %702 = vmatmul.mubr.f32.gmra.mrb[0].mxu0 %v624
  %v703 = vpop.f32.mrb[0].mxu0
  %v704 = vadd.f32 0.0, %v703
  %v705 = vpop.f32.mrb[0].mxu0
  %706 = vmatprep.mubr.f32.mxu0 0.0
  %707 = vmatmul.mubr.f32.gmra.mrb[0].mxu0 %v627
  %v708 = vpop.f32.mrb[0].mxu0
  %v709 = vadd.f32 0.0, %v708
  %v710 = vpop.f32.mrb[0].mxu0
  %711 = vmatprep.mubr.f32.mxu0 0.0
  %712 = vmatmul.mubr.f32.gmra.mrb[0].mxu0 %v630
  %v713 = vpop.f32.mrb[0].mxu0
  %v714 = vadd.f32 0.0, %v713
  %v715 = vpop.f32.mrb[0].mxu0
  %716 = vdwg.mxu0
  %717 = vrot.lane.b32.xlu0 %v172, 112
  %v718 = vpop.permute.xlu0 %717
  %719 = vrot.lane.b32.xlu0 %v173, 112
  %v720 = vpop.permute.xlu0 %719
  %721 = vrot.lane.b32.xlu0 %v174, 112
  %v722 = vpop.permute.xlu0 %721
  %723 = vrot.lane.b32.xlu0 %v175, 112
  %v724 = vpop.permute.xlu0 %723
  %725 = vrot.lane.b32.xlu0 %v150, 80
  %v726 = vpop.permute.xlu0 %725
  %727 = vrot.lane.b32.xlu0 %v155, 80
  %v728 = vpop.permute.xlu0 %727
  %729 = vrot.lane.b32.xlu0 %v160, 80
  %v730 = vpop.permute.xlu0 %729
  %731 = vrot.lane.b32.xlu0 %v165, 80
  %v732 = vpop.permute.xlu0 %731
  %v733 = vsel %vm188, %v718, 0
  %v735 = vsel %vm188, %v720, 0
  %v737 = vsel %vm188, %v722, 0
  %v739 = vsel %vm188, %v724, 0
  %v741 = vsel %vm188, %v726, 0
  %v743 = vsel %vm188, %v728, 0
  %v745 = vsel %vm188, %v730, 0
  %v747 = vsel %vm188, %v732, 0
  %749 = vmatprep.subr.mxu0 0.0
  %750 = vmatpush1.xpose.msra.mxu0 %v741
  %751 = vmatprep.subr.mxu0 0.0
  %752 = vmatpush1.xpose.msra.mxu0 %v743
  %753 = vmatprep.subr.mxu0 0.0
  %754 = vmatpush1.xpose.msra.mxu0 %v745
  %755 = vmatprep.subr.mxu0 0.0
  %756 = vmatpush1.xpose.msra.mxu0 %v747
  %757 = vmatprep.subr.mxu0 0.0
  %758 = vmatpush1.xpose.msra.mxu0 0.0
  %759 = vmatprep.subr.mxu0 0.0
  %760 = vmatpush1.xpose.msra.mxu0 0.0
  %761 = vmatprep.subr.mxu0 0.0
  %762 = vmatpush1.xpose.msra.mxu0 0.0
  %763 = vmatprep.subr.mxu0 0.0
  %764 = vmatpush1.xpose.msra.mxu0 0.0
  %765 = vmatprep.subr.mxu0 0.0
  %766 = vmatpush1.xpose.msra.mxu0 0.0
  %767 = vmatprep.subr.mxu0 0.0
  %768 = vmatpush1.xpose.msra.mxu0 0.0
  %769 = vmatprep.subr.mxu0 0.0
  %770 = vmatpush1.xpose.msra.mxu0 0.0
  %771 = vmatprep.subr.mxu0 0.0
  %772 = vmatpush1.xpose.msra.mxu0 0.0
  %773 = vmatprep.subr.mxu0 0.0
  %774 = vmatpush1.xpose.msra.mxu0 0.0
  %775 = vmatprep.subr.mxu0 0.0
  %776 = vmatpush1.xpose.msra.mxu0 0.0
  %777 = vmatprep.subr.mxu0 0.0
  %778 = vmatpush1.xpose.msra.mxu0 0.0
  %779 = vmatprep.subr.mxu0 0.0
  %780 = vmatpush1.xpose.msra.mxu0 0.0
  %781 = vmatprep.subr.mxu0 0.0
  %782 = vmatpush1.xpose.msra.mxu0 0.0
  %783 = vmatprep.subr.mxu0 0.0
  %784 = vmatpush1.xpose.msra.mxu0 0.0
  %785 = vmatprep.subr.mxu0 0.0
  %786 = vmatpush1.xpose.msra.mxu0 0.0
  %787 = vmatprep.subr.mxu0 0.0
  %788 = vmatpush1.xpose.msra.mxu0 0.0
  %789 = vmatprep.subr.mxu0 0.0
  %790 = vmatpush1.xpose.msra.mxu0 0.0
  %791 = vmatprep.subr.mxu0 0.0
  %792 = vmatpush1.xpose.msra.mxu0 0.0
  %793 = vmatprep.subr.mxu0 0.0
  %794 = vmatpush1.xpose.msra.mxu0 0.0
  %795 = vmatprep.subr.mxu0 0.0
  %796 = vmatpush1.xpose.msra.mxu0 0.0
  %797 = vmatprep.subr.mxu0 0.0
  %798 = vmatpush1.xpose.msra.mxu0 0.0
  %799 = vmatprep.subr.mxu0 0.0
  %800 = vmatpush1.xpose.msra.mxu0 0.0
  %801 = vmatprep.subr.mxu0 0.0
  %802 = vmatpush1.xpose.msra.mxu0 0.0
  %803 = vmatprep.subr.mxu0 0.0
  %804 = vmatpush1.xpose.msra.mxu0 0.0
  %805 = vmatprep.subr.mxu0 0.0
  %806 = vmatpush1.xpose.msra.mxu0 0.0
  %807 = vmatprep.subr.mxu0 0.0
  %808 = vmatpush1.xpose.msra.mxu0 0.0
  %809 = vmatprep.subr.mxu0 0.0
  %810 = vmatpush1.xpose.msra.mxu0 0.0
  %811 = vmatprep.subr.mxu0 0.0
  %812 = vmatpush1.xpose.msra.mxu0 0.0
  %813 = vmatprep.mubr.f32.mxu0 0.0
  %814 = vmatmul.mubr.f32.gmra.mrb[0].mxu0 %v733
  %v815 = vpop.f32.mrb[0].mxu0
  %v816 = vadd.f32 %v168, %v815
  %v817 = vpop.f32.mrb[0].mxu0
  %818 = vmatprep.mubr.f32.mxu0 0.0
  %819 = vmatmul.mubr.f32.gmra.mrb[0].mxu0 %v735
  %v820 = vpop.f32.mrb[0].mxu0
  %v821 = vadd.f32 %v169, %v820
  %v822 = vpop.f32.mrb[0].mxu0
  %823 = vmatprep.mubr.f32.mxu0 0.0
  %824 = vmatmul.mubr.f32.gmra.mrb[0].mxu0 %v737
  %v825 = vpop.f32.mrb[0].mxu0
  %v826 = vadd.f32 %v170, %v825
  %v827 = vpop.f32.mrb[0].mxu0
  %828 = vmatprep.mubr.f32.mxu0 0.0
  %829 = vmatmul.mubr.f32.gmra.mrb[0].mxu0 %v739
  %v830 = vpop.f32.mrb[0].mxu0
  %v831 = vadd.f32 %v171, %v830
  %v832 = vpop.f32.mrb[0].mxu0
  %833 = vdwg.mxu0
  %v834 = vsel %vm70, %v816, -inf
  %835 = vmax.xlane.f32.xlu0 %v834
  %v836 = vpop.xlane.xlu0 %835
  %v837 = vsel %vm70, %v821, -inf
  %838 = vmax.xlane.f32.xlu0 %v837
  %v839 = vpop.xlane.xlu0 %838
  %v840 = vsel %vm70, %v826, -inf
  %841 = vmax.xlane.f32.xlu0 %v840
  %v842 = vpop.xlane.xlu0 %841
  %v843 = vsel %vm70, %v831, -inf
  %844 = vmax.xlane.f32.xlu0 %v843
  %v845 = vpop.xlane.xlu0 %844
  %v846 = vsub.f32 %v816, %v836
  %v847 = vsub.f32 %v821, %v839
  %v848 = vsub.f32 %v826, %v842
  %v849 = vsub.f32 %v831, %v845
  %v850 = vmul.f32 %v846, 1.442695
  %v851 = vpow.pop %v850
  %v852 = vmul.f32 %v847, 1.442695
  %v853 = vpow.pop %v852
  %v854 = vmul.f32 %v848, 1.442695
  %v855 = vpow.pop %v854
  %v856 = vmul.f32 %v849, 1.442695
  %v857 = vpow.pop %v856
  %v858 = vsel %vm70, %v851, 0.0
  %859 = vadd.xlane.f32.xlu0 %v858
  %v860 = vpop.xlane.xlu0 %859
  %v861 = vsel %vm70, %v853, 0.0
  %862 = vadd.xlane.f32.xlu0 %v861
  %v863 = vpop.xlane.xlu0 %862
  %v864 = vsel %vm70, %v855, 0.0
  %865 = vadd.xlane.f32.xlu0 %v864
  %v866 = vpop.xlane.xlu0 %865
  %v867 = vsel %vm70, %v857, 0.0
  %868 = vadd.xlane.f32.xlu0 %v867
  %v869 = vpop.xlane.xlu0 %868
  %v870 = vrcp.pop %v860
  %v871 = vrcp.pop %v863
  %v872 = vrcp.pop %v866
  %v873 = vrcp.pop %v869
  %v874 = vmul.f32 %v851, %v870
  %v875 = vmul.f32 %v853, %v871
  %v876 = vmul.f32 %v855, %v872
  %v877 = vmul.f32 %v857, %v873
  %878 = vrot.lane.b32.xlu0 %v150, 48
  %v879 = vpop.permute.xlu0 %878
  %880 = vrot.lane.b32.xlu0 %v155, 48
  %v881 = vpop.permute.xlu0 %880
  %882 = vrot.lane.b32.xlu0 %v160, 48
  %v883 = vpop.permute.xlu0 %882
  %884 = vrot.lane.b32.xlu0 %v165, 48
  %v885 = vpop.permute.xlu0 %884
  %v891 = vsel %vm70, %v874, 0
  %v894 = vsel %vm70, %v875, 0
  %v897 = vsel %vm70, %v876, 0
  %v900 = vsel %vm70, %v877, 0
  %902 = vmatprep.subr.mxu0 0.0
  %903 = vmatpush1.msra.mxu0 %v879
  %904 = vmatprep.subr.mxu0 0.0
  %905 = vmatpush1.msra.mxu0 %v881
  %906 = vmatprep.subr.mxu0 0.0
  %907 = vmatpush1.msra.mxu0 %v883
  %908 = vmatprep.subr.mxu0 0.0
  %909 = vmatpush1.msra.mxu0 %v885
  %910 = vmatprep.subr.mxu0 0.0
  %911 = vmatpush1.msra.mxu0 0.0
  %912 = vmatprep.subr.mxu0 0.0
  %913 = vmatpush1.msra.mxu0 0.0
  %914 = vmatprep.subr.mxu0 0.0
  %915 = vmatpush1.msra.mxu0 0.0
  %916 = vmatprep.subr.mxu0 0.0
  %917 = vmatpush1.msra.mxu0 0.0
  %918 = vmatprep.subr.mxu0 0.0
  %919 = vmatpush1.msra.mxu0 0.0
  %920 = vmatprep.subr.mxu0 0.0
  %921 = vmatpush1.msra.mxu0 0.0
  %922 = vmatprep.subr.mxu0 0.0
  %923 = vmatpush1.msra.mxu0 0.0
  %924 = vmatprep.subr.mxu0 0.0
  %925 = vmatpush1.msra.mxu0 0.0
  %926 = vmatprep.subr.mxu0 0.0
  %927 = vmatpush1.msra.mxu0 0.0
  %928 = vmatprep.subr.mxu0 0.0
  %929 = vmatpush1.msra.mxu0 0.0
  %930 = vmatprep.subr.mxu0 0.0
  %931 = vmatpush1.msra.mxu0 0.0
  %932 = vmatprep.subr.mxu0 0.0
  %933 = vmatpush1.msra.mxu0 0.0
  %934 = vmatprep.subr.mxu0 0.0
  %935 = vmatpush1.msra.mxu0 0.0
  %936 = vmatprep.subr.mxu0 0.0
  %937 = vmatpush1.msra.mxu0 0.0
  %938 = vmatprep.subr.mxu0 0.0
  %939 = vmatpush1.msra.mxu0 0.0
  %940 = vmatprep.subr.mxu0 0.0
  %941 = vmatpush1.msra.mxu0 0.0
  %942 = vmatprep.subr.mxu0 0.0
  %943 = vmatpush1.msra.mxu0 0.0
  %944 = vmatprep.subr.mxu0 0.0
  %945 = vmatpush1.msra.mxu0 0.0
  %946 = vmatprep.subr.mxu0 0.0
  %947 = vmatpush1.msra.mxu0 0.0
  %948 = vmatprep.subr.mxu0 0.0
  %949 = vmatpush1.msra.mxu0 0.0
  %950 = vmatprep.subr.mxu0 0.0
  %951 = vmatpush1.msra.mxu0 0.0
  %952 = vmatprep.subr.mxu0 0.0
  %953 = vmatpush1.msra.mxu0 0.0
  %954 = vmatprep.subr.mxu0 0.0
  %955 = vmatpush1.msra.mxu0 0.0
  %956 = vmatprep.subr.mxu0 0.0
  %957 = vmatpush1.msra.mxu0 0.0
  %958 = vmatprep.subr.mxu0 0.0
  %959 = vmatpush1.msra.mxu0 0.0
  %960 = vmatprep.subr.mxu0 0.0
  %961 = vmatpush1.msra.mxu0 0.0
  %962 = vmatprep.subr.mxu0 0.0
  %963 = vmatpush1.msra.mxu0 0.0
  %964 = vmatprep.subr.mxu0 0.0
  %965 = vmatpush1.msra.mxu0 0.0
  %966 = vmatprep.mubr.f32.mxu0 0.0
  %967 = vmatmul.mubr.f32.gmra.mrb[0].mxu0 %v891
  %v968 = vpop.f32.mrb[0].mxu0
  %v969 = vadd.f32 0.0, %v968
  %v970 = vpop.f32.mrb[0].mxu0
  %971 = vmatprep.mubr.f32.mxu0 0.0
  %972 = vmatmul.mubr.f32.gmra.mrb[0].mxu0 %v894
  %v973 = vpop.f32.mrb[0].mxu0
  %v974 = vadd.f32 0.0, %v973
  %v975 = vpop.f32.mrb[0].mxu0
  %976 = vmatprep.mubr.f32.mxu0 0.0
  %977 = vmatmul.mubr.f32.gmra.mrb[0].mxu0 %v897
  %v978 = vpop.f32.mrb[0].mxu0
  %v979 = vadd.f32 0.0, %v978
  %v980 = vpop.f32.mrb[0].mxu0
  %981 = vmatprep.mubr.f32.mxu0 0.0
  %982 = vmatmul.mubr.f32.gmra.mrb[0].mxu0 %v900
  %v983 = vpop.f32.mrb[0].mxu0
  %v984 = vadd.f32 0.0, %v983
  %v985 = vpop.f32.mrb[0].mxu0
  %986 = vdwg.mxu0
  %987 = vrot.lane.b32.xlu0 %v172, 104
  %v988 = vpop.permute.xlu0 %987
  %989 = vrot.lane.b32.xlu0 %v173, 104
  %v990 = vpop.permute.xlu0 %989
  %991 = vrot.lane.b32.xlu0 %v174, 104
  %v992 = vpop.permute.xlu0 %991
  %993 = vrot.lane.b32.xlu0 %v175, 104
  %v994 = vpop.permute.xlu0 %993
  %995 = vrot.lane.b32.xlu0 %v150, 72
  %v996 = vpop.permute.xlu0 %995
  %997 = vrot.lane.b32.xlu0 %v155, 72
  %v998 = vpop.permute.xlu0 %997
  %999 = vrot.lane.b32.xlu0 %v160, 72
  %v1000 = vpop.permute.xlu0 %999
  %1001 = vrot.lane.b32.xlu0 %v165, 72
  %v1002 = vpop.permute.xlu0 %1001
  %v1003 = vsel %vm188, %v988, 0
  %v1005 = vsel %vm188, %v990, 0
  %v1007 = vsel %vm188, %v992, 0
  %v1009 = vsel %vm188, %v994, 0
  %v1011 = vsel %vm188, %v996, 0
  %v1013 = vsel %vm188, %v998, 0
  %v1015 = vsel %vm188, %v1000, 0
  %v1017 = vsel %vm188, %v1002, 0
  %1019 = vmatprep.subr.mxu0 0.0
  %1020 = vmatpush1.xpose.msra.mxu0 %v1011
  %1021 = vmatprep.subr.mxu0 0.0
  %1022 = vmatpush1.xpose.msra.mxu0 %v1013
  %1023 = vmatprep.subr.mxu0 0.0
  %1024 = vmatpush1.xpose.msra.mxu0 %v1015
  %1025 = vmatprep.subr.mxu0 0.0
  %1026 = vmatpush1.xpose.msra.mxu0 %v1017
  %1027 = vmatprep.subr.mxu0 0.0
  %1028 = vmatpush1.xpose.msra.mxu0 0.0
  %1029 = vmatprep.subr.mxu0 0.0
  %1030 = vmatpush1.xpose.msra.mxu0 0.0
  %1031 = vmatprep.subr.mxu0 0.0
  %1032 = vmatpush1.xpose.msra.mxu0 0.0
  %1033 = vmatprep.subr.mxu0 0.0
  %1034 = vmatpush1.xpose.msra.mxu0 0.0
  %1035 = vmatprep.subr.mxu0 0.0
  %1036 = vmatpush1.xpose.msra.mxu0 0.0
  %1037 = vmatprep.subr.mxu0 0.0
  %1038 = vmatpush1.xpose.msra.mxu0 0.0
  %1039 = vmatprep.subr.mxu0 0.0
  %1040 = vmatpush1.xpose.msra.mxu0 0.0
  %1041 = vmatprep.subr.mxu0 0.0
  %1042 = vmatpush1.xpose.msra.mxu0 0.0
  %1043 = vmatprep.subr.mxu0 0.0
  %1044 = vmatpush1.xpose.msra.mxu0 0.0
  %1045 = vmatprep.subr.mxu0 0.0
  %1046 = vmatpush1.xpose.msra.mxu0 0.0
  %1047 = vmatprep.subr.mxu0 0.0
  %1048 = vmatpush1.xpose.msra.mxu0 0.0
  %1049 = vmatprep.subr.mxu0 0.0
  %1050 = vmatpush1.xpose.msra.mxu0 0.0
  %1051 = vmatprep.subr.mxu0 0.0
  %1052 = vmatpush1.xpose.msra.mxu0 0.0
  %1053 = vmatprep.subr.mxu0 0.0
  %1054 = vmatpush1.xpose.msra.mxu0 0.0
  %1055 = vmatprep.subr.mxu0 0.0
  %1056 = vmatpush1.xpose.msra.mxu0 0.0
  %1057 = vmatprep.subr.mxu0 0.0
  %1058 = vmatpush1.xpose.msra.mxu0 0.0
  %1059 = vmatprep.subr.mxu0 0.0
  %1060 = vmatpush1.xpose.msra.mxu0 0.0
  %1061 = vmatprep.subr.mxu0 0.0
  %1062 = vmatpush1.xpose.msra.mxu0 0.0
  %1063 = vmatprep.subr.mxu0 0.0
  %1064 = vmatpush1.xpose.msra.mxu0 0.0
  %1065 = vmatprep.subr.mxu0 0.0
  %1066 = vmatpush1.xpose.msra.mxu0 0.0
  %1067 = vmatprep.subr.mxu0 0.0
  %1068 = vmatpush1.xpose.msra.mxu0 0.0
  %1069 = vmatprep.subr.mxu0 0.0
  %1070 = vmatpush1.xpose.msra.mxu0 0.0
  %1071 = vmatprep.subr.mxu0 0.0
  %1072 = vmatpush1.xpose.msra.mxu0 0.0
  %1073 = vmatprep.subr.mxu0 0.0
  %1074 = vmatpush1.xpose.msra.mxu0 0.0
  %1075 = vmatprep.subr.mxu0 0.0
  %1076 = vmatpush1.xpose.msra.mxu0 0.0
  %1077 = vmatprep.subr.mxu0 0.0
  %1078 = vmatpush1.xpose.msra.mxu0 0.0
  %1079 = vmatprep.subr.mxu0 0.0
  %1080 = vmatpush1.xpose.msra.mxu0 0.0
  %1081 = vmatprep.subr.mxu0 0.0
  %1082 = vmatpush1.xpose.msra.mxu0 0.0
  %1083 = vmatprep.mubr.f32.mxu0 0.0
  %1084 = vmatmul.mubr.f32.gmra.mrb[0].mxu0 %v1003
  %v1085 = vpop.f32.mrb[0].mxu0
  %v1086 = vadd.f32 %v168, %v1085
  %v1087 = vpop.f32.mrb[0].mxu0
  %1088 = vmatprep.mubr.f32.mxu0 0.0
  %1089 = vmatmul.mubr.f32.gmra.mrb[0].mxu0 %v1005
  %v1090 = vpop.f32.mrb[0].mxu0
  %v1091 = vadd.f32 %v169, %v1090
  %v1092 = vpop.f32.mrb[0].mxu0
  %1093 = vmatprep.mubr.f32.mxu0 0.0
  %1094 = vmatmul.mubr.f32.gmra.mrb[0].mxu0 %v1007
  %v1095 = vpop.f32.mrb[0].mxu0
  %v1096 = vadd.f32 %v170, %v1095
  %v1097 = vpop.f32.mrb[0].mxu0
  %1098 = vmatprep.mubr.f32.mxu0 0.0
  %1099 = vmatmul.mubr.f32.gmra.mrb[0].mxu0 %v1009
  %v1100 = vpop.f32.mrb[0].mxu0
  %v1101 = vadd.f32 %v171, %v1100
  %v1102 = vpop.f32.mrb[0].mxu0
  %1103 = vdwg.mxu0
  %v1104 = vsel %vm70, %v1086, -inf
  %1105 = vmax.xlane.f32.xlu0 %v1104
  %v1106 = vpop.xlane.xlu0 %1105
  %v1107 = vsel %vm70, %v1091, -inf
  %1108 = vmax.xlane.f32.xlu0 %v1107
  %v1109 = vpop.xlane.xlu0 %1108
  %v1110 = vsel %vm70, %v1096, -inf
  %1111 = vmax.xlane.f32.xlu0 %v1110
  %v1112 = vpop.xlane.xlu0 %1111
  %v1113 = vsel %vm70, %v1101, -inf
  %1114 = vmax.xlane.f32.xlu0 %v1113
  %v1115 = vpop.xlane.xlu0 %1114
  %v1116 = vsub.f32 %v1086, %v1106
  %v1117 = vsub.f32 %v1091, %v1109
  %v1118 = vsub.f32 %v1096, %v1112
  %v1119 = vsub.f32 %v1101, %v1115
  %v1120 = vmul.f32 %v1116, 1.442695
  %v1121 = vpow.pop %v1120
  %v1122 = vmul.f32 %v1117, 1.442695
  %v1123 = vpow.pop %v1122
  %v1124 = vmul.f32 %v1118, 1.442695
  %v1125 = vpow.pop %v1124
  %v1126 = vmul.f32 %v1119, 1.442695
  %v1127 = vpow.pop %v1126
  %v1128 = vsel %vm70, %v1121, 0.0
  %1129 = vadd.xlane.f32.xlu0 %v1128
  %v1130 = vpop.xlane.xlu0 %1129
  %v1131 = vsel %vm70, %v1123, 0.0
  %1132 = vadd.xlane.f32.xlu0 %v1131
  %v1133 = vpop.xlane.xlu0 %1132
  %v1134 = vsel %vm70, %v1125, 0.0
  %1135 = vadd.xlane.f32.xlu0 %v1134
  %v1136 = vpop.xlane.xlu0 %1135
  %v1137 = vsel %vm70, %v1127, 0.0
  %1138 = vadd.xlane.f32.xlu0 %v1137
  %v1139 = vpop.xlane.xlu0 %1138
  %v1140 = vrcp.pop %v1130
  %v1141 = vrcp.pop %v1133
  %v1142 = vrcp.pop %v1136
  %v1143 = vrcp.pop %v1139
  %v1144 = vmul.f32 %v1121, %v1140
  %v1145 = vmul.f32 %v1123, %v1141
  %v1146 = vmul.f32 %v1125, %v1142
  %v1147 = vmul.f32 %v1127, %v1143
  %1148 = vrot.lane.b32.xlu0 %v150, 40
  %v1149 = vpop.permute.xlu0 %1148
  %1150 = vrot.lane.b32.xlu0 %v155, 40
  %v1151 = vpop.permute.xlu0 %1150
  %1152 = vrot.lane.b32.xlu0 %v160, 40
  %v1153 = vpop.permute.xlu0 %1152
  %1154 = vrot.lane.b32.xlu0 %v165, 40
  %v1155 = vpop.permute.xlu0 %1154
  %v1161 = vsel %vm70, %v1144, 0
  %v1164 = vsel %vm70, %v1145, 0
  %v1167 = vsel %vm70, %v1146, 0
  %v1170 = vsel %vm70, %v1147, 0
  %1172 = vmatprep.subr.mxu0 0.0
  %1173 = vmatpush1.msra.mxu0 %v1149
  %1174 = vmatprep.subr.mxu0 0.0
  %1175 = vmatpush1.msra.mxu0 %v1151
  %1176 = vmatprep.subr.mxu0 0.0
  %1177 = vmatpush1.msra.mxu0 %v1153
  %1178 = vmatprep.subr.mxu0 0.0
  %1179 = vmatpush1.msra.mxu0 %v1155
  %1180 = vmatprep.subr.mxu0 0.0
  %1181 = vmatpush1.msra.mxu0 0.0
  %1182 = vmatprep.subr.mxu0 0.0
  %1183 = vmatpush1.msra.mxu0 0.0
  %1184 = vmatprep.subr.mxu0 0.0
  %1185 = vmatpush1.msra.mxu0 0.0
  %1186 = vmatprep.subr.mxu0 0.0
  %1187 = vmatpush1.msra.mxu0 0.0
  %1188 = vmatprep.subr.mxu0 0.0
  %1189 = vmatpush1.msra.mxu0 0.0
  %1190 = vmatprep.subr.mxu0 0.0
  %1191 = vmatpush1.msra.mxu0 0.0
  %1192 = vmatprep.subr.mxu0 0.0
  %1193 = vmatpush1.msra.mxu0 0.0
  %1194 = vmatprep.subr.mxu0 0.0
  %1195 = vmatpush1.msra.mxu0 0.0
  %1196 = vmatprep.subr.mxu0 0.0
  %1197 = vmatpush1.msra.mxu0 0.0
  %1198 = vmatprep.subr.mxu0 0.0
  %1199 = vmatpush1.msra.mxu0 0.0
  %1200 = vmatprep.subr.mxu0 0.0
  %1201 = vmatpush1.msra.mxu0 0.0
  %1202 = vmatprep.subr.mxu0 0.0
  %1203 = vmatpush1.msra.mxu0 0.0
  %1204 = vmatprep.subr.mxu0 0.0
  %1205 = vmatpush1.msra.mxu0 0.0
  %1206 = vmatprep.subr.mxu0 0.0
  %1207 = vmatpush1.msra.mxu0 0.0
  %1208 = vmatprep.subr.mxu0 0.0
  %1209 = vmatpush1.msra.mxu0 0.0
  %1210 = vmatprep.subr.mxu0 0.0
  %1211 = vmatpush1.msra.mxu0 0.0
  %1212 = vmatprep.subr.mxu0 0.0
  %1213 = vmatpush1.msra.mxu0 0.0
  %1214 = vmatprep.subr.mxu0 0.0
  %1215 = vmatpush1.msra.mxu0 0.0
  %1216 = vmatprep.subr.mxu0 0.0
  %1217 = vmatpush1.msra.mxu0 0.0
  %1218 = vmatprep.subr.mxu0 0.0
  %1219 = vmatpush1.msra.mxu0 0.0
  %1220 = vmatprep.subr.mxu0 0.0
  %1221 = vmatpush1.msra.mxu0 0.0
  %1222 = vmatprep.subr.mxu0 0.0
  %1223 = vmatpush1.msra.mxu0 0.0
  %1224 = vmatprep.subr.mxu0 0.0
  %1225 = vmatpush1.msra.mxu0 0.0
  %1226 = vmatprep.subr.mxu0 0.0
  %1227 = vmatpush1.msra.mxu0 0.0
  %1228 = vmatprep.subr.mxu0 0.0
  %1229 = vmatpush1.msra.mxu0 0.0
  %1230 = vmatprep.subr.mxu0 0.0
  %1231 = vmatpush1.msra.mxu0 0.0
  %1232 = vmatprep.subr.mxu0 0.0
  %1233 = vmatpush1.msra.mxu0 0.0
  %1234 = vmatprep.subr.mxu0 0.0
  %1235 = vmatpush1.msra.mxu0 0.0
  %1236 = vmatprep.mubr.f32.mxu0 0.0
  %1237 = vmatmul.mubr.f32.gmra.mrb[0].mxu0 %v1161
  %v1238 = vpop.f32.mrb[0].mxu0
  %v1239 = vadd.f32 0.0, %v1238
  %v1240 = vpop.f32.mrb[0].mxu0
  %1241 = vmatprep.mubr.f32.mxu0 0.0
  %1242 = vmatmul.mubr.f32.gmra.mrb[0].mxu0 %v1164
  %v1243 = vpop.f32.mrb[0].mxu0
  %v1244 = vadd.f32 0.0, %v1243
  %v1245 = vpop.f32.mrb[0].mxu0
  %1246 = vmatprep.mubr.f32.mxu0 0.0
  %1247 = vmatmul.mubr.f32.gmra.mrb[0].mxu0 %v1167
  %v1248 = vpop.f32.mrb[0].mxu0
  %v1249 = vadd.f32 0.0, %v1248
  %v1250 = vpop.f32.mrb[0].mxu0
  %1251 = vmatprep.mubr.f32.mxu0 0.0
  %1252 = vmatmul.mubr.f32.gmra.mrb[0].mxu0 %v1170
  %v1253 = vpop.f32.mrb[0].mxu0
  %v1254 = vadd.f32 0.0, %v1253
  %v1255 = vpop.f32.mrb[0].mxu0
  %1256 = vdwg.mxu0
  %1261 = vrot.lane.b32.xlu0 %v699, 8
  %v1262 = vpop.permute.xlu0 %1261
  %1263 = vrot.lane.b32.xlu0 %v704, 8
  %v1264 = vpop.permute.xlu0 %1263
  %1265 = vrot.lane.b32.xlu0 %v709, 8
  %v1266 = vpop.permute.xlu0 %1265
  %1267 = vrot.lane.b32.xlu0 %v714, 8
  %v1268 = vpop.permute.xlu0 %1267
  %1277 = vrot.lane.b32.xlu0 %v969, 16
  %v1278 = vpop.permute.xlu0 %1277
  %1279 = vrot.lane.b32.xlu0 %v974, 16
  %v1280 = vpop.permute.xlu0 %1279
  %1281 = vrot.lane.b32.xlu0 %v979, 16
  %v1282 = vpop.permute.xlu0 %1281
  %1283 = vrot.lane.b32.xlu0 %v984, 16
  %v1284 = vpop.permute.xlu0 %1283
  %1293 = vrot.lane.b32.xlu0 %v1239, 24
  %v1294 = vpop.permute.xlu0 %1293
  %1295 = vrot.lane.b32.xlu0 %v1244, 24
  %v1296 = vpop.permute.xlu0 %1295
  %1297 = vrot.lane.b32.xlu0 %v1249, 24
  %v1298 = vpop.permute.xlu0 %1297
  %1299 = vrot.lane.b32.xlu0 %v1254, 24
  %v1300 = vpop.permute.xlu0 %1299
  %v1305 = vsel %vm188, %v429, %v1262
  %v1306 = vsel %vm188, %v434, %v1264
  %v1307 = vsel %vm188, %v439, %v1266
  %v1308 = vsel %vm188, %v444, %v1268
  %vm1309 = vcmask 130048
  %v1310 = vsel %vm1309, %v1305, %v1278
  %v1311 = vsel %vm1309, %v1306, %v1280
  %v1312 = vsel %vm1309, %v1307, %v1282
  %v1313 = vsel %vm1309, %v1308, %v1284
  %vm1314 = vcmask 195584
  %v1315 = vsel %vm1314, %v1310, %v1294
  %v1316 = vsel %vm1314, %v1311, %v1296
  %v1317 = vsel %vm1314, %v1312, %v1298
  %v1318 = vsel %vm1314, %v1313, %v1300
  %v1319 = vld [vmem:[%s5] sm:$0xff]
  %v1320 = vld [vmem:[%s5 + $0x8] sm:$0xff]
  %v1321 = vld [vmem:[%s5 + $0x10] sm:$0xff]
  %v1322 = vld [vmem:[%s5 + $0x18] sm:$0xff]
  %v1323 = vlaneseq
  %v1324 = vshrl.u32 %v1323, 7
  %v1325 = vsub.s32 0, %v1324
  %v1326 = vrot.slane %v58, %v1325
  %v1328 = vsel %vm70, %v1315, 0
  %v1331 = vsel %vm70, %v1316, 0
  %v1334 = vsel %vm70, %v1317, 0
  %v1337 = vsel %vm70, %v1318, 0
  %1339 = vmatprep.subr.mxu0 0.0
  %1340 = vmatpush1.msra.mxu0 %v1319
  %1341 = vmatprep.subr.mxu0 0.0
  %1342 = vmatpush1.msra.mxu0 %v1320
  %1343 = vmatprep.subr.mxu0 0.0
  %1344 = vmatpush1.msra.mxu0 %v1321
  %1345 = vmatprep.subr.mxu0 0.0
  %1346 = vmatpush1.msra.mxu0 %v1322
  %1347 = vmatprep.subr.mxu0 0.0
  %1348 = vmatpush1.msra.mxu0 0.0
  %1349 = vmatprep.subr.mxu0 0.0
  %1350 = vmatpush1.msra.mxu0 0.0
  %1351 = vmatprep.subr.mxu0 0.0
  %1352 = vmatpush1.msra.mxu0 0.0
  %1353 = vmatprep.subr.mxu0 0.0
  %1354 = vmatpush1.msra.mxu0 0.0
  %1355 = vmatprep.subr.mxu0 0.0
  %1356 = vmatpush1.msra.mxu0 0.0
  %1357 = vmatprep.subr.mxu0 0.0
  %1358 = vmatpush1.msra.mxu0 0.0
  %1359 = vmatprep.subr.mxu0 0.0
  %1360 = vmatpush1.msra.mxu0 0.0
  %1361 = vmatprep.subr.mxu0 0.0
  %1362 = vmatpush1.msra.mxu0 0.0
  %1363 = vmatprep.subr.mxu0 0.0
  %1364 = vmatpush1.msra.mxu0 0.0
  %1365 = vmatprep.subr.mxu0 0.0
  %1366 = vmatpush1.msra.mxu0 0.0
  %1367 = vmatprep.subr.mxu0 0.0
  %1368 = vmatpush1.msra.mxu0 0.0
  %1369 = vmatprep.subr.mxu0 0.0
  %1370 = vmatpush1.msra.mxu0 0.0
  %1371 = vmatprep.subr.mxu0 0.0
  %1372 = vmatpush1.msra.mxu0 0.0
  %1373 = vmatprep.subr.mxu0 0.0
  %1374 = vmatpush1.msra.mxu0 0.0
  %1375 = vmatprep.subr.mxu0 0.0
  %1376 = vmatpush1.msra.mxu0 0.0
  %1377 = vmatprep.subr.mxu0 0.0
  %1378 = vmatpush1.msra.mxu0 0.0
  %1379 = vmatprep.subr.mxu0 0.0
  %1380 = vmatpush1.msra.mxu0 0.0
  %1381 = vmatprep.subr.mxu0 0.0
  %1382 = vmatpush1.msra.mxu0 0.0
  %1383 = vmatprep.subr.mxu0 0.0
  %1384 = vmatpush1.msra.mxu0 0.0
  %1385 = vmatprep.subr.mxu0 0.0
  %1386 = vmatpush1.msra.mxu0 0.0
  %1387 = vmatprep.subr.mxu0 0.0
  %1388 = vmatpush1.msra.mxu0 0.0
  %1389 = vmatprep.subr.mxu0 0.0
  %1390 = vmatpush1.msra.mxu0 0.0
  %1391 = vmatprep.subr.mxu0 0.0
  %1392 = vmatpush1.msra.mxu0 0.0
  %1393 = vmatprep.subr.mxu0 0.0
  %1394 = vmatpush1.msra.mxu0 0.0
  %1395 = vmatprep.subr.mxu0 0.0
  %1396 = vmatpush1.msra.mxu0 0.0
  %1397 = vmatprep.subr.mxu0 0.0
  %1398 = vmatpush1.msra.mxu0 0.0
  %1399 = vmatprep.subr.mxu0 0.0
  %1400 = vmatpush1.msra.mxu0 0.0
  %1401 = vmatprep.subr.mxu0 0.0
  %1402 = vmatpush1.msra.mxu0 0.0
  %1403 = vmatprep.mubr.f32.mxu0 0.0
  %1404 = vmatmul.mubr.f32.gmra.mrb[0].mxu0 %v1328
  %v1405 = vpop.f32.mrb[0].mxu0
  %v1406 = vadd.f32 %v1326, %v1405
  %v1407 = vpop.f32.mrb[0].mxu0
  %1408 = vmatprep.mubr.f32.mxu0 0.0
  %1409 = vmatmul.mubr.f32.gmra.mrb[0].mxu0 %v1331
  %v1410 = vpop.f32.mrb[0].mxu0
  %v1411 = vadd.f32 %v1326, %v1410
  %v1412 = vpop.f32.mrb[0].mxu0
  %1413 = vmatprep.mubr.f32.mxu0 0.0
  %1414 = vmatmul.mubr.f32.gmra.mrb[0].mxu0 %v1334
  %v1415 = vpop.f32.mrb[0].mxu0
  %v1416 = vadd.f32 %v1326, %v1415
  %v1417 = vpop.f32.mrb[0].mxu0
  %1418 = vmatprep.mubr.f32.mxu0 0.0
  %1419 = vmatmul.mubr.f32.gmra.mrb[0].mxu0 %v1337
  %v1420 = vpop.f32.mrb[0].mxu0
  %v1421 = vadd.f32 %v1326, %v1420
  %v1422 = vpop.f32.mrb[0].mxu0
  %1423 = vdwg.mxu0
  %v1424 = vadd.f32 %v54, %v1406
  %v1425 = vadd.f32 %v55, %v1411
  %v1426 = vadd.f32 %v56, %v1416
  %v1427 = vadd.f32 %v57, %v1421
  %v1428 = vsel %vm70, %v1424, 0.0
  %1429 = vadd.xlane.f32.xlu0 %v1428
  %v1430 = vpop.xlane.xlu0 %1429
  %v1431 = vsel %vm70, %v1425, 0.0
  %1432 = vadd.xlane.f32.xlu0 %v1431
  %v1433 = vpop.xlane.xlu0 %1432
  %v1434 = vsel %vm70, %v1426, 0.0
  %1435 = vadd.xlane.f32.xlu0 %v1434
  %v1436 = vpop.xlane.xlu0 %1435
  %v1437 = vsel %vm70, %v1427, 0.0
  %1438 = vadd.xlane.f32.xlu0 %v1437
  %v1439 = vpop.xlane.xlu0 %1438
  %v1440 = vrcp.pop 32.0
  %v1441 = vmul.f32 %v1430, %v1440
  %v1442 = vmul.f32 %v1433, %v1440
  %v1443 = vmul.f32 %v1436, %v1440
  %v1444 = vmul.f32 %v1439, %v1440
  %v1445 = vsub.f32 %v1424, %v1441
  %v1446 = vsub.f32 %v1425, %v1442
  %v1447 = vsub.f32 %v1426, %v1443
  %v1448 = vsub.f32 %v1427, %v1444
  %v1449 = vmul.f32 %v1445, %v1445
  %v1450 = vmul.f32 %v1446, %v1446
  %v1451 = vmul.f32 %v1447, %v1447
  %v1452 = vmul.f32 %v1448, %v1448
  %v1453 = vsel %vm70, %v1449, 0.0
  %1454 = vadd.xlane.f32.xlu0 %v1453
  %v1455 = vpop.xlane.xlu0 %1454
  %v1456 = vsel %vm70, %v1450, 0.0
  %1457 = vadd.xlane.f32.xlu0 %v1456
  %v1458 = vpop.xlane.xlu0 %1457
  %v1459 = vsel %vm70, %v1451, 0.0
  %1460 = vadd.xlane.f32.xlu0 %v1459
  %v1461 = vpop.xlane.xlu0 %1460
  %v1462 = vsel %vm70, %v1452, 0.0
  %1463 = vadd.xlane.f32.xlu0 %v1462
  %v1464 = vpop.xlane.xlu0 %1463
  %v1465 = vmul.f32 %v1455, %v1440
  %v1466 = vmul.f32 %v1458, %v1440
  %v1467 = vmul.f32 %v1461, %v1440
  %v1468 = vmul.f32 %v1464, %v1440
  %v1469 = vadd.f32 %v1465, 1e-05
  %v1470 = vadd.f32 %v1466, 1e-05
  %v1471 = vadd.f32 %v1467, 1e-05
  %v1472 = vadd.f32 %v1468, 1e-05
  %v1473 = vrsqrt.pop %v1469
  %v1474 = vmul.f32 %v1469, %v1473
  %vm1475 = vcmp.eq.f32.partialorder %v1469, inf
  %v1476 = vsel %vm1475, %v1469, %v1474
  %vm1477 = vcmp.eq.f32.partialorder %v1469, 0.0
  %v1478 = vand.u32 %v1469, 2147483648
  %v1479 = vsel %vm1477, %v1478, %v1476
  %v1480 = vrsqrt.pop %v1470
  %v1481 = vmul.f32 %v1470, %v1480
  %vm1482 = vcmp.eq.f32.partialorder %v1470, inf
  %v1483 = vsel %vm1482, %v1470, %v1481
  %vm1484 = vcmp.eq.f32.partialorder %v1470, 0.0
  %v1485 = vand.u32 %v1470, 2147483648
  %v1486 = vsel %vm1484, %v1485, %v1483
  %v1487 = vrsqrt.pop %v1471
  %v1488 = vmul.f32 %v1471, %v1487
  %vm1489 = vcmp.eq.f32.partialorder %v1471, inf
  %v1490 = vsel %vm1489, %v1471, %v1488
  %vm1491 = vcmp.eq.f32.partialorder %v1471, 0.0
  %v1492 = vand.u32 %v1471, 2147483648
  %v1493 = vsel %vm1491, %v1492, %v1490
  %v1494 = vrsqrt.pop %v1472
  %v1495 = vmul.f32 %v1472, %v1494
  %vm1496 = vcmp.eq.f32.partialorder %v1472, inf
  %v1497 = vsel %vm1496, %v1472, %v1495
  %vm1498 = vcmp.eq.f32.partialorder %v1472, 0.0
  %v1499 = vand.u32 %v1472, 2147483648
  %v1500 = vsel %vm1498, %v1499, %v1497
  %v1501 = vrcp.pop %v1479
  %v1502 = vmul.f32 %v1445, %v1501
  %v1503 = vrcp.pop %v1486
  %v1504 = vmul.f32 %v1446, %v1503
  %v1505 = vrcp.pop %v1493
  %v1506 = vmul.f32 %v1447, %v1505
  %v1507 = vrcp.pop %v1500
  %v1508 = vmul.f32 %v1448, %v1507
  %v1509 = vlaneseq
  %v1510 = vshrl.u32 %v1509, 7
  %v1511 = vsub.s32 1, %v1510
  %v1512 = vrot.slane %v58, %v1511
  %v1513 = vmul.f32 %v1502, %v1512
  %v1514 = vmul.f32 %v1504, %v1512
  %v1515 = vmul.f32 %v1506, %v1512
  %v1516 = vmul.f32 %v1508, %v1512
  %v1517 = vlaneseq
  %v1518 = vshrl.u32 %v1517, 7
  %v1519 = vsub.s32 2, %v1518
  %v1520 = vrot.slane %v58, %v1519
  %v1521 = vadd.f32 %v1513, %v1520
  %v1522 = vadd.f32 %v1514, %v1520
  %v1523 = vadd.f32 %v1515, %v1520
  %v1524 = vadd.f32 %v1516, %v1520
  %v1525 = vld [vmem:[%s7] sm:$0xff]
  %v1526 = vld [vmem:[%s7 + $0x8] sm:$0xff]
  %v1527 = vld [vmem:[%s7 + $0x10] sm:$0xff]
  %v1528 = vld [vmem:[%s7 + $0x18] sm:$0xff]
  %v1529 = vld [vmem:[%s7 + $0x20] sm:$0xff]
  %v1530 = vld [vmem:[%s7 + $0x28] sm:$0xff]
  %v1531 = vld [vmem:[%s7 + $0x30] sm:$0xff]
  %v1532 = vld [vmem:[%s7 + $0x38] sm:$0xff]
  %v1533 = vld [vmem:[%s7 + $0x40] sm:$0xff]
  %v1534 = vld [vmem:[%s7 + $0x48] sm:$0xff]
  %v1535 = vld [vmem:[%s7 + $0x50] sm:$0xff]
  %v1536 = vld [vmem:[%s7 + $0x58] sm:$0xff]
  %v1537 = vld [vmem:[%s7 + $0x60] sm:$0xff]
  %v1538 = vld [vmem:[%s7 + $0x68] sm:$0xff]
  %v1539 = vld [vmem:[%s7 + $0x70] sm:$0xff]
  %v1540 = vld [vmem:[%s7 + $0x78] sm:$0xff]
  %v1541 = vld [vmem:[%s7 + $0x80] sm:$0xff]
  %v1542 = vld [vmem:[%s7 + $0x88] sm:$0xff]
  %v1543 = vld [vmem:[%s7 + $0x90] sm:$0xff]
  %v1544 = vld [vmem:[%s7 + $0x98] sm:$0xff]
  %v1545 = vld [vmem:[%s7 + $0xa0] sm:$0xff]
  %v1546 = vld [vmem:[%s7 + $0xa8] sm:$0xff]
  %v1547 = vld [vmem:[%s7 + $0xb0] sm:$0xff]
  %v1548 = vld [vmem:[%s7 + $0xb8] sm:$0xff]
  %v1549 = vld [vmem:[%s7 + $0xc0] sm:$0xff]
  %v1550 = vld [vmem:[%s7 + $0xc8] sm:$0xff]
  %v1551 = vld [vmem:[%s7 + $0xd0] sm:$0xff]
  %v1552 = vld [vmem:[%s7 + $0xd8] sm:$0xff]
  %v1553 = vld [vmem:[%s7 + $0xe0] sm:$0xff]
  %v1554 = vld [vmem:[%s7 + $0xe8] sm:$0xff]
  %v1555 = vld [vmem:[%s7 + $0xf0] sm:$0xff]
  %v1556 = vld [vmem:[%s7 + $0xf8] sm:$0xff]
  %v1557 = vld [vmem:[%s7 + $0x100] sm:$0xff]
  %v1558 = vld [vmem:[%s7 + $0x108] sm:$0xff]
  %v1559 = vld [vmem:[%s7 + $0x110] sm:$0xff]
  %v1560 = vld [vmem:[%s7 + $0x118] sm:$0xff]
  %v1561 = vld [vmem:[%s7 + $0x120] sm:$0xff]
  %v1562 = vld [vmem:[%s7 + $0x128] sm:$0xff]
  %v1563 = vld [vmem:[%s7 + $0x130] sm:$0xff]
  %v1564 = vld [vmem:[%s7 + $0x138] sm:$0xff]
  %v1565 = vld [vmem:[%s7 + $0x140] sm:$0xff]
  %v1566 = vld [vmem:[%s7 + $0x148] sm:$0xff]
  %v1567 = vld [vmem:[%s7 + $0x150] sm:$0xff]
  %v1568 = vld [vmem:[%s7 + $0x158] sm:$0xff]
  %v1569 = vld [vmem:[%s7 + $0x160] sm:$0xff]
  %v1570 = vld [vmem:[%s7 + $0x168] sm:$0xff]
  %v1571 = vld [vmem:[%s7 + $0x170] sm:$0xff]
  %v1572 = vld [vmem:[%s7 + $0x178] sm:$0xff]
  %v1573 = vld [vmem:[%s7 + $0x180] sm:$0xff]
  %v1574 = vld [vmem:[%s7 + $0x188] sm:$0xff]
  %v1575 = vld [vmem:[%s7 + $0x190] sm:$0xff]
  %v1576 = vld [vmem:[%s7 + $0x198] sm:$0xff]
  %v1577 = vld [vmem:[%s7 + $0x1a0] sm:$0xff]
  %v1578 = vld [vmem:[%s7 + $0x1a8] sm:$0xff]
  %v1579 = vld [vmem:[%s7 + $0x1b0] sm:$0xff]
  %v1580 = vld [vmem:[%s7 + $0x1b8] sm:$0xff]
  %v1581 = vld [vmem:[%s7 + $0x1c0] sm:$0xff]
  %v1582 = vld [vmem:[%s7 + $0x1c8] sm:$0xff]
  %v1583 = vld [vmem:[%s7 + $0x1d0] sm:$0xff]
  %v1584 = vld [vmem:[%s7 + $0x1d8] sm:$0xff]
  %v1585 = vld [vmem:[%s7 + $0x1e0] sm:$0xff]
  %v1586 = vld [vmem:[%s7 + $0x1e8] sm:$0xff]
  %v1587 = vld [vmem:[%s7 + $0x1f0] sm:$0xff]
  %v1588 = vld [vmem:[%s7 + $0x1f8] sm:$0xff]
  %v1589 = vld [vmem:[%s8] sm:$0xff]
  %v1590 = vld [vmem:[%s8 + $0x8] sm:$0xff]
  %v1593 = vlaneseq
  %v1594 = vshrl.u32 %v1593, 7
  %v1595 = vsub.s32 0, %v1594
  %v1596 = vrot.slane %v1589, %v1595
  %v1597 = vlaneseq
  %v1598 = vshrl.u32 %v1597, 7
  %v1599 = vsub.s32 1, %v1598
  %v1600 = vrot.slane %v1589, %v1599
  %v1601 = vlaneseq
  %v1602 = vshrl.u32 %v1601, 7
  %v1603 = vsub.s32 2, %v1602
  %v1604 = vrot.slane %v1589, %v1603
  %v1605 = vlaneseq
  %v1606 = vshrl.u32 %v1605, 7
  %v1607 = vsub.s32 3, %v1606
  %v1608 = vrot.slane %v1589, %v1607
  %v1609 = vlaneseq
  %v1610 = vshrl.u32 %v1609, 7
  %v1611 = vsub.s32 4, %v1610
  %v1612 = vrot.slane %v1589, %v1611
  %v1613 = vlaneseq
  %v1614 = vshrl.u32 %v1613, 7
  %v1615 = vsub.s32 5, %v1614
  %v1616 = vrot.slane %v1589, %v1615
  %v1617 = vlaneseq
  %v1618 = vshrl.u32 %v1617, 7
  %v1619 = vsub.s32 6, %v1618
  %v1620 = vrot.slane %v1589, %v1619
  %v1621 = vlaneseq
  %v1622 = vshrl.u32 %v1621, 7
  %v1623 = vsub.s32 7, %v1622
  %v1624 = vrot.slane %v1589, %v1623
  %v1625 = vlaneseq
  %v1626 = vshrl.u32 %v1625, 7
  %v1627 = vsub.s32 0, %v1626
  %v1628 = vrot.slane %v1590, %v1627
  %v1629 = vlaneseq
  %v1630 = vshrl.u32 %v1629, 7
  %v1631 = vsub.s32 1, %v1630
  %v1632 = vrot.slane %v1590, %v1631
  %v1633 = vlaneseq
  %v1634 = vshrl.u32 %v1633, 7
  %v1635 = vsub.s32 2, %v1634
  %v1636 = vrot.slane %v1590, %v1635
  %v1637 = vlaneseq
  %v1638 = vshrl.u32 %v1637, 7
  %v1639 = vsub.s32 3, %v1638
  %v1640 = vrot.slane %v1590, %v1639
  %v1641 = vlaneseq
  %v1642 = vshrl.u32 %v1641, 7
  %v1643 = vsub.s32 4, %v1642
  %v1644 = vrot.slane %v1590, %v1643
  %v1645 = vlaneseq
  %v1646 = vshrl.u32 %v1645, 7
  %v1647 = vsub.s32 5, %v1646
  %v1648 = vrot.slane %v1590, %v1647
  %v1649 = vlaneseq
  %v1650 = vshrl.u32 %v1649, 7
  %v1651 = vsub.s32 6, %v1650
  %v1652 = vrot.slane %v1590, %v1651
  %v1653 = vlaneseq
  %v1654 = vshrl.u32 %v1653, 7
  %v1655 = vsub.s32 7, %v1654
  %v1656 = vrot.slane %v1590, %v1655
  %v1674 = vsel %vm70, %v1521, 0
  %v1677 = vsel %vm70, %v1522, 0
  %v1680 = vsel %vm70, %v1523, 0
  %v1683 = vsel %vm70, %v1524, 0
  %1685 = vmatprep.subr.mxu0 %v1526
  %1686 = vmatpush1.msra.mxu0 %v1525
  %1687 = vmatprep.subr.mxu0 %v1542
  %1688 = vmatpush1.msra.mxu0 %v1541
  %1689 = vmatprep.subr.mxu0 %v1558
  %1690 = vmatpush1.msra.mxu0 %v1557
  %1691 = vmatprep.subr.mxu0 %v1574
  %1692 = vmatpush1.msra.mxu0 %v1573
  %1693 = vmatprep.subr.mxu0 0.0
  %1694 = vmatpush1.msra.mxu0 0.0
  %1695 = vmatprep.subr.mxu0 0.0
  %1696 = vmatpush1.msra.mxu0 0.0
  %1697 = vmatprep.subr.mxu0 0.0
  %1698 = vmatpush1.msra.mxu0 0.0
  %1699 = vmatprep.subr.mxu0 0.0
  %1700 = vmatpush1.msra.mxu0 0.0
  %1701 = vmatprep.subr.mxu0 0.0
  %1702 = vmatpush1.msra.mxu0 0.0
  %1703 = vmatprep.subr.mxu0 0.0
  %1704 = vmatpush1.msra.mxu0 0.0
  %1705 = vmatprep.subr.mxu0 0.0
  %1706 = vmatpush1.msra.mxu0 0.0
  %1707 = vmatprep.subr.mxu0 0.0
  %1708 = vmatpush1.msra.mxu0 0.0
  %1709 = vmatprep.subr.mxu0 0.0
  %1710 = vmatpush1.msra.mxu0 0.0
  %1711 = vmatprep.subr.mxu0 0.0
  %1712 = vmatpush1.msra.mxu0 0.0
  %1713 = vmatprep.subr.mxu0 0.0
  %1714 = vmatpush1.msra.mxu0 0.0
  %1715 = vmatprep.subr.mxu0 0.0
  %1716 = vmatpush1.msra.mxu0 0.0
  %1717 = vmatprep.subr.mxu0 0.0
  %1718 = vmatpush1.msra.mxu0 0.0
  %1719 = vmatprep.subr.mxu0 0.0
  %1720 = vmatpush1.msra.mxu0 0.0
  %1721 = vmatprep.subr.mxu0 0.0
  %1722 = vmatpush1.msra.mxu0 0.0
  %1723 = vmatprep.subr.mxu0 0.0
  %1724 = vmatpush1.msra.mxu0 0.0
  %1725 = vmatprep.subr.mxu0 0.0
  %1726 = vmatpush1.msra.mxu0 0.0
  %1727 = vmatprep.subr.mxu0 0.0
  %1728 = vmatpush1.msra.mxu0 0.0
  %1729 = vmatprep.subr.mxu0 0.0
  %1730 = vmatpush1.msra.mxu0 0.0
  %1731 = vmatprep.subr.mxu0 0.0
  %1732 = vmatpush1.msra.mxu0 0.0
  %1733 = vmatprep.subr.mxu0 0.0
  %1734 = vmatpush1.msra.mxu0 0.0
  %1735 = vmatprep.subr.mxu0 0.0
  %1736 = vmatpush1.msra.mxu0 0.0
  %1737 = vmatprep.subr.mxu0 0.0
  %1738 = vmatpush1.msra.mxu0 0.0
  %1739 = vmatprep.subr.mxu0 0.0
  %1740 = vmatpush1.msra.mxu0 0.0
  %1741 = vmatprep.subr.mxu0 0.0
  %1742 = vmatpush1.msra.mxu0 0.0
  %1743 = vmatprep.subr.mxu0 0.0
  %1744 = vmatpush1.msra.mxu0 0.0
  %1745 = vmatprep.subr.mxu0 0.0
  %1746 = vmatpush1.msra.mxu0 0.0
  %1747 = vmatprep.subr.mxu0 0.0
  %1748 = vmatpush1.msra.mxu0 0.0
  %1749 = vmatprep.mubr.f32.mxu0 0.0
  %1750 = vmatmul.mubr.f32.gmra.mrb[0].mxu0 %v1674
  %v1751 = vpop.f32.mrb[0].mxu0
  %v1752 = vadd.f32 %v1596, %v1751
  %v1753 = vpop.f32.mrb[0].mxu0
  %v1754 = vadd.f32 %v1600, %v1753
  %1755 = vmatprep.mubr.f32.mxu0 0.0
  %1756 = vmatmul.mubr.f32.gmra.mrb[0].mxu0 %v1677
  %v1757 = vpop.f32.mrb[0].mxu0
  %v1758 = vadd.f32 %v1596, %v1757
  %v1759 = vpop.f32.mrb[0].mxu0
  %v1760 = vadd.f32 %v1600, %v1759
  %1761 = vmatprep.mubr.f32.mxu0 0.0
  %1762 = vmatmul.mubr.f32.gmra.mrb[0].mxu0 %v1680
  %v1763 = vpop.f32.mrb[0].mxu0
  %v1764 = vadd.f32 %v1596, %v1763
  %v1765 = vpop.f32.mrb[0].mxu0
  %v1766 = vadd.f32 %v1600, %v1765
  %1767 = vmatprep.mubr.f32.mxu0 0.0
  %1768 = vmatmul.mubr.f32.gmra.mrb[0].mxu0 %v1683
  %v1769 = vpop.f32.mrb[0].mxu0
  %v1770 = vadd.f32 %v1596, %v1769
  %v1771 = vpop.f32.mrb[0].mxu0
  %v1772 = vadd.f32 %v1600, %v1771
  %1773 = vdwg.mxu0
  %1774 = vmatprep.subr.mxu0 %v1528
  %1775 = vmatpush1.msra.mxu0 %v1527
  %1776 = vmatprep.subr.mxu0 %v1544
  %1777 = vmatpush1.msra.mxu0 %v1543
  %1778 = vmatprep.subr.mxu0 %v1560
  %1779 = vmatpush1.msra.mxu0 %v1559
  %1780 = vmatprep.subr.mxu0 %v1576
  %1781 = vmatpush1.msra.mxu0 %v1575
  %1782 = vmatprep.subr.mxu0 0.0
  %1783 = vmatpush1.msra.mxu0 0.0
  %1784 = vmatprep.subr.mxu0 0.0
  %1785 = vmatpush1.msra.mxu0 0.0
  %1786 = vmatprep.subr.mxu0 0.0
  %1787 = vmatpush1.msra.mxu0 0.0
  %1788 = vmatprep.subr.mxu0 0.0
  %1789 = vmatpush1.msra.mxu0 0.0
  %1790 = vmatprep.subr.mxu0 0.0
  %1791 = vmatpush1.msra.mxu0 0.0
  %1792 = vmatprep.subr.mxu0 0.0
  %1793 = vmatpush1.msra.mxu0 0.0
  %1794 = vmatprep.subr.mxu0 0.0
  %1795 = vmatpush1.msra.mxu0 0.0
  %1796 = vmatprep.subr.mxu0 0.0
  %1797 = vmatpush1.msra.mxu0 0.0
  %1798 = vmatprep.subr.mxu0 0.0
  %1799 = vmatpush1.msra.mxu0 0.0
  %1800 = vmatprep.subr.mxu0 0.0
  %1801 = vmatpush1.msra.mxu0 0.0
  %1802 = vmatprep.subr.mxu0 0.0
  %1803 = vmatpush1.msra.mxu0 0.0
  %1804 = vmatprep.subr.mxu0 0.0
  %1805 = vmatpush1.msra.mxu0 0.0
  %1806 = vmatprep.subr.mxu0 0.0
  %1807 = vmatpush1.msra.mxu0 0.0
  %1808 = vmatprep.subr.mxu0 0.0
  %1809 = vmatpush1.msra.mxu0 0.0
  %1810 = vmatprep.subr.mxu0 0.0
  %1811 = vmatpush1.msra.mxu0 0.0
  %1812 = vmatprep.subr.mxu0 0.0
  %1813 = vmatpush1.msra.mxu0 0.0
  %1814 = vmatprep.subr.mxu0 0.0
  %1815 = vmatpush1.msra.mxu0 0.0
  %1816 = vmatprep.subr.mxu0 0.0
  %1817 = vmatpush1.msra.mxu0 0.0
  %1818 = vmatprep.subr.mxu0 0.0
  %1819 = vmatpush1.msra.mxu0 0.0
  %1820 = vmatprep.subr.mxu0 0.0
  %1821 = vmatpush1.msra.mxu0 0.0
  %1822 = vmatprep.subr.mxu0 0.0
  %1823 = vmatpush1.msra.mxu0 0.0
  %1824 = vmatprep.subr.mxu0 0.0
  %1825 = vmatpush1.msra.mxu0 0.0
  %1826 = vmatprep.subr.mxu0 0.0
  %1827 = vmatpush1.msra.mxu0 0.0
  %1828 = vmatprep.subr.mxu0 0.0
  %1829 = vmatpush1.msra.mxu0 0.0
  %1830 = vmatprep.subr.mxu0 0.0
  %1831 = vmatpush1.msra.mxu0 0.0
  %1832 = vmatprep.subr.mxu0 0.0
  %1833 = vmatpush1.msra.mxu0 0.0
  %1834 = vmatprep.subr.mxu0 0.0
  %1835 = vmatpush1.msra.mxu0 0.0
  %1836 = vmatprep.subr.mxu0 0.0
  %1837 = vmatpush1.msra.mxu0 0.0
  %1838 = vmatprep.mubr.f32.mxu0 0.0
  %1839 = vmatmul.mubr.f32.gmra.mrb[0].mxu0 %v1674
  %v1840 = vpop.f32.mrb[0].mxu0
  %v1841 = vadd.f32 %v1604, %v1840
  %v1842 = vpop.f32.mrb[0].mxu0
  %v1843 = vadd.f32 %v1608, %v1842
  %1844 = vmatprep.mubr.f32.mxu0 0.0
  %1845 = vmatmul.mubr.f32.gmra.mrb[0].mxu0 %v1677
  %v1846 = vpop.f32.mrb[0].mxu0
  %v1847 = vadd.f32 %v1604, %v1846
  %v1848 = vpop.f32.mrb[0].mxu0
  %v1849 = vadd.f32 %v1608, %v1848
  %1850 = vmatprep.mubr.f32.mxu0 0.0
  %1851 = vmatmul.mubr.f32.gmra.mrb[0].mxu0 %v1680
  %v1852 = vpop.f32.mrb[0].mxu0
  %v1853 = vadd.f32 %v1604, %v1852
  %v1854 = vpop.f32.mrb[0].mxu0
  %v1855 = vadd.f32 %v1608, %v1854
  %1856 = vmatprep.mubr.f32.mxu0 0.0
  %1857 = vmatmul.mubr.f32.gmra.mrb[0].mxu0 %v1683
  %v1858 = vpop.f32.mrb[0].mxu0
  %v1859 = vadd.f32 %v1604, %v1858
  %v1860 = vpop.f32.mrb[0].mxu0
  %v1861 = vadd.f32 %v1608, %v1860
  %1862 = vdwg.mxu0
  %1863 = vmatprep.subr.mxu0 %v1530
  %1864 = vmatpush1.msra.mxu0 %v1529
  %1865 = vmatprep.subr.mxu0 %v1546
  %1866 = vmatpush1.msra.mxu0 %v1545
  %1867 = vmatprep.subr.mxu0 %v1562
  %1868 = vmatpush1.msra.mxu0 %v1561
  %1869 = vmatprep.subr.mxu0 %v1578
  %1870 = vmatpush1.msra.mxu0 %v1577
  %1871 = vmatprep.subr.mxu0 0.0
  %1872 = vmatpush1.msra.mxu0 0.0
  %1873 = vmatprep.subr.mxu0 0.0
  %1874 = vmatpush1.msra.mxu0 0.0
  %1875 = vmatprep.subr.mxu0 0.0
  %1876 = vmatpush1.msra.mxu0 0.0
  %1877 = vmatprep.subr.mxu0 0.0
  %1878 = vmatpush1.msra.mxu0 0.0
  %1879 = vmatprep.subr.mxu0 0.0
  %1880 = vmatpush1.msra.mxu0 0.0
  %1881 = vmatprep.subr.mxu0 0.0
  %1882 = vmatpush1.msra.mxu0 0.0
  %1883 = vmatprep.subr.mxu0 0.0
  %1884 = vmatpush1.msra.mxu0 0.0
  %1885 = vmatprep.subr.mxu0 0.0
  %1886 = vmatpush1.msra.mxu0 0.0
  %1887 = vmatprep.subr.mxu0 0.0
  %1888 = vmatpush1.msra.mxu0 0.0
  %1889 = vmatprep.subr.mxu0 0.0
  %1890 = vmatpush1.msra.mxu0 0.0
  %1891 = vmatprep.subr.mxu0 0.0
  %1892 = vmatpush1.msra.mxu0 0.0
  %1893 = vmatprep.subr.mxu0 0.0
  %1894 = vmatpush1.msra.mxu0 0.0
  %1895 = vmatprep.subr.mxu0 0.0
  %1896 = vmatpush1.msra.mxu0 0.0
  %1897 = vmatprep.subr.mxu0 0.0
  %1898 = vmatpush1.msra.mxu0 0.0
  %1899 = vmatprep.subr.mxu0 0.0
  %1900 = vmatpush1.msra.mxu0 0.0
  %1901 = vmatprep.subr.mxu0 0.0
  %1902 = vmatpush1.msra.mxu0 0.0
  %1903 = vmatprep.subr.mxu0 0.0
  %1904 = vmatpush1.msra.mxu0 0.0
  %1905 = vmatprep.subr.mxu0 0.0
  %1906 = vmatpush1.msra.mxu0 0.0
  %1907 = vmatprep.subr.mxu0 0.0
  %1908 = vmatpush1.msra.mxu0 0.0
  %1909 = vmatprep.subr.mxu0 0.0
  %1910 = vmatpush1.msra.mxu0 0.0
  %1911 = vmatprep.subr.mxu0 0.0
  %1912 = vmatpush1.msra.mxu0 0.0
  %1913 = vmatprep.subr.mxu0 0.0
  %1914 = vmatpush1.msra.mxu0 0.0
  %1915 = vmatprep.subr.mxu0 0.0
  %1916 = vmatpush1.msra.mxu0 0.0
  %1917 = vmatprep.subr.mxu0 0.0
  %1918 = vmatpush1.msra.mxu0 0.0
  %1919 = vmatprep.subr.mxu0 0.0
  %1920 = vmatpush1.msra.mxu0 0.0
  %1921 = vmatprep.subr.mxu0 0.0
  %1922 = vmatpush1.msra.mxu0 0.0
  %1923 = vmatprep.subr.mxu0 0.0
  %1924 = vmatpush1.msra.mxu0 0.0
  %1925 = vmatprep.subr.mxu0 0.0
  %1926 = vmatpush1.msra.mxu0 0.0
  %1927 = vmatprep.mubr.f32.mxu0 0.0
  %1928 = vmatmul.mubr.f32.gmra.mrb[0].mxu0 %v1674
  %v1929 = vpop.f32.mrb[0].mxu0
  %v1930 = vadd.f32 %v1612, %v1929
  %v1931 = vpop.f32.mrb[0].mxu0
  %v1932 = vadd.f32 %v1616, %v1931
  %1933 = vmatprep.mubr.f32.mxu0 0.0
  %1934 = vmatmul.mubr.f32.gmra.mrb[0].mxu0 %v1677
  %v1935 = vpop.f32.mrb[0].mxu0
  %v1936 = vadd.f32 %v1612, %v1935
  %v1937 = vpop.f32.mrb[0].mxu0
  %v1938 = vadd.f32 %v1616, %v1937
  %1939 = vmatprep.mubr.f32.mxu0 0.0
  %1940 = vmatmul.mubr.f32.gmra.mrb[0].mxu0 %v1680
  %v1941 = vpop.f32.mrb[0].mxu0
  %v1942 = vadd.f32 %v1612, %v1941
  %v1943 = vpop.f32.mrb[0].mxu0
  %v1944 = vadd.f32 %v1616, %v1943
  %1945 = vmatprep.mubr.f32.mxu0 0.0
  %1946 = vmatmul.mubr.f32.gmra.mrb[0].mxu0 %v1683
  %v1947 = vpop.f32.mrb[0].mxu0
  %v1948 = vadd.f32 %v1612, %v1947
  %v1949 = vpop.f32.mrb[0].mxu0
  %v1950 = vadd.f32 %v1616, %v1949
  %1951 = vdwg.mxu0
  %1952 = vmatprep.subr.mxu0 %v1532
  %1953 = vmatpush1.msra.mxu0 %v1531
  %1954 = vmatprep.subr.mxu0 %v1548
  %1955 = vmatpush1.msra.mxu0 %v1547
  %1956 = vmatprep.subr.mxu0 %v1564
  %1957 = vmatpush1.msra.mxu0 %v1563
  %1958 = vmatprep.subr.mxu0 %v1580
  %1959 = vmatpush1.msra.mxu0 %v1579
  %1960 = vmatprep.subr.mxu0 0.0
  %1961 = vmatpush1.msra.mxu0 0.0
  %1962 = vmatprep.subr.mxu0 0.0
  %1963 = vmatpush1.msra.mxu0 0.0
  %1964 = vmatprep.subr.mxu0 0.0
  %1965 = vmatpush1.msra.mxu0 0.0
  %1966 = vmatprep.subr.mxu0 0.0
  %1967 = vmatpush1.msra.mxu0 0.0
  %1968 = vmatprep.subr.mxu0 0.0
  %1969 = vmatpush1.msra.mxu0 0.0
  %1970 = vmatprep.subr.mxu0 0.0
  %1971 = vmatpush1.msra.mxu0 0.0
  %1972 = vmatprep.subr.mxu0 0.0
  %1973 = vmatpush1.msra.mxu0 0.0
  %1974 = vmatprep.subr.mxu0 0.0
  %1975 = vmatpush1.msra.mxu0 0.0
  %1976 = vmatprep.subr.mxu0 0.0
  %1977 = vmatpush1.msra.mxu0 0.0
  %1978 = vmatprep.subr.mxu0 0.0
  %1979 = vmatpush1.msra.mxu0 0.0
  %1980 = vmatprep.subr.mxu0 0.0
  %1981 = vmatpush1.msra.mxu0 0.0
  %1982 = vmatprep.subr.mxu0 0.0
  %1983 = vmatpush1.msra.mxu0 0.0
  %1984 = vmatprep.subr.mxu0 0.0
  %1985 = vmatpush1.msra.mxu0 0.0
  %1986 = vmatprep.subr.mxu0 0.0
  %1987 = vmatpush1.msra.mxu0 0.0
  %1988 = vmatprep.subr.mxu0 0.0
  %1989 = vmatpush1.msra.mxu0 0.0
  %1990 = vmatprep.subr.mxu0 0.0
  %1991 = vmatpush1.msra.mxu0 0.0
  %1992 = vmatprep.subr.mxu0 0.0
  %1993 = vmatpush1.msra.mxu0 0.0
  %1994 = vmatprep.subr.mxu0 0.0
  %1995 = vmatpush1.msra.mxu0 0.0
  %1996 = vmatprep.subr.mxu0 0.0
  %1997 = vmatpush1.msra.mxu0 0.0
  %1998 = vmatprep.subr.mxu0 0.0
  %1999 = vmatpush1.msra.mxu0 0.0
  %2000 = vmatprep.subr.mxu0 0.0
  %2001 = vmatpush1.msra.mxu0 0.0
  %2002 = vmatprep.subr.mxu0 0.0
  %2003 = vmatpush1.msra.mxu0 0.0
  %2004 = vmatprep.subr.mxu0 0.0
  %2005 = vmatpush1.msra.mxu0 0.0
  %2006 = vmatprep.subr.mxu0 0.0
  %2007 = vmatpush1.msra.mxu0 0.0
  %2008 = vmatprep.subr.mxu0 0.0
  %2009 = vmatpush1.msra.mxu0 0.0
  %2010 = vmatprep.subr.mxu0 0.0
  %2011 = vmatpush1.msra.mxu0 0.0
  %2012 = vmatprep.subr.mxu0 0.0
  %2013 = vmatpush1.msra.mxu0 0.0
  %2014 = vmatprep.subr.mxu0 0.0
  %2015 = vmatpush1.msra.mxu0 0.0
  %2016 = vmatprep.mubr.f32.mxu0 0.0
  %2017 = vmatmul.mubr.f32.gmra.mrb[0].mxu0 %v1674
  %v2018 = vpop.f32.mrb[0].mxu0
  %v2019 = vadd.f32 %v1620, %v2018
  %v2020 = vpop.f32.mrb[0].mxu0
  %v2021 = vadd.f32 %v1624, %v2020
  %2022 = vmatprep.mubr.f32.mxu0 0.0
  %2023 = vmatmul.mubr.f32.gmra.mrb[0].mxu0 %v1677
  %v2024 = vpop.f32.mrb[0].mxu0
  %v2025 = vadd.f32 %v1620, %v2024
  %v2026 = vpop.f32.mrb[0].mxu0
  %v2027 = vadd.f32 %v1624, %v2026
  %2028 = vmatprep.mubr.f32.mxu0 0.0
  %2029 = vmatmul.mubr.f32.gmra.mrb[0].mxu0 %v1680
  %v2030 = vpop.f32.mrb[0].mxu0
  %v2031 = vadd.f32 %v1620, %v2030
  %v2032 = vpop.f32.mrb[0].mxu0
  %v2033 = vadd.f32 %v1624, %v2032
  %2034 = vmatprep.mubr.f32.mxu0 0.0
  %2035 = vmatmul.mubr.f32.gmra.mrb[0].mxu0 %v1683
  %v2036 = vpop.f32.mrb[0].mxu0
  %v2037 = vadd.f32 %v1620, %v2036
  %v2038 = vpop.f32.mrb[0].mxu0
  %v2039 = vadd.f32 %v1624, %v2038
  %2040 = vdwg.mxu0
  %2041 = vmatprep.subr.mxu0 %v1534
  %2042 = vmatpush1.msra.mxu0 %v1533
  %2043 = vmatprep.subr.mxu0 %v1550
  %2044 = vmatpush1.msra.mxu0 %v1549
  %2045 = vmatprep.subr.mxu0 %v1566
  %2046 = vmatpush1.msra.mxu0 %v1565
  %2047 = vmatprep.subr.mxu0 %v1582
  %2048 = vmatpush1.msra.mxu0 %v1581
  %2049 = vmatprep.subr.mxu0 0.0
  %2050 = vmatpush1.msra.mxu0 0.0
  %2051 = vmatprep.subr.mxu0 0.0
  %2052 = vmatpush1.msra.mxu0 0.0
  %2053 = vmatprep.subr.mxu0 0.0
  %2054 = vmatpush1.msra.mxu0 0.0
  %2055 = vmatprep.subr.mxu0 0.0
  %2056 = vmatpush1.msra.mxu0 0.0
  %2057 = vmatprep.subr.mxu0 0.0
  %2058 = vmatpush1.msra.mxu0 0.0
  %2059 = vmatprep.subr.mxu0 0.0
  %2060 = vmatpush1.msra.mxu0 0.0
  %2061 = vmatprep.subr.mxu0 0.0
  %2062 = vmatpush1.msra.mxu0 0.0
  %2063 = vmatprep.subr.mxu0 0.0
  %2064 = vmatpush1.msra.mxu0 0.0
  %2065 = vmatprep.subr.mxu0 0.0
  %2066 = vmatpush1.msra.mxu0 0.0
  %2067 = vmatprep.subr.mxu0 0.0
  %2068 = vmatpush1.msra.mxu0 0.0
  %2069 = vmatprep.subr.mxu0 0.0
  %2070 = vmatpush1.msra.mxu0 0.0
  %2071 = vmatprep.subr.mxu0 0.0
  %2072 = vmatpush1.msra.mxu0 0.0
  %2073 = vmatprep.subr.mxu0 0.0
  %2074 = vmatpush1.msra.mxu0 0.0
  %2075 = vmatprep.subr.mxu0 0.0
  %2076 = vmatpush1.msra.mxu0 0.0
  %2077 = vmatprep.subr.mxu0 0.0
  %2078 = vmatpush1.msra.mxu0 0.0
  %2079 = vmatprep.subr.mxu0 0.0
  %2080 = vmatpush1.msra.mxu0 0.0
  %2081 = vmatprep.subr.mxu0 0.0
  %2082 = vmatpush1.msra.mxu0 0.0
  %2083 = vmatprep.subr.mxu0 0.0
  %2084 = vmatpush1.msra.mxu0 0.0
  %2085 = vmatprep.subr.mxu0 0.0
  %2086 = vmatpush1.msra.mxu0 0.0
  %2087 = vmatprep.subr.mxu0 0.0
  %2088 = vmatpush1.msra.mxu0 0.0
  %2089 = vmatprep.subr.mxu0 0.0
  %2090 = vmatpush1.msra.mxu0 0.0
  %2091 = vmatprep.subr.mxu0 0.0
  %2092 = vmatpush1.msra.mxu0 0.0
  %2093 = vmatprep.subr.mxu0 0.0
  %2094 = vmatpush1.msra.mxu0 0.0
  %2095 = vmatprep.subr.mxu0 0.0
  %2096 = vmatpush1.msra.mxu0 0.0
  %2097 = vmatprep.subr.mxu0 0.0
  %2098 = vmatpush1.msra.mxu0 0.0
  %2099 = vmatprep.subr.mxu0 0.0
  %2100 = vmatpush1.msra.mxu0 0.0
  %2101 = vmatprep.subr.mxu0 0.0
  %2102 = vmatpush1.msra.mxu0 0.0
  %2103 = vmatprep.subr.mxu0 0.0
  %2104 = vmatpush1.msra.mxu0 0.0
  %2105 = vmatprep.mubr.f32.mxu0 0.0
  %2106 = vmatmul.mubr.f32.gmra.mrb[0].mxu0 %v1674
  %v2107 = vpop.f32.mrb[0].mxu0
  %v2108 = vadd.f32 %v1628, %v2107
  %v2109 = vpop.f32.mrb[0].mxu0
  %v2110 = vadd.f32 %v1632, %v2109
  %2111 = vmatprep.mubr.f32.mxu0 0.0
  %2112 = vmatmul.mubr.f32.gmra.mrb[0].mxu0 %v1677
  %v2113 = vpop.f32.mrb[0].mxu0
  %v2114 = vadd.f32 %v1628, %v2113
  %v2115 = vpop.f32.mrb[0].mxu0
  %v2116 = vadd.f32 %v1632, %v2115
  %2117 = vmatprep.mubr.f32.mxu0 0.0
  %2118 = vmatmul.mubr.f32.gmra.mrb[0].mxu0 %v1680
  %v2119 = vpop.f32.mrb[0].mxu0
  %v2120 = vadd.f32 %v1628, %v2119
  %v2121 = vpop.f32.mrb[0].mxu0
  %v2122 = vadd.f32 %v1632, %v2121
  %2123 = vmatprep.mubr.f32.mxu0 0.0
  %2124 = vmatmul.mubr.f32.gmra.mrb[0].mxu0 %v1683
  %v2125 = vpop.f32.mrb[0].mxu0
  %v2126 = vadd.f32 %v1628, %v2125
  %v2127 = vpop.f32.mrb[0].mxu0
  %v2128 = vadd.f32 %v1632, %v2127
  %2129 = vdwg.mxu0
  %2130 = vmatprep.subr.mxu0 %v1536
  %2131 = vmatpush1.msra.mxu0 %v1535
  %2132 = vmatprep.subr.mxu0 %v1552
  %2133 = vmatpush1.msra.mxu0 %v1551
  %2134 = vmatprep.subr.mxu0 %v1568
  %2135 = vmatpush1.msra.mxu0 %v1567
  %2136 = vmatprep.subr.mxu0 %v1584
  %2137 = vmatpush1.msra.mxu0 %v1583
  %2138 = vmatprep.subr.mxu0 0.0
  %2139 = vmatpush1.msra.mxu0 0.0
  %2140 = vmatprep.subr.mxu0 0.0
  %2141 = vmatpush1.msra.mxu0 0.0
  %2142 = vmatprep.subr.mxu0 0.0
  %2143 = vmatpush1.msra.mxu0 0.0
  %2144 = vmatprep.subr.mxu0 0.0
  %2145 = vmatpush1.msra.mxu0 0.0
  %2146 = vmatprep.subr.mxu0 0.0
  %2147 = vmatpush1.msra.mxu0 0.0
  %2148 = vmatprep.subr.mxu0 0.0
  %2149 = vmatpush1.msra.mxu0 0.0
  %2150 = vmatprep.subr.mxu0 0.0
  %2151 = vmatpush1.msra.mxu0 0.0
  %2152 = vmatprep.subr.mxu0 0.0
  %2153 = vmatpush1.msra.mxu0 0.0
  %2154 = vmatprep.subr.mxu0 0.0
  %2155 = vmatpush1.msra.mxu0 0.0
  %2156 = vmatprep.subr.mxu0 0.0
  %2157 = vmatpush1.msra.mxu0 0.0
  %2158 = vmatprep.subr.mxu0 0.0
  %2159 = vmatpush1.msra.mxu0 0.0
  %2160 = vmatprep.subr.mxu0 0.0
  %2161 = vmatpush1.msra.mxu0 0.0
  %2162 = vmatprep.subr.mxu0 0.0
  %2163 = vmatpush1.msra.mxu0 0.0
  %2164 = vmatprep.subr.mxu0 0.0
  %2165 = vmatpush1.msra.mxu0 0.0
  %2166 = vmatprep.subr.mxu0 0.0
  %2167 = vmatpush1.msra.mxu0 0.0
  %2168 = vmatprep.subr.mxu0 0.0
  %2169 = vmatpush1.msra.mxu0 0.0
  %2170 = vmatprep.subr.mxu0 0.0
  %2171 = vmatpush1.msra.mxu0 0.0
  %2172 = vmatprep.subr.mxu0 0.0
  %2173 = vmatpush1.msra.mxu0 0.0
  %2174 = vmatprep.subr.mxu0 0.0
  %2175 = vmatpush1.msra.mxu0 0.0
  %2176 = vmatprep.subr.mxu0 0.0
  %2177 = vmatpush1.msra.mxu0 0.0
  %2178 = vmatprep.subr.mxu0 0.0
  %2179 = vmatpush1.msra.mxu0 0.0
  %2180 = vmatprep.subr.mxu0 0.0
  %2181 = vmatpush1.msra.mxu0 0.0
  %2182 = vmatprep.subr.mxu0 0.0
  %2183 = vmatpush1.msra.mxu0 0.0
  %2184 = vmatprep.subr.mxu0 0.0
  %2185 = vmatpush1.msra.mxu0 0.0
  %2186 = vmatprep.subr.mxu0 0.0
  %2187 = vmatpush1.msra.mxu0 0.0
  %2188 = vmatprep.subr.mxu0 0.0
  %2189 = vmatpush1.msra.mxu0 0.0
  %2190 = vmatprep.subr.mxu0 0.0
  %2191 = vmatpush1.msra.mxu0 0.0
  %2192 = vmatprep.subr.mxu0 0.0
  %2193 = vmatpush1.msra.mxu0 0.0
  %2194 = vmatprep.mubr.f32.mxu0 0.0
  %2195 = vmatmul.mubr.f32.gmra.mrb[0].mxu0 %v1674
  %v2196 = vpop.f32.mrb[0].mxu0
  %v2197 = vadd.f32 %v1636, %v2196
  %v2198 = vpop.f32.mrb[0].mxu0
  %v2199 = vadd.f32 %v1640, %v2198
  %2200 = vmatprep.mubr.f32.mxu0 0.0
  %2201 = vmatmul.mubr.f32.gmra.mrb[0].mxu0 %v1677
  %v2202 = vpop.f32.mrb[0].mxu0
  %v2203 = vadd.f32 %v1636, %v2202
  %v2204 = vpop.f32.mrb[0].mxu0
  %v2205 = vadd.f32 %v1640, %v2204
  %2206 = vmatprep.mubr.f32.mxu0 0.0
  %2207 = vmatmul.mubr.f32.gmra.mrb[0].mxu0 %v1680
  %v2208 = vpop.f32.mrb[0].mxu0
  %v2209 = vadd.f32 %v1636, %v2208
  %v2210 = vpop.f32.mrb[0].mxu0
  %v2211 = vadd.f32 %v1640, %v2210
  %2212 = vmatprep.mubr.f32.mxu0 0.0
  %2213 = vmatmul.mubr.f32.gmra.mrb[0].mxu0 %v1683
  %v2214 = vpop.f32.mrb[0].mxu0
  %v2215 = vadd.f32 %v1636, %v2214
  %v2216 = vpop.f32.mrb[0].mxu0
  %v2217 = vadd.f32 %v1640, %v2216
  %2218 = vdwg.mxu0
  %2219 = vmatprep.subr.mxu0 %v1538
  %2220 = vmatpush1.msra.mxu0 %v1537
  %2221 = vmatprep.subr.mxu0 %v1554
  %2222 = vmatpush1.msra.mxu0 %v1553
  %2223 = vmatprep.subr.mxu0 %v1570
  %2224 = vmatpush1.msra.mxu0 %v1569
  %2225 = vmatprep.subr.mxu0 %v1586
  %2226 = vmatpush1.msra.mxu0 %v1585
  %2227 = vmatprep.subr.mxu0 0.0
  %2228 = vmatpush1.msra.mxu0 0.0
  %2229 = vmatprep.subr.mxu0 0.0
  %2230 = vmatpush1.msra.mxu0 0.0
  %2231 = vmatprep.subr.mxu0 0.0
  %2232 = vmatpush1.msra.mxu0 0.0
  %2233 = vmatprep.subr.mxu0 0.0
  %2234 = vmatpush1.msra.mxu0 0.0
  %2235 = vmatprep.subr.mxu0 0.0
  %2236 = vmatpush1.msra.mxu0 0.0
  %2237 = vmatprep.subr.mxu0 0.0
  %2238 = vmatpush1.msra.mxu0 0.0
  %2239 = vmatprep.subr.mxu0 0.0
  %2240 = vmatpush1.msra.mxu0 0.0
  %2241 = vmatprep.subr.mxu0 0.0
  %2242 = vmatpush1.msra.mxu0 0.0
  %2243 = vmatprep.subr.mxu0 0.0
  %2244 = vmatpush1.msra.mxu0 0.0
  %2245 = vmatprep.subr.mxu0 0.0
  %2246 = vmatpush1.msra.mxu0 0.0
  %2247 = vmatprep.subr.mxu0 0.0
  %2248 = vmatpush1.msra.mxu0 0.0
  %2249 = vmatprep.subr.mxu0 0.0
  %2250 = vmatpush1.msra.mxu0 0.0
  %2251 = vmatprep.subr.mxu0 0.0
  %2252 = vmatpush1.msra.mxu0 0.0
  %2253 = vmatprep.subr.mxu0 0.0
  %2254 = vmatpush1.msra.mxu0 0.0
  %2255 = vmatprep.subr.mxu0 0.0
  %2256 = vmatpush1.msra.mxu0 0.0
  %2257 = vmatprep.subr.mxu0 0.0
  %2258 = vmatpush1.msra.mxu0 0.0
  %2259 = vmatprep.subr.mxu0 0.0
  %2260 = vmatpush1.msra.mxu0 0.0
  %2261 = vmatprep.subr.mxu0 0.0
  %2262 = vmatpush1.msra.mxu0 0.0
  %2263 = vmatprep.subr.mxu0 0.0
  %2264 = vmatpush1.msra.mxu0 0.0
  %2265 = vmatprep.subr.mxu0 0.0
  %2266 = vmatpush1.msra.mxu0 0.0
  %2267 = vmatprep.subr.mxu0 0.0
  %2268 = vmatpush1.msra.mxu0 0.0
  %2269 = vmatprep.subr.mxu0 0.0
  %2270 = vmatpush1.msra.mxu0 0.0
  %2271 = vmatprep.subr.mxu0 0.0
  %2272 = vmatpush1.msra.mxu0 0.0
  %2273 = vmatprep.subr.mxu0 0.0
  %2274 = vmatpush1.msra.mxu0 0.0
  %2275 = vmatprep.subr.mxu0 0.0
  %2276 = vmatpush1.msra.mxu0 0.0
  %2277 = vmatprep.subr.mxu0 0.0
  %2278 = vmatpush1.msra.mxu0 0.0
  %2279 = vmatprep.subr.mxu0 0.0
  %2280 = vmatpush1.msra.mxu0 0.0
  %2281 = vmatprep.subr.mxu0 0.0
  %2282 = vmatpush1.msra.mxu0 0.0
  %2283 = vmatprep.mubr.f32.mxu0 0.0
  %2284 = vmatmul.mubr.f32.gmra.mrb[0].mxu0 %v1674
  %v2285 = vpop.f32.mrb[0].mxu0
  %v2286 = vadd.f32 %v1644, %v2285
  %v2287 = vpop.f32.mrb[0].mxu0
  %v2288 = vadd.f32 %v1648, %v2287
  %2289 = vmatprep.mubr.f32.mxu0 0.0
  %2290 = vmatmul.mubr.f32.gmra.mrb[0].mxu0 %v1677
  %v2291 = vpop.f32.mrb[0].mxu0
  %v2292 = vadd.f32 %v1644, %v2291
  %v2293 = vpop.f32.mrb[0].mxu0
  %v2294 = vadd.f32 %v1648, %v2293
  %2295 = vmatprep.mubr.f32.mxu0 0.0
  %2296 = vmatmul.mubr.f32.gmra.mrb[0].mxu0 %v1680
  %v2297 = vpop.f32.mrb[0].mxu0
  %v2298 = vadd.f32 %v1644, %v2297
  %v2299 = vpop.f32.mrb[0].mxu0
  %v2300 = vadd.f32 %v1648, %v2299
  %2301 = vmatprep.mubr.f32.mxu0 0.0
  %2302 = vmatmul.mubr.f32.gmra.mrb[0].mxu0 %v1683
  %v2303 = vpop.f32.mrb[0].mxu0
  %v2304 = vadd.f32 %v1644, %v2303
  %v2305 = vpop.f32.mrb[0].mxu0
  %v2306 = vadd.f32 %v1648, %v2305
  %2307 = vdwg.mxu0
  %2308 = vmatprep.subr.mxu0 %v1540
  %2309 = vmatpush1.msra.mxu0 %v1539
  %2310 = vmatprep.subr.mxu0 %v1556
  %2311 = vmatpush1.msra.mxu0 %v1555
  %2312 = vmatprep.subr.mxu0 %v1572
  %2313 = vmatpush1.msra.mxu0 %v1571
  %2314 = vmatprep.subr.mxu0 %v1588
  %2315 = vmatpush1.msra.mxu0 %v1587
  %2316 = vmatprep.subr.mxu0 0.0
  %2317 = vmatpush1.msra.mxu0 0.0
  %2318 = vmatprep.subr.mxu0 0.0
  %2319 = vmatpush1.msra.mxu0 0.0
  %2320 = vmatprep.subr.mxu0 0.0
  %2321 = vmatpush1.msra.mxu0 0.0
  %2322 = vmatprep.subr.mxu0 0.0
  %2323 = vmatpush1.msra.mxu0 0.0
  %2324 = vmatprep.subr.mxu0 0.0
  %2325 = vmatpush1.msra.mxu0 0.0
  %2326 = vmatprep.subr.mxu0 0.0
  %2327 = vmatpush1.msra.mxu0 0.0
  %2328 = vmatprep.subr.mxu0 0.0
  %2329 = vmatpush1.msra.mxu0 0.0
  %2330 = vmatprep.subr.mxu0 0.0
  %2331 = vmatpush1.msra.mxu0 0.0
  %2332 = vmatprep.subr.mxu0 0.0
  %2333 = vmatpush1.msra.mxu0 0.0
  %2334 = vmatprep.subr.mxu0 0.0
  %2335 = vmatpush1.msra.mxu0 0.0
  %2336 = vmatprep.subr.mxu0 0.0
  %2337 = vmatpush1.msra.mxu0 0.0
  %2338 = vmatprep.subr.mxu0 0.0
  %2339 = vmatpush1.msra.mxu0 0.0
  %2340 = vmatprep.subr.mxu0 0.0
  %2341 = vmatpush1.msra.mxu0 0.0
  %2342 = vmatprep.subr.mxu0 0.0
  %2343 = vmatpush1.msra.mxu0 0.0
  %2344 = vmatprep.subr.mxu0 0.0
  %2345 = vmatpush1.msra.mxu0 0.0
  %2346 = vmatprep.subr.mxu0 0.0
  %2347 = vmatpush1.msra.mxu0 0.0
  %2348 = vmatprep.subr.mxu0 0.0
  %2349 = vmatpush1.msra.mxu0 0.0
  %2350 = vmatprep.subr.mxu0 0.0
  %2351 = vmatpush1.msra.mxu0 0.0
  %2352 = vmatprep.subr.mxu0 0.0
  %2353 = vmatpush1.msra.mxu0 0.0
  %2354 = vmatprep.subr.mxu0 0.0
  %2355 = vmatpush1.msra.mxu0 0.0
  %2356 = vmatprep.subr.mxu0 0.0
  %2357 = vmatpush1.msra.mxu0 0.0
  %2358 = vmatprep.subr.mxu0 0.0
  %2359 = vmatpush1.msra.mxu0 0.0
  %2360 = vmatprep.subr.mxu0 0.0
  %2361 = vmatpush1.msra.mxu0 0.0
  %2362 = vmatprep.subr.mxu0 0.0
  %2363 = vmatpush1.msra.mxu0 0.0
  %2364 = vmatprep.subr.mxu0 0.0
  %2365 = vmatpush1.msra.mxu0 0.0
  %2366 = vmatprep.subr.mxu0 0.0
  %2367 = vmatpush1.msra.mxu0 0.0
  %2368 = vmatprep.subr.mxu0 0.0
  %2369 = vmatpush1.msra.mxu0 0.0
  %2370 = vmatprep.subr.mxu0 0.0
  %2371 = vmatpush1.msra.mxu0 0.0
  %2372 = vmatprep.mubr.f32.mxu0 0.0
  %2373 = vmatmul.mubr.f32.gmra.mrb[0].mxu0 %v1674
  %v2374 = vpop.f32.mrb[0].mxu0
  %v2375 = vadd.f32 %v1652, %v2374
  %v2376 = vpop.f32.mrb[0].mxu0
  %v2377 = vadd.f32 %v1656, %v2376
  %2378 = vmatprep.mubr.f32.mxu0 0.0
  %2379 = vmatmul.mubr.f32.gmra.mrb[0].mxu0 %v1677
  %v2380 = vpop.f32.mrb[0].mxu0
  %v2381 = vadd.f32 %v1652, %v2380
  %v2382 = vpop.f32.mrb[0].mxu0
  %v2383 = vadd.f32 %v1656, %v2382
  %2384 = vmatprep.mubr.f32.mxu0 0.0
  %2385 = vmatmul.mubr.f32.gmra.mrb[0].mxu0 %v1680
  %v2386 = vpop.f32.mrb[0].mxu0
  %v2387 = vadd.f32 %v1652, %v2386
  %v2388 = vpop.f32.mrb[0].mxu0
  %v2389 = vadd.f32 %v1656, %v2388
  %2390 = vmatprep.mubr.f32.mxu0 0.0
  %2391 = vmatmul.mubr.f32.gmra.mrb[0].mxu0 %v1683
  %v2392 = vpop.f32.mrb[0].mxu0
  %v2393 = vadd.f32 %v1652, %v2392
  %v2394 = vpop.f32.mrb[0].mxu0
  %v2395 = vadd.f32 %v1656, %v2394
  %2396 = vdwg.mxu0
  %v2397 = vmax.f32 %v1752, 0.0
  %v2398 = vmax.f32 %v1754, 0.0
  %v2399 = vmax.f32 %v1841, 0.0
  %v2400 = vmax.f32 %v1843, 0.0
  %v2401 = vmax.f32 %v1930, 0.0
  %v2402 = vmax.f32 %v1932, 0.0
  %v2403 = vmax.f32 %v2019, 0.0
  %v2404 = vmax.f32 %v2021, 0.0
  %v2405 = vmax.f32 %v2108, 0.0
  %v2406 = vmax.f32 %v2110, 0.0
  %v2407 = vmax.f32 %v2197, 0.0
  %v2408 = vmax.f32 %v2199, 0.0
  %v2409 = vmax.f32 %v2286, 0.0
  %v2410 = vmax.f32 %v2288, 0.0
  %v2411 = vmax.f32 %v2375, 0.0
  %v2412 = vmax.f32 %v2377, 0.0
  %v2413 = vmax.f32 %v1758, 0.0
  %v2414 = vmax.f32 %v1760, 0.0
  %v2415 = vmax.f32 %v1847, 0.0
  %v2416 = vmax.f32 %v1849, 0.0
  %v2417 = vmax.f32 %v1936, 0.0
  %v2418 = vmax.f32 %v1938, 0.0
  %v2419 = vmax.f32 %v2025, 0.0
  %v2420 = vmax.f32 %v2027, 0.0
  %v2421 = vmax.f32 %v2114, 0.0
  %v2422 = vmax.f32 %v2116, 0.0
  %v2423 = vmax.f32 %v2203, 0.0
  %v2424 = vmax.f32 %v2205, 0.0
  %v2425 = vmax.f32 %v2292, 0.0
  %v2426 = vmax.f32 %v2294, 0.0
  %v2427 = vmax.f32 %v2381, 0.0
  %v2428 = vmax.f32 %v2383, 0.0
  %v2429 = vmax.f32 %v1764, 0.0
  %v2430 = vmax.f32 %v1766, 0.0
  %v2431 = vmax.f32 %v1853, 0.0
  %v2432 = vmax.f32 %v1855, 0.0
  %v2433 = vmax.f32 %v1942, 0.0
  %v2434 = vmax.f32 %v1944, 0.0
  %v2435 = vmax.f32 %v2031, 0.0
  %v2436 = vmax.f32 %v2033, 0.0
  %v2437 = vmax.f32 %v2120, 0.0
  %v2438 = vmax.f32 %v2122, 0.0
  %v2439 = vmax.f32 %v2209, 0.0
  %v2440 = vmax.f32 %v2211, 0.0
  %v2441 = vmax.f32 %v2298, 0.0
  %v2442 = vmax.f32 %v2300, 0.0
  %v2443 = vmax.f32 %v2387, 0.0
  %v2444 = vmax.f32 %v2389, 0.0
  %v2445 = vmax.f32 %v1770, 0.0
  %v2446 = vmax.f32 %v1772, 0.0
  %v2447 = vmax.f32 %v1859, 0.0
  %v2448 = vmax.f32 %v1861, 0.0
  %v2449 = vmax.f32 %v1948, 0.0
  %v2450 = vmax.f32 %v1950, 0.0
  %v2451 = vmax.f32 %v2037, 0.0
  %v2452 = vmax.f32 %v2039, 0.0
  %v2453 = vmax.f32 %v2126, 0.0
  %v2454 = vmax.f32 %v2128, 0.0
  %v2455 = vmax.f32 %v2215, 0.0
  %v2456 = vmax.f32 %v2217, 0.0
  %v2457 = vmax.f32 %v2304, 0.0
  %v2458 = vmax.f32 %v2306, 0.0
  %v2459 = vmax.f32 %v2393, 0.0
  %v2460 = vmax.f32 %v2395, 0.0
  %v2461 = vld [vmem:[%s9] sm:$0xff]
  %v2462 = vld [vmem:[%s9 + $0x8] sm:$0xff]
  %v2463 = vld [vmem:[%s9 + $0x10] sm:$0xff]
  %v2464 = vld [vmem:[%s9 + $0x18] sm:$0xff]
  %v2465 = vld [vmem:[%s9 + $0x20] sm:$0xff]
  %v2466 = vld [vmem:[%s9 + $0x28] sm:$0xff]
  %v2467 = vld [vmem:[%s9 + $0x30] sm:$0xff]
  %v2468 = vld [vmem:[%s9 + $0x38] sm:$0xff]
  %v2469 = vld [vmem:[%s9 + $0x40] sm:$0xff]
  %v2470 = vld [vmem:[%s9 + $0x48] sm:$0xff]
  %v2471 = vld [vmem:[%s9 + $0x50] sm:$0xff]
  %v2472 = vld [vmem:[%s9 + $0x58] sm:$0xff]
  %v2473 = vld [vmem:[%s9 + $0x60] sm:$0xff]
  %v2474 = vld [vmem:[%s9 + $0x68] sm:$0xff]
  %v2475 = vld [vmem:[%s9 + $0x70] sm:$0xff]
  %v2476 = vld [vmem:[%s9 + $0x78] sm:$0xff]
  %v2477 = vld [vmem:[%s9 + $0x80] sm:$0xff]
  %v2478 = vld [vmem:[%s9 + $0x88] sm:$0xff]
  %v2479 = vld [vmem:[%s9 + $0x90] sm:$0xff]
  %v2480 = vld [vmem:[%s9 + $0x98] sm:$0xff]
  %v2481 = vld [vmem:[%s9 + $0xa0] sm:$0xff]
  %v2482 = vld [vmem:[%s9 + $0xa8] sm:$0xff]
  %v2483 = vld [vmem:[%s9 + $0xb0] sm:$0xff]
  %v2484 = vld [vmem:[%s9 + $0xb8] sm:$0xff]
  %v2485 = vld [vmem:[%s9 + $0xc0] sm:$0xff]
  %v2486 = vld [vmem:[%s9 + $0xc8] sm:$0xff]
  %v2487 = vld [vmem:[%s9 + $0xd0] sm:$0xff]
  %v2488 = vld [vmem:[%s9 + $0xd8] sm:$0xff]
  %v2489 = vld [vmem:[%s9 + $0xe0] sm:$0xff]
  %v2490 = vld [vmem:[%s9 + $0xe8] sm:$0xff]
  %v2491 = vld [vmem:[%s9 + $0xf0] sm:$0xff]
  %v2492 = vld [vmem:[%s9 + $0xf8] sm:$0xff]
  %v2493 = vld [vmem:[%s9 + $0x100] sm:$0xff]
  %v2494 = vld [vmem:[%s9 + $0x108] sm:$0xff]
  %v2495 = vld [vmem:[%s9 + $0x110] sm:$0xff]
  %v2496 = vld [vmem:[%s9 + $0x118] sm:$0xff]
  %v2497 = vld [vmem:[%s9 + $0x120] sm:$0xff]
  %v2498 = vld [vmem:[%s9 + $0x128] sm:$0xff]
  %v2499 = vld [vmem:[%s9 + $0x130] sm:$0xff]
  %v2500 = vld [vmem:[%s9 + $0x138] sm:$0xff]
  %v2501 = vld [vmem:[%s9 + $0x140] sm:$0xff]
  %v2502 = vld [vmem:[%s9 + $0x148] sm:$0xff]
  %v2503 = vld [vmem:[%s9 + $0x150] sm:$0xff]
  %v2504 = vld [vmem:[%s9 + $0x158] sm:$0xff]
  %v2505 = vld [vmem:[%s9 + $0x160] sm:$0xff]
  %v2506 = vld [vmem:[%s9 + $0x168] sm:$0xff]
  %v2507 = vld [vmem:[%s9 + $0x170] sm:$0xff]
  %v2508 = vld [vmem:[%s9 + $0x178] sm:$0xff]
  %v2509 = vld [vmem:[%s9 + $0x180] sm:$0xff]
  %v2510 = vld [vmem:[%s9 + $0x188] sm:$0xff]
  %v2511 = vld [vmem:[%s9 + $0x190] sm:$0xff]
  %v2512 = vld [vmem:[%s9 + $0x198] sm:$0xff]
  %v2513 = vld [vmem:[%s9 + $0x1a0] sm:$0xff]
  %v2514 = vld [vmem:[%s9 + $0x1a8] sm:$0xff]
  %v2515 = vld [vmem:[%s9 + $0x1b0] sm:$0xff]
  %v2516 = vld [vmem:[%s9 + $0x1b8] sm:$0xff]
  %v2517 = vld [vmem:[%s9 + $0x1c0] sm:$0xff]
  %v2518 = vld [vmem:[%s9 + $0x1c8] sm:$0xff]
  %v2519 = vld [vmem:[%s9 + $0x1d0] sm:$0xff]
  %v2520 = vld [vmem:[%s9 + $0x1d8] sm:$0xff]
  %v2521 = vld [vmem:[%s9 + $0x1e0] sm:$0xff]
  %v2522 = vld [vmem:[%s9 + $0x1e8] sm:$0xff]
  %v2523 = vld [vmem:[%s9 + $0x1f0] sm:$0xff]
  %v2524 = vld [vmem:[%s9 + $0x1f8] sm:$0xff]
  %v2525 = vlaneseq
  %v2526 = vshrl.u32 %v2525, 7
  %v2527 = vsub.s32 3, %v2526
  %v2528 = vrot.slane %v58, %v2527
  %2529 = vmatprep.subr.mxu0 %v2462
  %2530 = vmatpush1.xpose.msra.mxu0 %v2461
  %2531 = vmatprep.subr.mxu0 %v2478
  %2532 = vmatpush1.xpose.msra.mxu0 %v2477
  %2533 = vmatprep.subr.mxu0 %v2494
  %2534 = vmatpush1.xpose.msra.mxu0 %v2493
  %2535 = vmatprep.subr.mxu0 %v2510
  %2536 = vmatpush1.xpose.msra.mxu0 %v2509
  %2537 = vmatprep.subr.mxu0 0.0
  %2538 = vmatpush1.xpose.msra.mxu0 0.0
  %2539 = vmatprep.subr.mxu0 0.0
  %2540 = vmatpush1.xpose.msra.mxu0 0.0
  %2541 = vmatprep.subr.mxu0 0.0
  %2542 = vmatpush1.xpose.msra.mxu0 0.0
  %2543 = vmatprep.subr.mxu0 0.0
  %2544 = vmatpush1.xpose.msra.mxu0 0.0
  %2545 = vmatprep.subr.mxu0 0.0
  %2546 = vmatpush1.xpose.msra.mxu0 0.0
  %2547 = vmatprep.subr.mxu0 0.0
  %2548 = vmatpush1.xpose.msra.mxu0 0.0
  %2549 = vmatprep.subr.mxu0 0.0
  %2550 = vmatpush1.xpose.msra.mxu0 0.0
  %2551 = vmatprep.subr.mxu0 0.0
  %2552 = vmatpush1.xpose.msra.mxu0 0.0
  %2553 = vmatprep.subr.mxu0 0.0
  %2554 = vmatpush1.xpose.msra.mxu0 0.0
  %2555 = vmatprep.subr.mxu0 0.0
  %2556 = vmatpush1.xpose.msra.mxu0 0.0
  %2557 = vmatprep.subr.mxu0 0.0
  %2558 = vmatpush1.xpose.msra.mxu0 0.0
  %2559 = vmatprep.subr.mxu0 0.0
  %2560 = vmatpush1.xpose.msra.mxu0 0.0
  %2561 = vmatprep.subr.mxu0 0.0
  %2562 = vmatpush1.xpose.msra.mxu0 0.0
  %2563 = vmatprep.subr.mxu0 0.0
  %2564 = vmatpush1.xpose.msra.mxu0 0.0
  %2565 = vmatprep.subr.mxu0 0.0
  %2566 = vmatpush1.xpose.msra.mxu0 0.0
  %2567 = vmatprep.subr.mxu0 0.0
  %2568 = vmatpush1.xpose.msra.mxu0 0.0
  %2569 = vmatprep.subr.mxu0 0.0
  %2570 = vmatpush1.xpose.msra.mxu0 0.0
  %2571 = vmatprep.subr.mxu0 0.0
  %2572 = vmatpush1.xpose.msra.mxu0 0.0
  %2573 = vmatprep.subr.mxu0 0.0
  %2574 = vmatpush1.xpose.msra.mxu0 0.0
  %2575 = vmatprep.subr.mxu0 0.0
  %2576 = vmatpush1.xpose.msra.mxu0 0.0
  %2577 = vmatprep.subr.mxu0 0.0
  %2578 = vmatpush1.xpose.msra.mxu0 0.0
  %2579 = vmatprep.subr.mxu0 0.0
  %2580 = vmatpush1.xpose.msra.mxu0 0.0
  %2581 = vmatprep.subr.mxu0 0.0
  %2582 = vmatpush1.xpose.msra.mxu0 0.0
  %2583 = vmatprep.subr.mxu0 0.0
  %2584 = vmatpush1.xpose.msra.mxu0 0.0
  %2585 = vmatprep.subr.mxu0 0.0
  %2586 = vmatpush1.xpose.msra.mxu0 0.0
  %2587 = vmatprep.subr.mxu0 0.0
  %2588 = vmatpush1.xpose.msra.mxu0 0.0
  %2589 = vmatprep.subr.mxu0 0.0
  %2590 = vmatpush1.xpose.msra.mxu0 0.0
  %2591 = vmatprep.subr.mxu0 0.0
  %2592 = vmatpush1.xpose.msra.mxu0 0.0
  %2593 = vmatprep.mubr.f32.mxu0 %v2398
  %2594 = vmatmul.mubr.f32.gmra.mrb[0].mxu0 %v2397
  %v2595 = vpop.f32.mrb[0].mxu0
  %v2596 = vadd.f32 %v2528, %v2595
  %v2597 = vpop.f32.mrb[0].mxu0
  %2598 = vmatprep.mubr.f32.mxu0 %v2414
  %2599 = vmatmul.mubr.f32.gmra.mrb[0].mxu0 %v2413
  %v2600 = vpop.f32.mrb[0].mxu0
  %v2601 = vadd.f32 %v2528, %v2600
  %v2602 = vpop.f32.mrb[0].mxu0
  %2603 = vmatprep.mubr.f32.mxu0 %v2430
  %2604 = vmatmul.mubr.f32.gmra.mrb[0].mxu0 %v2429
  %v2605 = vpop.f32.mrb[0].mxu0
  %v2606 = vadd.f32 %v2528, %v2605
  %v2607 = vpop.f32.mrb[0].mxu0
  %2608 = vmatprep.mubr.f32.mxu0 %v2446
  %2609 = vmatmul.mubr.f32.gmra.mrb[0].mxu0 %v2445
  %v2610 = vpop.f32.mrb[0].mxu0
  %v2611 = vadd.f32 %v2528, %v2610
  %v2612 = vpop.f32.mrb[0].mxu0
  %2613 = vdwg.mxu0
  %2614 = vmatprep.subr.mxu0 %v2464
  %2615 = vmatpush1.xpose.msra.mxu0 %v2463
  %2616 = vmatprep.subr.mxu0 %v2480
  %2617 = vmatpush1.xpose.msra.mxu0 %v2479
  %2618 = vmatprep.subr.mxu0 %v2496
  %2619 = vmatpush1.xpose.msra.mxu0 %v2495
  %2620 = vmatprep.subr.mxu0 %v2512
  %2621 = vmatpush1.xpose.msra.mxu0 %v2511
  %2622 = vmatprep.subr.mxu0 0.0
  %2623 = vmatpush1.xpose.msra.mxu0 0.0
  %2624 = vmatprep.subr.mxu0 0.0
  %2625 = vmatpush1.xpose.msra.mxu0 0.0
  %2626 = vmatprep.subr.mxu0 0.0
  %2627 = vmatpush1.xpose.msra.mxu0 0.0
  %2628 = vmatprep.subr.mxu0 0.0
  %2629 = vmatpush1.xpose.msra.mxu0 0.0
  %2630 = vmatprep.subr.mxu0 0.0
  %2631 = vmatpush1.xpose.msra.mxu0 0.0
  %2632 = vmatprep.subr.mxu0 0.0
  %2633 = vmatpush1.xpose.msra.mxu0 0.0
  %2634 = vmatprep.subr.mxu0 0.0
  %2635 = vmatpush1.xpose.msra.mxu0 0.0
  %2636 = vmatprep.subr.mxu0 0.0
  %2637 = vmatpush1.xpose.msra.mxu0 0.0
  %2638 = vmatprep.subr.mxu0 0.0
  %2639 = vmatpush1.xpose.msra.mxu0 0.0
  %2640 = vmatprep.subr.mxu0 0.0
  %2641 = vmatpush1.xpose.msra.mxu0 0.0
  %2642 = vmatprep.subr.mxu0 0.0
  %2643 = vmatpush1.xpose.msra.mxu0 0.0
  %2644 = vmatprep.subr.mxu0 0.0
  %2645 = vmatpush1.xpose.msra.mxu0 0.0
  %2646 = vmatprep.subr.mxu0 0.0
  %2647 = vmatpush1.xpose.msra.mxu0 0.0
  %2648 = vmatprep.subr.mxu0 0.0
  %2649 = vmatpush1.xpose.msra.mxu0 0.0
  %2650 = vmatprep.subr.mxu0 0.0
  %2651 = vmatpush1.xpose.msra.mxu0 0.0
  %2652 = vmatprep.subr.mxu0 0.0
  %2653 = vmatpush1.xpose.msra.mxu0 0.0
  %2654 = vmatprep.subr.mxu0 0.0
  %2655 = vmatpush1.xpose.msra.mxu0 0.0
  %2656 = vmatprep.subr.mxu0 0.0
  %2657 = vmatpush1.xpose.msra.mxu0 0.0
  %2658 = vmatprep.subr.mxu0 0.0
  %2659 = vmatpush1.xpose.msra.mxu0 0.0
  %2660 = vmatprep.subr.mxu0 0.0
  %2661 = vmatpush1.xpose.msra.mxu0 0.0
  %2662 = vmatprep.subr.mxu0 0.0
  %2663 = vmatpush1.xpose.msra.mxu0 0.0
  %2664 = vmatprep.subr.mxu0 0.0
  %2665 = vmatpush1.xpose.msra.mxu0 0.0
  %2666 = vmatprep.subr.mxu0 0.0
  %2667 = vmatpush1.xpose.msra.mxu0 0.0
  %2668 = vmatprep.subr.mxu0 0.0
  %2669 = vmatpush1.xpose.msra.mxu0 0.0
  %2670 = vmatprep.subr.mxu0 0.0
  %2671 = vmatpush1.xpose.msra.mxu0 0.0
  %2672 = vmatprep.subr.mxu0 0.0
  %2673 = vmatpush1.xpose.msra.mxu0 0.0
  %2674 = vmatprep.subr.mxu0 0.0
  %2675 = vmatpush1.xpose.msra.mxu0 0.0
  %2676 = vmatprep.subr.mxu0 0.0
  %2677 = vmatpush1.xpose.msra.mxu0 0.0
  %2678 = vmatprep.mubr.f32.mxu0 %v2400
  %2679 = vmatmul.mubr.f32.gmra.mrb[0].mxu0 %v2399
  %v2680 = vpop.f32.mrb[0].mxu0
  %v2681 = vadd.f32 %v2596, %v2680
  %v2682 = vpop.f32.mrb[0].mxu0
  %2683 = vmatprep.mubr.f32.mxu0 %v2416
  %2684 = vmatmul.mubr.f32.gmra.mrb[0].mxu0 %v2415
  %v2685 = vpop.f32.mrb[0].mxu0
  %v2686 = vadd.f32 %v2601, %v2685
  %v2687 = vpop.f32.mrb[0].mxu0
  %2688 = vmatprep.mubr.f32.mxu0 %v2432
  %2689 = vmatmul.mubr.f32.gmra.mrb[0].mxu0 %v2431
  %v2690 = vpop.f32.mrb[0].mxu0
  %v2691 = vadd.f32 %v2606, %v2690
  %v2692 = vpop.f32.mrb[0].mxu0
  %2693 = vmatprep.mubr.f32.mxu0 %v2448
  %2694 = vmatmul.mubr.f32.gmra.mrb[0].mxu0 %v2447
  %v2695 = vpop.f32.mrb[0].mxu0
  %v2696 = vadd.f32 %v2611, %v2695
  %v2697 = vpop.f32.mrb[0].mxu0
  %2698 = vdwg.mxu0
  %2699 = vmatprep.subr.mxu0 %v2466
  %2700 = vmatpush1.xpose.msra.mxu0 %v2465
  %2701 = vmatprep.subr.mxu0 %v2482
  %2702 = vmatpush1.xpose.msra.mxu0 %v2481
  %2703 = vmatprep.subr.mxu0 %v2498
  %2704 = vmatpush1.xpose.msra.mxu0 %v2497
  %2705 = vmatprep.subr.mxu0 %v2514
  %2706 = vmatpush1.xpose.msra.mxu0 %v2513
  %2707 = vmatprep.subr.mxu0 0.0
  %2708 = vmatpush1.xpose.msra.mxu0 0.0
  %2709 = vmatprep.subr.mxu0 0.0
  %2710 = vmatpush1.xpose.msra.mxu0 0.0
  %2711 = vmatprep.subr.mxu0 0.0
  %2712 = vmatpush1.xpose.msra.mxu0 0.0
  %2713 = vmatprep.subr.mxu0 0.0
  %2714 = vmatpush1.xpose.msra.mxu0 0.0
  %2715 = vmatprep.subr.mxu0 0.0
  %2716 = vmatpush1.xpose.msra.mxu0 0.0
  %2717 = vmatprep.subr.mxu0 0.0
  %2718 = vmatpush1.xpose.msra.mxu0 0.0
  %2719 = vmatprep.subr.mxu0 0.0
  %2720 = vmatpush1.xpose.msra.mxu0 0.0
  %2721 = vmatprep.subr.mxu0 0.0
  %2722 = vmatpush1.xpose.msra.mxu0 0.0
  %2723 = vmatprep.subr.mxu0 0.0
  %2724 = vmatpush1.xpose.msra.mxu0 0.0
  %2725 = vmatprep.subr.mxu0 0.0
  %2726 = vmatpush1.xpose.msra.mxu0 0.0
  %2727 = vmatprep.subr.mxu0 0.0
  %2728 = vmatpush1.xpose.msra.mxu0 0.0
  %2729 = vmatprep.subr.mxu0 0.0
  %2730 = vmatpush1.xpose.msra.mxu0 0.0
  %2731 = vmatprep.subr.mxu0 0.0
  %2732 = vmatpush1.xpose.msra.mxu0 0.0
  %2733 = vmatprep.subr.mxu0 0.0
  %2734 = vmatpush1.xpose.msra.mxu0 0.0
  %2735 = vmatprep.subr.mxu0 0.0
  %2736 = vmatpush1.xpose.msra.mxu0 0.0
  %2737 = vmatprep.subr.mxu0 0.0
  %2738 = vmatpush1.xpose.msra.mxu0 0.0
  %2739 = vmatprep.subr.mxu0 0.0
  %2740 = vmatpush1.xpose.msra.mxu0 0.0
  %2741 = vmatprep.subr.mxu0 0.0
  %2742 = vmatpush1.xpose.msra.mxu0 0.0
  %2743 = vmatprep.subr.mxu0 0.0
  %2744 = vmatpush1.xpose.msra.mxu0 0.0
  %2745 = vmatprep.subr.mxu0 0.0
  %2746 = vmatpush1.xpose.msra.mxu0 0.0
  %2747 = vmatprep.subr.mxu0 0.0
  %2748 = vmatpush1.xpose.msra.mxu0 0.0
  %2749 = vmatprep.subr.mxu0 0.0
  %2750 = vmatpush1.xpose.msra.mxu0 0.0
  %2751 = vmatprep.subr.mxu0 0.0
  %2752 = vmatpush1.xpose.msra.mxu0 0.0
  %2753 = vmatprep.subr.mxu0 0.0
  %2754 = vmatpush1.xpose.msra.mxu0 0.0
  %2755 = vmatprep.subr.mxu0 0.0
  %2756 = vmatpush1.xpose.msra.mxu0 0.0
  %2757 = vmatprep.subr.mxu0 0.0
  %2758 = vmatpush1.xpose.msra.mxu0 0.0
  %2759 = vmatprep.subr.mxu0 0.0
  %2760 = vmatpush1.xpose.msra.mxu0 0.0
  %2761 = vmatprep.subr.mxu0 0.0
  %2762 = vmatpush1.xpose.msra.mxu0 0.0
  %2763 = vmatprep.mubr.f32.mxu0 %v2402
  %2764 = vmatmul.mubr.f32.gmra.mrb[0].mxu0 %v2401
  %v2765 = vpop.f32.mrb[0].mxu0
  %v2766 = vadd.f32 %v2681, %v2765
  %v2767 = vpop.f32.mrb[0].mxu0
  %2768 = vmatprep.mubr.f32.mxu0 %v2418
  %2769 = vmatmul.mubr.f32.gmra.mrb[0].mxu0 %v2417
  %v2770 = vpop.f32.mrb[0].mxu0
  %v2771 = vadd.f32 %v2686, %v2770
  %v2772 = vpop.f32.mrb[0].mxu0
  %2773 = vmatprep.mubr.f32.mxu0 %v2434
  %2774 = vmatmul.mubr.f32.gmra.mrb[0].mxu0 %v2433
  %v2775 = vpop.f32.mrb[0].mxu0
  %v2776 = vadd.f32 %v2691, %v2775
  %v2777 = vpop.f32.mrb[0].mxu0
  %2778 = vmatprep.mubr.f32.mxu0 %v2450
  %2779 = vmatmul.mubr.f32.gmra.mrb[0].mxu0 %v2449
  %v2780 = vpop.f32.mrb[0].mxu0
  %v2781 = vadd.f32 %v2696, %v2780
  %v2782 = vpop.f32.mrb[0].mxu0
  %2783 = vdwg.mxu0
  %2784 = vmatprep.subr.mxu0 %v2468
  %2785 = vmatpush1.xpose.msra.mxu0 %v2467
  %2786 = vmatprep.subr.mxu0 %v2484
  %2787 = vmatpush1.xpose.msra.mxu0 %v2483
  %2788 = vmatprep.subr.mxu0 %v2500
  %2789 = vmatpush1.xpose.msra.mxu0 %v2499
  %2790 = vmatprep.subr.mxu0 %v2516
  %2791 = vmatpush1.xpose.msra.mxu0 %v2515
  %2792 = vmatprep.subr.mxu0 0.0
  %2793 = vmatpush1.xpose.msra.mxu0 0.0
  %2794 = vmatprep.subr.mxu0 0.0
  %2795 = vmatpush1.xpose.msra.mxu0 0.0
  %2796 = vmatprep.subr.mxu0 0.0
  %2797 = vmatpush1.xpose.msra.mxu0 0.0
  %2798 = vmatprep.subr.mxu0 0.0
  %2799 = vmatpush1.xpose.msra.mxu0 0.0
  %2800 = vmatprep.subr.mxu0 0.0
  %2801 = vmatpush1.xpose.msra.mxu0 0.0
  %2802 = vmatprep.subr.mxu0 0.0
  %2803 = vmatpush1.xpose.msra.mxu0 0.0
  %2804 = vmatprep.subr.mxu0 0.0
  %2805 = vmatpush1.xpose.msra.mxu0 0.0
  %2806 = vmatprep.subr.mxu0 0.0
  %2807 = vmatpush1.xpose.msra.mxu0 0.0
  %2808 = vmatprep.subr.mxu0 0.0
  %2809 = vmatpush1.xpose.msra.mxu0 0.0
  %2810 = vmatprep.subr.mxu0 0.0
  %2811 = vmatpush1.xpose.msra.mxu0 0.0
  %2812 = vmatprep.subr.mxu0 0.0
  %2813 = vmatpush1.xpose.msra.mxu0 0.0
  %2814 = vmatprep.subr.mxu0 0.0
  %2815 = vmatpush1.xpose.msra.mxu0 0.0
  %2816 = vmatprep.subr.mxu0 0.0
  %2817 = vmatpush1.xpose.msra.mxu0 0.0
  %2818 = vmatprep.subr.mxu0 0.0
  %2819 = vmatpush1.xpose.msra.mxu0 0.0
  %2820 = vmatprep.subr.mxu0 0.0
  %2821 = vmatpush1.xpose.msra.mxu0 0.0
  %2822 = vmatprep.subr.mxu0 0.0
  %2823 = vmatpush1.xpose.msra.mxu0 0.0
  %2824 = vmatprep.subr.mxu0 0.0
  %2825 = vmatpush1.xpose.msra.mxu0 0.0
  %2826 = vmatprep.subr.mxu0 0.0
  %2827 = vmatpush1.xpose.msra.mxu0 0.0
  %2828 = vmatprep.subr.mxu0 0.0
  %2829 = vmatpush1.xpose.msra.mxu0 0.0
  %2830 = vmatprep.subr.mxu0 0.0
  %2831 = vmatpush1.xpose.msra.mxu0 0.0
  %2832 = vmatprep.subr.mxu0 0.0
  %2833 = vmatpush1.xpose.msra.mxu0 0.0
  %2834 = vmatprep.subr.mxu0 0.0
  %2835 = vmatpush1.xpose.msra.mxu0 0.0
  %2836 = vmatprep.subr.mxu0 0.0
  %2837 = vmatpush1.xpose.msra.mxu0 0.0
  %2838 = vmatprep.subr.mxu0 0.0
  %2839 = vmatpush1.xpose.msra.mxu0 0.0
  %2840 = vmatprep.subr.mxu0 0.0
  %2841 = vmatpush1.xpose.msra.mxu0 0.0
  %2842 = vmatprep.subr.mxu0 0.0
  %2843 = vmatpush1.xpose.msra.mxu0 0.0
  %2844 = vmatprep.subr.mxu0 0.0
  %2845 = vmatpush1.xpose.msra.mxu0 0.0
  %2846 = vmatprep.subr.mxu0 0.0
  %2847 = vmatpush1.xpose.msra.mxu0 0.0
  %2848 = vmatprep.mubr.f32.mxu0 %v2404
  %2849 = vmatmul.mubr.f32.gmra.mrb[0].mxu0 %v2403
  %v2850 = vpop.f32.mrb[0].mxu0
  %v2851 = vadd.f32 %v2766, %v2850
  %v2852 = vpop.f32.mrb[0].mxu0
  %2853 = vmatprep.mubr.f32.mxu0 %v2420
  %2854 = vmatmul.mubr.f32.gmra.mrb[0].mxu0 %v2419
  %v2855 = vpop.f32.mrb[0].mxu0
  %v2856 = vadd.f32 %v2771, %v2855
  %v2857 = vpop.f32.mrb[0].mxu0
  %2858 = vmatprep.mubr.f32.mxu0 %v2436
  %2859 = vmatmul.mubr.f32.gmra.mrb[0].mxu0 %v2435
  %v2860 = vpop.f32.mrb[0].mxu0
  %v2861 = vadd.f32 %v2776, %v2860
  %v2862 = vpop.f32.mrb[0].mxu0
  %2863 = vmatprep.mubr.f32.mxu0 %v2452
  %2864 = vmatmul.mubr.f32.gmra.mrb[0].mxu0 %v2451
  %v2865 = vpop.f32.mrb[0].mxu0
  %v2866 = vadd.f32 %v2781, %v2865
  %v2867 = vpop.f32.mrb[0].mxu0
  %2868 = vdwg.mxu0
  %2869 = vmatprep.subr.mxu0 %v2470
  %2870 = vmatpush1.xpose.msra.mxu0 %v2469
  %2871 = vmatprep.subr.mxu0 %v2486
  %2872 = vmatpush1.xpose.msra.mxu0 %v2485
  %2873 = vmatprep.subr.mxu0 %v2502
  %2874 = vmatpush1.xpose.msra.mxu0 %v2501
  %2875 = vmatprep.subr.mxu0 %v2518
  %2876 = vmatpush1.xpose.msra.mxu0 %v2517
  %2877 = vmatprep.subr.mxu0 0.0
  %2878 = vmatpush1.xpose.msra.mxu0 0.0
  %2879 = vmatprep.subr.mxu0 0.0
  %2880 = vmatpush1.xpose.msra.mxu0 0.0
  %2881 = vmatprep.subr.mxu0 0.0
  %2882 = vmatpush1.xpose.msra.mxu0 0.0
  %2883 = vmatprep.subr.mxu0 0.0
  %2884 = vmatpush1.xpose.msra.mxu0 0.0
  %2885 = vmatprep.subr.mxu0 0.0
  %2886 = vmatpush1.xpose.msra.mxu0 0.0
  %2887 = vmatprep.subr.mxu0 0.0
  %2888 = vmatpush1.xpose.msra.mxu0 0.0
  %2889 = vmatprep.subr.mxu0 0.0
  %2890 = vmatpush1.xpose.msra.mxu0 0.0
  %2891 = vmatprep.subr.mxu0 0.0
  %2892 = vmatpush1.xpose.msra.mxu0 0.0
  %2893 = vmatprep.subr.mxu0 0.0
  %2894 = vmatpush1.xpose.msra.mxu0 0.0
  %2895 = vmatprep.subr.mxu0 0.0
  %2896 = vmatpush1.xpose.msra.mxu0 0.0
  %2897 = vmatprep.subr.mxu0 0.0
  %2898 = vmatpush1.xpose.msra.mxu0 0.0
  %2899 = vmatprep.subr.mxu0 0.0
  %2900 = vmatpush1.xpose.msra.mxu0 0.0
  %2901 = vmatprep.subr.mxu0 0.0
  %2902 = vmatpush1.xpose.msra.mxu0 0.0
  %2903 = vmatprep.subr.mxu0 0.0
  %2904 = vmatpush1.xpose.msra.mxu0 0.0
  %2905 = vmatprep.subr.mxu0 0.0
  %2906 = vmatpush1.xpose.msra.mxu0 0.0
  %2907 = vmatprep.subr.mxu0 0.0
  %2908 = vmatpush1.xpose.msra.mxu0 0.0
  %2909 = vmatprep.subr.mxu0 0.0
  %2910 = vmatpush1.xpose.msra.mxu0 0.0
  %2911 = vmatprep.subr.mxu0 0.0
  %2912 = vmatpush1.xpose.msra.mxu0 0.0
  %2913 = vmatprep.subr.mxu0 0.0
  %2914 = vmatpush1.xpose.msra.mxu0 0.0
  %2915 = vmatprep.subr.mxu0 0.0
  %2916 = vmatpush1.xpose.msra.mxu0 0.0
  %2917 = vmatprep.subr.mxu0 0.0
  %2918 = vmatpush1.xpose.msra.mxu0 0.0
  %2919 = vmatprep.subr.mxu0 0.0
  %2920 = vmatpush1.xpose.msra.mxu0 0.0
  %2921 = vmatprep.subr.mxu0 0.0
  %2922 = vmatpush1.xpose.msra.mxu0 0.0
  %2923 = vmatprep.subr.mxu0 0.0
  %2924 = vmatpush1.xpose.msra.mxu0 0.0
  %2925 = vmatprep.subr.mxu0 0.0
  %2926 = vmatpush1.xpose.msra.mxu0 0.0
  %2927 = vmatprep.subr.mxu0 0.0
  %2928 = vmatpush1.xpose.msra.mxu0 0.0
  %2929 = vmatprep.subr.mxu0 0.0
  %2930 = vmatpush1.xpose.msra.mxu0 0.0
  %2931 = vmatprep.subr.mxu0 0.0
  %2932 = vmatpush1.xpose.msra.mxu0 0.0
  %2933 = vmatprep.mubr.f32.mxu0 %v2406
  %2934 = vmatmul.mubr.f32.gmra.mrb[0].mxu0 %v2405
  %v2935 = vpop.f32.mrb[0].mxu0
  %v2936 = vadd.f32 %v2851, %v2935
  %v2937 = vpop.f32.mrb[0].mxu0
  %2938 = vmatprep.mubr.f32.mxu0 %v2422
  %2939 = vmatmul.mubr.f32.gmra.mrb[0].mxu0 %v2421
  %v2940 = vpop.f32.mrb[0].mxu0
  %v2941 = vadd.f32 %v2856, %v2940
  %v2942 = vpop.f32.mrb[0].mxu0
  %2943 = vmatprep.mubr.f32.mxu0 %v2438
  %2944 = vmatmul.mubr.f32.gmra.mrb[0].mxu0 %v2437
  %v2945 = vpop.f32.mrb[0].mxu0
  %v2946 = vadd.f32 %v2861, %v2945
  %v2947 = vpop.f32.mrb[0].mxu0
  %2948 = vmatprep.mubr.f32.mxu0 %v2454
  %2949 = vmatmul.mubr.f32.gmra.mrb[0].mxu0 %v2453
  %v2950 = vpop.f32.mrb[0].mxu0
  %v2951 = vadd.f32 %v2866, %v2950
  %v2952 = vpop.f32.mrb[0].mxu0
  %2953 = vdwg.mxu0
  %2954 = vmatprep.subr.mxu0 %v2472
  %2955 = vmatpush1.xpose.msra.mxu0 %v2471
  %2956 = vmatprep.subr.mxu0 %v2488
  %2957 = vmatpush1.xpose.msra.mxu0 %v2487
  %2958 = vmatprep.subr.mxu0 %v2504
  %2959 = vmatpush1.xpose.msra.mxu0 %v2503
  %2960 = vmatprep.subr.mxu0 %v2520
  %2961 = vmatpush1.xpose.msra.mxu0 %v2519
  %2962 = vmatprep.subr.mxu0 0.0
  %2963 = vmatpush1.xpose.msra.mxu0 0.0
  %2964 = vmatprep.subr.mxu0 0.0
  %2965 = vmatpush1.xpose.msra.mxu0 0.0
  %2966 = vmatprep.subr.mxu0 0.0
  %2967 = vmatpush1.xpose.msra.mxu0 0.0
  %2968 = vmatprep.subr.mxu0 0.0
  %2969 = vmatpush1.xpose.msra.mxu0 0.0
  %2970 = vmatprep.subr.mxu0 0.0
  %2971 = vmatpush1.xpose.msra.mxu0 0.0
  %2972 = vmatprep.subr.mxu0 0.0
  %2973 = vmatpush1.xpose.msra.mxu0 0.0
  %2974 = vmatprep.subr.mxu0 0.0
  %2975 = vmatpush1.xpose.msra.mxu0 0.0
  %2976 = vmatprep.subr.mxu0 0.0
  %2977 = vmatpush1.xpose.msra.mxu0 0.0
  %2978 = vmatprep.subr.mxu0 0.0
  %2979 = vmatpush1.xpose.msra.mxu0 0.0
  %2980 = vmatprep.subr.mxu0 0.0
  %2981 = vmatpush1.xpose.msra.mxu0 0.0
  %2982 = vmatprep.subr.mxu0 0.0
  %2983 = vmatpush1.xpose.msra.mxu0 0.0
  %2984 = vmatprep.subr.mxu0 0.0
  %2985 = vmatpush1.xpose.msra.mxu0 0.0
  %2986 = vmatprep.subr.mxu0 0.0
  %2987 = vmatpush1.xpose.msra.mxu0 0.0
  %2988 = vmatprep.subr.mxu0 0.0
  %2989 = vmatpush1.xpose.msra.mxu0 0.0
  %2990 = vmatprep.subr.mxu0 0.0
  %2991 = vmatpush1.xpose.msra.mxu0 0.0
  %2992 = vmatprep.subr.mxu0 0.0
  %2993 = vmatpush1.xpose.msra.mxu0 0.0
  %2994 = vmatprep.subr.mxu0 0.0
  %2995 = vmatpush1.xpose.msra.mxu0 0.0
  %2996 = vmatprep.subr.mxu0 0.0
  %2997 = vmatpush1.xpose.msra.mxu0 0.0
  %2998 = vmatprep.subr.mxu0 0.0
  %2999 = vmatpush1.xpose.msra.mxu0 0.0
  %3000 = vmatprep.subr.mxu0 0.0
  %3001 = vmatpush1.xpose.msra.mxu0 0.0
  %3002 = vmatprep.subr.mxu0 0.0
  %3003 = vmatpush1.xpose.msra.mxu0 0.0
  %3004 = vmatprep.subr.mxu0 0.0
  %3005 = vmatpush1.xpose.msra.mxu0 0.0
  %3006 = vmatprep.subr.mxu0 0.0
  %3007 = vmatpush1.xpose.msra.mxu0 0.0
  %3008 = vmatprep.subr.mxu0 0.0
  %3009 = vmatpush1.xpose.msra.mxu0 0.0
  %3010 = vmatprep.subr.mxu0 0.0
  %3011 = vmatpush1.xpose.msra.mxu0 0.0
  %3012 = vmatprep.subr.mxu0 0.0
  %3013 = vmatpush1.xpose.msra.mxu0 0.0
  %3014 = vmatprep.subr.mxu0 0.0
  %3015 = vmatpush1.xpose.msra.mxu0 0.0
  %3016 = vmatprep.subr.mxu0 0.0
  %3017 = vmatpush1.xpose.msra.mxu0 0.0
  %3018 = vmatprep.mubr.f32.mxu0 %v2408
  %3019 = vmatmul.mubr.f32.gmra.mrb[0].mxu0 %v2407
  %v3020 = vpop.f32.mrb[0].mxu0
  %v3021 = vadd.f32 %v2936, %v3020
  %v3022 = vpop.f32.mrb[0].mxu0
  %3023 = vmatprep.mubr.f32.mxu0 %v2424
  %3024 = vmatmul.mubr.f32.gmra.mrb[0].mxu0 %v2423
  %v3025 = vpop.f32.mrb[0].mxu0
  %v3026 = vadd.f32 %v2941, %v3025
  %v3027 = vpop.f32.mrb[0].mxu0
  %3028 = vmatprep.mubr.f32.mxu0 %v2440
  %3029 = vmatmul.mubr.f32.gmra.mrb[0].mxu0 %v2439
  %v3030 = vpop.f32.mrb[0].mxu0
  %v3031 = vadd.f32 %v2946, %v3030
  %v3032 = vpop.f32.mrb[0].mxu0
  %3033 = vmatprep.mubr.f32.mxu0 %v2456
  %3034 = vmatmul.mubr.f32.gmra.mrb[0].mxu0 %v2455
  %v3035 = vpop.f32.mrb[0].mxu0
  %v3036 = vadd.f32 %v2951, %v3035
  %v3037 = vpop.f32.mrb[0].mxu0
  %3038 = vdwg.mxu0
  %3039 = vmatprep.subr.mxu0 %v2474
  %3040 = vmatpush1.xpose.msra.mxu0 %v2473
  %3041 = vmatprep.subr.mxu0 %v2490
  %3042 = vmatpush1.xpose.msra.mxu0 %v2489
  %3043 = vmatprep.subr.mxu0 %v2506
  %3044 = vmatpush1.xpose.msra.mxu0 %v2505
  %3045 = vmatprep.subr.mxu0 %v2522
  %3046 = vmatpush1.xpose.msra.mxu0 %v2521
  %3047 = vmatprep.subr.mxu0 0.0
  %3048 = vmatpush1.xpose.msra.mxu0 0.0
  %3049 = vmatprep.subr.mxu0 0.0
  %3050 = vmatpush1.xpose.msra.mxu0 0.0
  %3051 = vmatprep.subr.mxu0 0.0
  %3052 = vmatpush1.xpose.msra.mxu0 0.0
  %3053 = vmatprep.subr.mxu0 0.0
  %3054 = vmatpush1.xpose.msra.mxu0 0.0
  %3055 = vmatprep.subr.mxu0 0.0
  %3056 = vmatpush1.xpose.msra.mxu0 0.0
  %3057 = vmatprep.subr.mxu0 0.0
  %3058 = vmatpush1.xpose.msra.mxu0 0.0
  %3059 = vmatprep.subr.mxu0 0.0
  %3060 = vmatpush1.xpose.msra.mxu0 0.0
  %3061 = vmatprep.subr.mxu0 0.0
  %3062 = vmatpush1.xpose.msra.mxu0 0.0
  %3063 = vmatprep.subr.mxu0 0.0
  %3064 = vmatpush1.xpose.msra.mxu0 0.0
  %3065 = vmatprep.subr.mxu0 0.0
  %3066 = vmatpush1.xpose.msra.mxu0 0.0
  %3067 = vmatprep.subr.mxu0 0.0
  %3068 = vmatpush1.xpose.msra.mxu0 0.0
  %3069 = vmatprep.subr.mxu0 0.0
  %3070 = vmatpush1.xpose.msra.mxu0 0.0
  %3071 = vmatprep.subr.mxu0 0.0
  %3072 = vmatpush1.xpose.msra.mxu0 0.0
  %3073 = vmatprep.subr.mxu0 0.0
  %3074 = vmatpush1.xpose.msra.mxu0 0.0
  %3075 = vmatprep.subr.mxu0 0.0
  %3076 = vmatpush1.xpose.msra.mxu0 0.0
  %3077 = vmatprep.subr.mxu0 0.0
  %3078 = vmatpush1.xpose.msra.mxu0 0.0
  %3079 = vmatprep.subr.mxu0 0.0
  %3080 = vmatpush1.xpose.msra.mxu0 0.0
  %3081 = vmatprep.subr.mxu0 0.0
  %3082 = vmatpush1.xpose.msra.mxu0 0.0
  %3083 = vmatprep.subr.mxu0 0.0
  %3084 = vmatpush1.xpose.msra.mxu0 0.0
  %3085 = vmatprep.subr.mxu0 0.0
  %3086 = vmatpush1.xpose.msra.mxu0 0.0
  %3087 = vmatprep.subr.mxu0 0.0
  %3088 = vmatpush1.xpose.msra.mxu0 0.0
  %3089 = vmatprep.subr.mxu0 0.0
  %3090 = vmatpush1.xpose.msra.mxu0 0.0
  %3091 = vmatprep.subr.mxu0 0.0
  %3092 = vmatpush1.xpose.msra.mxu0 0.0
  %3093 = vmatprep.subr.mxu0 0.0
  %3094 = vmatpush1.xpose.msra.mxu0 0.0
  %3095 = vmatprep.subr.mxu0 0.0
  %3096 = vmatpush1.xpose.msra.mxu0 0.0
  %3097 = vmatprep.subr.mxu0 0.0
  %3098 = vmatpush1.xpose.msra.mxu0 0.0
  %3099 = vmatprep.subr.mxu0 0.0
  %3100 = vmatpush1.xpose.msra.mxu0 0.0
  %3101 = vmatprep.subr.mxu0 0.0
  %3102 = vmatpush1.xpose.msra.mxu0 0.0
  %3103 = vmatprep.mubr.f32.mxu0 %v2410
  %3104 = vmatmul.mubr.f32.gmra.mrb[0].mxu0 %v2409
  %v3105 = vpop.f32.mrb[0].mxu0
  %v3106 = vadd.f32 %v3021, %v3105
  %v3107 = vpop.f32.mrb[0].mxu0
  %3108 = vmatprep.mubr.f32.mxu0 %v2426
  %3109 = vmatmul.mubr.f32.gmra.mrb[0].mxu0 %v2425
  %v3110 = vpop.f32.mrb[0].mxu0
  %v3111 = vadd.f32 %v3026, %v3110
  %v3112 = vpop.f32.mrb[0].mxu0
  %3113 = vmatprep.mubr.f32.mxu0 %v2442
  %3114 = vmatmul.mubr.f32.gmra.mrb[0].mxu0 %v2441
  %v3115 = vpop.f32.mrb[0].mxu0
  %v3116 = vadd.f32 %v3031, %v3115
  %v3117 = vpop.f32.mrb[0].mxu0
  %3118 = vmatprep.mubr.f32.mxu0 %v2458
  %3119 = vmatmul.mubr.f32.gmra.mrb[0].mxu0 %v2457
  %v3120 = vpop.f32.mrb[0].mxu0
  %v3121 = vadd.f32 %v3036, %v3120
  %v3122 = vpop.f32.mrb[0].mxu0
  %3123 = vdwg.mxu0
  %3124 = vmatprep.subr.mxu0 %v2476
  %3125 = vmatpush1.xpose.msra.mxu0 %v2475
  %3126 = vmatprep.subr.mxu0 %v2492
  %3127 = vmatpush1.xpose.msra.mxu0 %v2491
  %3128 = vmatprep.subr.mxu0 %v2508
  %3129 = vmatpush1.xpose.msra.mxu0 %v2507
  %3130 = vmatprep.subr.mxu0 %v2524
  %3131 = vmatpush1.xpose.msra.mxu0 %v2523
  %3132 = vmatprep.subr.mxu0 0.0
  %3133 = vmatpush1.xpose.msra.mxu0 0.0
  %3134 = vmatprep.subr.mxu0 0.0
  %3135 = vmatpush1.xpose.msra.mxu0 0.0
  %3136 = vmatprep.subr.mxu0 0.0
  %3137 = vmatpush1.xpose.msra.mxu0 0.0
  %3138 = vmatprep.subr.mxu0 0.0
  %3139 = vmatpush1.xpose.msra.mxu0 0.0
  %3140 = vmatprep.subr.mxu0 0.0
  %3141 = vmatpush1.xpose.msra.mxu0 0.0
  %3142 = vmatprep.subr.mxu0 0.0
  %3143 = vmatpush1.xpose.msra.mxu0 0.0
  %3144 = vmatprep.subr.mxu0 0.0
  %3145 = vmatpush1.xpose.msra.mxu0 0.0
  %3146 = vmatprep.subr.mxu0 0.0
  %3147 = vmatpush1.xpose.msra.mxu0 0.0
  %3148 = vmatprep.subr.mxu0 0.0
  %3149 = vmatpush1.xpose.msra.mxu0 0.0
  %3150 = vmatprep.subr.mxu0 0.0
  %3151 = vmatpush1.xpose.msra.mxu0 0.0
  %3152 = vmatprep.subr.mxu0 0.0
  %3153 = vmatpush1.xpose.msra.mxu0 0.0
  %3154 = vmatprep.subr.mxu0 0.0
  %3155 = vmatpush1.xpose.msra.mxu0 0.0
  %3156 = vmatprep.subr.mxu0 0.0
  %3157 = vmatpush1.xpose.msra.mxu0 0.0
  %3158 = vmatprep.subr.mxu0 0.0
  %3159 = vmatpush1.xpose.msra.mxu0 0.0
  %3160 = vmatprep.subr.mxu0 0.0
  %3161 = vmatpush1.xpose.msra.mxu0 0.0
  %3162 = vmatprep.subr.mxu0 0.0
  %3163 = vmatpush1.xpose.msra.mxu0 0.0
  %3164 = vmatprep.subr.mxu0 0.0
  %3165 = vmatpush1.xpose.msra.mxu0 0.0
  %3166 = vmatprep.subr.mxu0 0.0
  %3167 = vmatpush1.xpose.msra.mxu0 0.0
  %3168 = vmatprep.subr.mxu0 0.0
  %3169 = vmatpush1.xpose.msra.mxu0 0.0
  %3170 = vmatprep.subr.mxu0 0.0
  %3171 = vmatpush1.xpose.msra.mxu0 0.0
  %3172 = vmatprep.subr.mxu0 0.0
  %3173 = vmatpush1.xpose.msra.mxu0 0.0
  %3174 = vmatprep.subr.mxu0 0.0
  %3175 = vmatpush1.xpose.msra.mxu0 0.0
  %3176 = vmatprep.subr.mxu0 0.0
  %3177 = vmatpush1.xpose.msra.mxu0 0.0
  %3178 = vmatprep.subr.mxu0 0.0
  %3179 = vmatpush1.xpose.msra.mxu0 0.0
  %3180 = vmatprep.subr.mxu0 0.0
  %3181 = vmatpush1.xpose.msra.mxu0 0.0
  %3182 = vmatprep.subr.mxu0 0.0
  %3183 = vmatpush1.xpose.msra.mxu0 0.0
  %3184 = vmatprep.subr.mxu0 0.0
  %3185 = vmatpush1.xpose.msra.mxu0 0.0
  %3186 = vmatprep.subr.mxu0 0.0
  %3187 = vmatpush1.xpose.msra.mxu0 0.0
  %3188 = vmatprep.mubr.f32.mxu0 %v2412
  %3189 = vmatmul.mubr.f32.gmra.mrb[0].mxu0 %v2411
  %v3190 = vpop.f32.mrb[0].mxu0
  %v3191 = vadd.f32 %v3106, %v3190
  %v3192 = vpop.f32.mrb[0].mxu0
  %3193 = vmatprep.mubr.f32.mxu0 %v2428
  %3194 = vmatmul.mubr.f32.gmra.mrb[0].mxu0 %v2427
  %v3195 = vpop.f32.mrb[0].mxu0
  %v3196 = vadd.f32 %v3111, %v3195
  %v3197 = vpop.f32.mrb[0].mxu0
  %3198 = vmatprep.mubr.f32.mxu0 %v2444
  %3199 = vmatmul.mubr.f32.gmra.mrb[0].mxu0 %v2443
  %v3200 = vpop.f32.mrb[0].mxu0
  %v3201 = vadd.f32 %v3116, %v3200
  %v3202 = vpop.f32.mrb[0].mxu0
  %3203 = vmatprep.mubr.f32.mxu0 %v2460
  %3204 = vmatmul.mubr.f32.gmra.mrb[0].mxu0 %v2459
  %v3205 = vpop.f32.mrb[0].mxu0
  %v3206 = vadd.f32 %v3121, %v3205
  %v3207 = vpop.f32.mrb[0].mxu0
  %3208 = vdwg.mxu0
  %v3209 = vadd.f32 %v1521, %v3191
  %v3210 = vadd.f32 %v1522, %v3196
  %v3211 = vadd.f32 %v1523, %v3201
  %v3212 = vadd.f32 %v1524, %v3206
  %v3213 = vsel %vm70, %v3209, 0.0
  %3214 = vadd.xlane.f32.xlu0 %v3213
  %v3215 = vpop.xlane.xlu0 %3214
  %v3216 = vsel %vm70, %v3210, 0.0
  %3217 = vadd.xlane.f32.xlu0 %v3216
  %v3218 = vpop.xlane.xlu0 %3217
  %v3219 = vsel %vm70, %v3211, 0.0
  %3220 = vadd.xlane.f32.xlu0 %v3219
  %v3221 = vpop.xlane.xlu0 %3220
  %v3222 = vsel %vm70, %v3212, 0.0
  %3223 = vadd.xlane.f32.xlu0 %v3222
  %v3224 = vpop.xlane.xlu0 %3223
  %v3225 = vmul.f32 %v3215, %v1440
  %v3226 = vmul.f32 %v3218, %v1440
  %v3227 = vmul.f32 %v3221, %v1440
  %v3228 = vmul.f32 %v3224, %v1440
  %v3229 = vsub.f32 %v3209, %v3225
  %v3230 = vsub.f32 %v3210, %v3226
  %v3231 = vsub.f32 %v3211, %v3227
  %v3232 = vsub.f32 %v3212, %v3228
  %v3233 = vmul.f32 %v3229, %v3229
  %v3234 = vmul.f32 %v3230, %v3230
  %v3235 = vmul.f32 %v3231, %v3231
  %v3236 = vmul.f32 %v3232, %v3232
  %v3237 = vsel %vm70, %v3233, 0.0
  %3238 = vadd.xlane.f32.xlu0 %v3237
  %v3239 = vpop.xlane.xlu0 %3238
  %v3240 = vsel %vm70, %v3234, 0.0
  %3241 = vadd.xlane.f32.xlu0 %v3240
  %v3242 = vpop.xlane.xlu0 %3241
  %v3243 = vsel %vm70, %v3235, 0.0
  %3244 = vadd.xlane.f32.xlu0 %v3243
  %v3245 = vpop.xlane.xlu0 %3244
  %v3246 = vsel %vm70, %v3236, 0.0
  %3247 = vadd.xlane.f32.xlu0 %v3246
  %v3248 = vpop.xlane.xlu0 %3247
  %v3249 = vmul.f32 %v3239, %v1440
  %v3250 = vmul.f32 %v3242, %v1440
  %v3251 = vmul.f32 %v3245, %v1440
  %v3252 = vmul.f32 %v3248, %v1440
  %v3253 = vadd.f32 %v3249, 1e-05
  %v3254 = vadd.f32 %v3250, 1e-05
  %v3255 = vadd.f32 %v3251, 1e-05
  %v3256 = vadd.f32 %v3252, 1e-05
  %v3257 = vrsqrt.pop %v3253
  %v3258 = vmul.f32 %v3253, %v3257
  %vm3259 = vcmp.eq.f32.partialorder %v3253, inf
  %v3260 = vsel %vm3259, %v3253, %v3258
  %vm3261 = vcmp.eq.f32.partialorder %v3253, 0.0
  %v3262 = vand.u32 %v3253, 2147483648
  %v3263 = vsel %vm3261, %v3262, %v3260
  %v3264 = vrsqrt.pop %v3254
  %v3265 = vmul.f32 %v3254, %v3264
  %vm3266 = vcmp.eq.f32.partialorder %v3254, inf
  %v3267 = vsel %vm3266, %v3254, %v3265
  %vm3268 = vcmp.eq.f32.partialorder %v3254, 0.0
  %v3269 = vand.u32 %v3254, 2147483648
  %v3270 = vsel %vm3268, %v3269, %v3267
  %v3271 = vrsqrt.pop %v3255
  %v3272 = vmul.f32 %v3255, %v3271
  %vm3273 = vcmp.eq.f32.partialorder %v3255, inf
  %v3274 = vsel %vm3273, %v3255, %v3272
  %vm3275 = vcmp.eq.f32.partialorder %v3255, 0.0
  %v3276 = vand.u32 %v3255, 2147483648
  %v3277 = vsel %vm3275, %v3276, %v3274
  %v3278 = vrsqrt.pop %v3256
  %v3279 = vmul.f32 %v3256, %v3278
  %vm3280 = vcmp.eq.f32.partialorder %v3256, inf
  %v3281 = vsel %vm3280, %v3256, %v3279
  %vm3282 = vcmp.eq.f32.partialorder %v3256, 0.0
  %v3283 = vand.u32 %v3256, 2147483648
  %v3284 = vsel %vm3282, %v3283, %v3281
  %v3285 = vrcp.pop %v3263
  %v3286 = vmul.f32 %v3229, %v3285
  %v3287 = vrcp.pop %v3270
  %v3288 = vmul.f32 %v3230, %v3287
  %v3289 = vrcp.pop %v3277
  %v3290 = vmul.f32 %v3231, %v3289
  %v3291 = vrcp.pop %v3284
  %v3292 = vmul.f32 %v3232, %v3291
  %v3293 = vlaneseq
  %v3294 = vshrl.u32 %v3293, 7
  %v3295 = vsub.s32 4, %v3294
  %v3296 = vrot.slane %v58, %v3295
  %v3297 = vmul.f32 %v3286, %v3296
  %v3298 = vmul.f32 %v3288, %v3296
  %v3299 = vmul.f32 %v3290, %v3296
  %v3300 = vmul.f32 %v3292, %v3296
  %v3301 = vlaneseq
  %v3302 = vshrl.u32 %v3301, 7
  %v3303 = vsub.s32 5, %v3302
  %v3304 = vrot.slane %v58, %v3303
  %v3305 = vadd.f32 %v3297, %v3304
  %v3306 = vadd.f32 %v3298, %v3304
  %v3307 = vadd.f32 %v3299, %v3304
  %v3308 = vadd.f32 %v3300, %v3304
  %v3309 = vld [vmem:[%s11] sm:$0xf]
  %v3311 = vsel %vm70, %v3309, 0
  %3313 = vmatprep.subr.mxu0 0.0
  %3314 = vmatpush1.msra.mxu0 %v3305
  %3315 = vmatprep.subr.mxu0 0.0
  %3316 = vmatpush1.msra.mxu0 %v3306
  %3317 = vmatprep.subr.mxu0 0.0
  %3318 = vmatpush1.msra.mxu0 %v3307
  %3319 = vmatprep.subr.mxu0 0.0
  %3320 = vmatpush1.msra.mxu0 %v3308
  %3321 = vmatprep.subr.mxu0 0.0
  %3322 = vmatpush1.msra.mxu0 0.0
  %3323 = vmatprep.subr.mxu0 0.0
  %3324 = vmatpush1.msra.mxu0 0.0
  %3325 = vmatprep.subr.mxu0 0.0
  %3326 = vmatpush1.msra.mxu0 0.0
  %3327 = vmatprep.subr.mxu0 0.0
  %3328 = vmatpush1.msra.mxu0 0.0
  %3329 = vmatprep.subr.mxu0 0.0
  %3330 = vmatpush1.msra.mxu0 0.0
  %3331 = vmatprep.subr.mxu0 0.0
  %3332 = vmatpush1.msra.mxu0 0.0
  %3333 = vmatprep.subr.mxu0 0.0
  %3334 = vmatpush1.msra.mxu0 0.0
  %3335 = vmatprep.subr.mxu0 0.0
  %3336 = vmatpush1.msra.mxu0 0.0
  %3337 = vmatprep.subr.mxu0 0.0
  %3338 = vmatpush1.msra.mxu0 0.0
  %3339 = vmatprep.subr.mxu0 0.0
  %3340 = vmatpush1.msra.mxu0 0.0
  %3341 = vmatprep.subr.mxu0 0.0
  %3342 = vmatpush1.msra.mxu0 0.0
  %3343 = vmatprep.subr.mxu0 0.0
  %3344 = vmatpush1.msra.mxu0 0.0
  %3345 = vmatprep.subr.mxu0 0.0
  %3346 = vmatpush1.msra.mxu0 0.0
  %3347 = vmatprep.subr.mxu0 0.0
  %3348 = vmatpush1.msra.mxu0 0.0
  %3349 = vmatprep.subr.mxu0 0.0
  %3350 = vmatpush1.msra.mxu0 0.0
  %3351 = vmatprep.subr.mxu0 0.0
  %3352 = vmatpush1.msra.mxu0 0.0
  %3353 = vmatprep.subr.mxu0 0.0
  %3354 = vmatpush1.msra.mxu0 0.0
  %3355 = vmatprep.subr.mxu0 0.0
  %3356 = vmatpush1.msra.mxu0 0.0
  %3357 = vmatprep.subr.mxu0 0.0
  %3358 = vmatpush1.msra.mxu0 0.0
  %3359 = vmatprep.subr.mxu0 0.0
  %3360 = vmatpush1.msra.mxu0 0.0
  %3361 = vmatprep.subr.mxu0 0.0
  %3362 = vmatpush1.msra.mxu0 0.0
  %3363 = vmatprep.subr.mxu0 0.0
  %3364 = vmatpush1.msra.mxu0 0.0
  %3365 = vmatprep.subr.mxu0 0.0
  %3366 = vmatpush1.msra.mxu0 0.0
  %3367 = vmatprep.subr.mxu0 0.0
  %3368 = vmatpush1.msra.mxu0 0.0
  %3369 = vmatprep.subr.mxu0 0.0
  %3370 = vmatpush1.msra.mxu0 0.0
  %3371 = vmatprep.subr.mxu0 0.0
  %3372 = vmatpush1.msra.mxu0 0.0
  %3373 = vmatprep.subr.mxu0 0.0
  %3374 = vmatpush1.msra.mxu0 0.0
  %3375 = vmatprep.subr.mxu0 0.0
  %3376 = vmatpush1.msra.mxu0 0.0
  %3377 = vmatprep.mubr.f32.mxu0 0.0
  %3378 = vmatmul.mubr.f32.gmra.mrb[0].mxu0 %v3311
  %v3379 = vpop.f32.mrb[0].mxu0
  %v3380 = vadd.f32 0.0, %v3379
  %v3381 = vpop.f32.mrb[0].mxu0
  %3382 = vdwg.mxu0
  %v3383 = vld [vmem:[%s10] sm:$0xff]
  %v3384 = vld [vmem:[%s10 + $0x8] sm:$0xff]
  %v3385 = vld [vmem:[%s10 + $0x10] sm:$0xff]
  %v3386 = vld [vmem:[%s10 + $0x18] sm:$0xff]
  %v3387 = vld [vmem:[#allocation2] sm:$0x1]
  %v3389 = vlaneseq
  %v3390 = vshrl.u32 %v3389, 7
  %v3391 = vsub.s32 0, %v3390
  %v3392 = vrot.slane %v3387, %v3391
  %v3395 = vsel %vm70, %v3380, 0
  %3397 = vmatprep.subr.mxu0 0.0
  %3398 = vmatpush1.msra.mxu0 %v3383
  %3399 = vmatprep.subr.mxu0 0.0
  %3400 = vmatpush1.msra.mxu0 %v3384
  %3401 = vmatprep.subr.mxu0 0.0
  %3402 = vmatpush1.msra.mxu0 %v3385
  %3403 = vmatprep.subr.mxu0 0.0
  %3404 = vmatpush1.msra.mxu0 %v3386
  %3405 = vmatprep.subr.mxu0 0.0
  %3406 = vmatpush1.msra.mxu0 0.0
  %3407 = vmatprep.subr.mxu0 0.0
  %3408 = vmatpush1.msra.mxu0 0.0
  %3409 = vmatprep.subr.mxu0 0.0
  %3410 = vmatpush1.msra.mxu0 0.0
  %3411 = vmatprep.subr.mxu0 0.0
  %3412 = vmatpush1.msra.mxu0 0.0
  %3413 = vmatprep.subr.mxu0 0.0
  %3414 = vmatpush1.msra.mxu0 0.0
  %3415 = vmatprep.subr.mxu0 0.0
  %3416 = vmatpush1.msra.mxu0 0.0
  %3417 = vmatprep.subr.mxu0 0.0
  %3418 = vmatpush1.msra.mxu0 0.0
  %3419 = vmatprep.subr.mxu0 0.0
  %3420 = vmatpush1.msra.mxu0 0.0
  %3421 = vmatprep.subr.mxu0 0.0
  %3422 = vmatpush1.msra.mxu0 0.0
  %3423 = vmatprep.subr.mxu0 0.0
  %3424 = vmatpush1.msra.mxu0 0.0
  %3425 = vmatprep.subr.mxu0 0.0
  %3426 = vmatpush1.msra.mxu0 0.0
  %3427 = vmatprep.subr.mxu0 0.0
  %3428 = vmatpush1.msra.mxu0 0.0
  %3429 = vmatprep.subr.mxu0 0.0
  %3430 = vmatpush1.msra.mxu0 0.0
  %3431 = vmatprep.subr.mxu0 0.0
  %3432 = vmatpush1.msra.mxu0 0.0
  %3433 = vmatprep.subr.mxu0 0.0
  %3434 = vmatpush1.msra.mxu0 0.0
  %3435 = vmatprep.subr.mxu0 0.0
  %3436 = vmatpush1.msra.mxu0 0.0
  %3437 = vmatprep.subr.mxu0 0.0
  %3438 = vmatpush1.msra.mxu0 0.0
  %3439 = vmatprep.subr.mxu0 0.0
  %3440 = vmatpush1.msra.mxu0 0.0
  %3441 = vmatprep.subr.mxu0 0.0
  %3442 = vmatpush1.msra.mxu0 0.0
  %3443 = vmatprep.subr.mxu0 0.0
  %3444 = vmatpush1.msra.mxu0 0.0
  %3445 = vmatprep.subr.mxu0 0.0
  %3446 = vmatpush1.msra.mxu0 0.0
  %3447 = vmatprep.subr.mxu0 0.0
  %3448 = vmatpush1.msra.mxu0 0.0
  %3449 = vmatprep.subr.mxu0 0.0
  %3450 = vmatpush1.msra.mxu0 0.0
  %3451 = vmatprep.subr.mxu0 0.0
  %3452 = vmatpush1.msra.mxu0 0.0
  %3453 = vmatprep.subr.mxu0 0.0
  %3454 = vmatpush1.msra.mxu0 0.0
  %3455 = vmatprep.subr.mxu0 0.0
  %3456 = vmatpush1.msra.mxu0 0.0
  %3457 = vmatprep.subr.mxu0 0.0
  %3458 = vmatpush1.msra.mxu0 0.0
  %3459 = vmatprep.subr.mxu0 0.0
  %3460 = vmatpush1.msra.mxu0 0.0
  %3461 = vmatprep.mubr.f32.mxu0 0.0
  %3462 = vmatmul.mubr.f32.gmra.mrb[0].mxu0 %v3395
  %v3463 = vpop.f32.mrb[0].mxu0
  %v3464 = vadd.f32 %v3392, %v3463
  %v3465 = vpop.f32.mrb[0].mxu0
  %3466 = vdwg.mxu0
  %v3467 = vsub.f32 0.0, %v3464
  %v3468 = vmul.f32 %v3467, 1.442695
  %v3469 = vpow.pop %v3468
  %v3470 = vadd.f32 %v3469, 1.0
  %v3471 = vrcp.pop %v3470
  %v3472 = vmul.f32 1.0, %v3471
  %vm3473 = vcmask 3072
  %3474 = vst.msk [vmem:[%s13] sm:$0xf] %vm3473, %v3472
  // Predicated region
  $region54: #{transformer_forward.1} parent=0 // pred_check
    _
  $region55: #{transformer_forward.1} parent=0 // pred_check_branch
    %3476 = sbr.rel (0) target = $region57
  $region56: #{transformer_forward.1} parent=0 // pred_region
    _
  $region57: #{transformer_forward.1} parent=0 // pred_fallthru
    _
  // Predicated region
  $region58: #{transformer_forward.1} parent=0 // pred_check
    _
  $region59: #{transformer_forward.1} parent=0 // pred_check_branch
    %3478 = sbr.rel (0) target = $region61
  $region60: #{transformer_forward.1} parent=0 // pred_region
    _
  $region61: #{transformer_forward.1} parent=0 // pred_fallthru
    _

</llo_original>
